<compile_context>
chip_gen: v7x
topology: tpu7x:2x2x1
jax: 0.10.0
libtpu: 0.0.40
codegen_flags: <defaults>
</compile_context>

<pallas_src>
import jax
import jax.numpy as jnp
from jax.experimental import pallas as pl
from jax.experimental.pallas import tpu as pltpu

# ----------------------------- hyper parameters ------------------------------
D_MODEL = 32
N_LAYER = 2
D_STATE = 16
D_CONV = 4
EXPAND = 2
D_INNER = EXPAND * D_MODEL                 # 64
DT_RANK = (D_MODEL + 15) // 16             # 2
XP_COLS = DT_RANK + 2 * D_STATE            # 34  (dt_lowrank | B | C)
EPS = 1e-5
N_TOKENS = (16, 24, 12)                    # encoding['n_tokens']
PROMPT_VOCAB = 32000
B = 2                                      # batch
L = 8                                      # sequence length (max_seq_len)

TV = 4096                                  # lm-head vocab tile (8 even grid steps)
V_TOTAL = sum(N_TOKENS) + PROMPT_VOCAB     # 32052
V_PAD = ((V_TOTAL + TV - 1) // TV) * TV    # 32768


# ----------------------------- small math helpers ----------------------------
def _silu(x):
    # exp and approx reciprocal both go to the EUP slot (off the VALU)
    return x * pl.reciprocal(1.0 + jnp.exp(-x), approx=True)


def _softplus(x):
    return jnp.where(x > 20.0, x, jnp.log(1.0 + jnp.exp(x)))


def _layernorm(x, w, b):
    mu = jnp.mean(x, axis=-1, keepdims=True)
    xc = x - mu
    var = jnp.mean(xc * xc, axis=-1, keepdims=True)
    return xc * jax.lax.rsqrt(var + EPS) * w + b


# ----------------------------- kernel 1: all layers in one step ---------------
def mixer_layers_kernel(
    h0_ref,                               # (B, L, D)                 embedded input
    norm_w_ref, norm_b_ref,               # (N_LAYER, 1, D)           per-layer block LN
    inproj_w_ref,                         # (N_LAYER, D, 2*D_INNER)   fused in_proj [x | z]
    conv_w_ref, conv_b_ref,               # (N_LAYER, K, D_INNER), (N_LAYER, 1, D_INNER)
    xproj_w_ref,                          # (N_LAYER, D_INNER, XP_COLS) fused [dt_lr | B | C]
    dt_w_ref, dt_b_ref,                   # (N_LAYER, DT_RANK, D_INNER), (N_LAYER, 1, D_INNER)
    a_t_ref, d_ref,                       # (N_LAYER, D_STATE, D_INNER), (N_LAYER, 1, D_INNER)
    out_w_ref,                            # (N_LAYER, D_INNER, D)
    nf_w_ref, nf_b_ref,                   # (1, D)                    final norm_f
    out_ref,                              # (B, L, D)                 final hidden
):
    hidden = h0_ref[...]                                   # (B, L, D)
    residual = jnp.zeros_like(hidden)

    for layer in range(N_LAYER):                           # static unroll (N_LAYER=2)
        # Block: residual add + LayerNorm (pre-norm)
        residual = hidden + residual
        hn = _layernorm(residual, norm_w_ref[layer], norm_b_ref[layer])
        hn2 = hn.reshape(B * L, D_MODEL)

        # -------- Mamba mixer --------
        # fused in_proj: one (B*L,32)@(32,128) dot, split into x / z halves
        xz = jnp.dot(hn2, inproj_w_ref[layer], preferred_element_type=jnp.float32)
        x_in = xz[:, :D_INNER].reshape(B, L, D_INNER)
        z = xz[:, D_INNER:].reshape(B, L, D_INNER)

        # causal depthwise conv1d + SiLU: 4 dense shifted multiply-adds, all in vregs
        cw = conv_w_ref[layer]                             # (K, D_INNER)
        cb = conv_b_ref[layer]                             # (1, D_INNER)
        zpad = jnp.zeros((B, D_CONV - 1, D_INNER), jnp.float32)
        x_pad = jnp.concatenate([zpad, x_in], axis=1)      # (B, L+K-1, D_INNER)
        acc = jnp.zeros((B, L, D_INNER), jnp.float32)
        for k in range(D_CONV):
            acc = acc + cw[k:k + 1, :] * x_pad[:, k:k + L, :]
        xs = _silu(acc + cb)                               # (B, L, D_INNER)
        xs2 = xs.reshape(B * L, D_INNER)

        # fused x_proj: one (B*L,64)@(64,34) dot -> dt_lowrank | B | C
        xp = jnp.dot(xs2, xproj_w_ref[layer], preferred_element_type=jnp.float32)
        dt_lr = xp[:, :DT_RANK]                                      # (B*L, DT_RANK)
        Bmat = xp[:, DT_RANK:DT_RANK + D_STATE].reshape(B, L, D_STATE)
        Cmat = xp[:, DT_RANK + D_STATE:XP_COLS].reshape(B, L, D_STATE)

        dt = jnp.dot(dt_lr, dt_w_ref[layer], preferred_element_type=jnp.float32)
        dt = _softplus(dt + dt_b_ref[layer]).reshape(B, L, D_INNER)

        A_T = a_t_ref[layer]                               # (D_STATE, D_INNER), negative

        # sequential selective scan; state (B, D_STATE, D_INNER) keeps D_INNER=64 on lanes
        h = jnp.zeros((B, D_STATE, D_INNER), jnp.float32)
        ys = []
        for t in range(L):
            dt_t = dt[:, t, :]                             # (B, D_INNER)
            u_t = xs[:, t, :]                              # (B, D_INNER)
            dA = jnp.exp(dt_t[:, None, :] * A_T[None, :, :])         # (B, D_STATE, D_INNER)
            dBu = (dt_t * u_t)[:, None, :] * Bmat[:, t, :, None]     # (B, D_STATE, D_INNER)
            h = dA * h + dBu
            ys.append(jnp.sum(h * Cmat[:, t, :, None], axis=1))      # (B, D_INNER)
        y = jnp.stack(ys, axis=1)                          # (B, L, D_INNER)

        y = y + xs * d_ref[layer]
        y = y * _silu(z)
        hidden = jnp.dot(y.reshape(B * L, D_INNER), out_w_ref[layer],
                         preferred_element_type=jnp.float32).reshape(B, L, D_MODEL)

    # MixerModel tail: residual add + norm_f
    final_res = hidden + residual
    out_ref[...] = _layernorm(final_res, nf_w_ref[...], nf_b_ref[...])


# no grid: everything (input + both layers' weights, ~100 KB) fits VMEM trivially,
# kernel runs in one invocation with whole arrays resident in VMEM.
layers_fn = pl.pallas_call(
    mixer_layers_kernel,
    out_shape=jax.ShapeDtypeStruct((B, L, D_MODEL), jnp.float32),
)


# ----------------------------- kernel 2: lm heads -----------------------------
def lm_head_kernel(h_ref, w_ref, b_ref, o_ref):
    # bf16 x bf16 MXU matmul with f32 accumulation, f32 bias
    o_ref[...] = (jnp.dot(h_ref[...], w_ref[...],
                          preferred_element_type=jnp.float32) + b_ref[...])


lm_fn = pl.pallas_call(
    lm_head_kernel,
    out_shape=jax.ShapeDtypeStruct((B * L, V_PAD), jnp.float32),
    grid_spec=pltpu.PrefetchScalarGridSpec(
        num_scalar_prefetch=0,
        grid=(V_PAD // TV,),                               # 8 steps (even -> 2 TCs on v7x)
        in_specs=[
            pl.BlockSpec((B * L, D_MODEL), lambda j: (0, 0)),   # bf16 activations
            pl.BlockSpec((D_MODEL, TV), lambda j: (0, j)),      # bf16 weight tile
            pl.BlockSpec((1, TV), lambda j: (0, j)),            # f32 bias tile
        ],
        out_specs=pl.BlockSpec((B * L, TV), lambda j: (0, j)),  # lane-dense f32 logits
    ),
    compiler_params=pltpu.CompilerParams(dimension_semantics=("parallel",)),
)


# ----------------------------- parameters (deterministic) --------------------
def init_params(key):
    keys = iter(jax.random.split(key, 32))

    def nrm(shape, scale=0.02):
        return (scale * jax.random.normal(next(keys), shape)).astype(jnp.float32)

    p = {}
    p["embedding"] = [nrm((n, D_MODEL)) for n in N_TOKENS]
    p["embedding_prompt"] = nrm((PROMPT_VOCAB, D_MODEL))

    p["norm_w"] = jnp.ones((N_LAYER, 1, D_MODEL), jnp.float32)
    p["norm_b"] = jnp.zeros((N_LAYER, 1, D_MODEL), jnp.float32)
    # fused in_proj weight: columns [0:D_INNER] -> x, [D_INNER:2*D_INNER] -> z
    p["inproj_w"] = nrm((N_LAYER, D_MODEL, 2 * D_INNER))
    p["conv_w"] = nrm((N_LAYER, D_CONV, D_INNER), 0.2)
    p["conv_b"] = jnp.zeros((N_LAYER, 1, D_INNER), jnp.float32)
    # fused x_proj weight: columns = [dt_lowrank (DT_RANK) | B (D_STATE) | C (D_STATE)]
    p["xproj_w"] = nrm((N_LAYER, D_INNER, XP_COLS))
    p["dt_w"] = nrm((N_LAYER, DT_RANK, D_INNER), 0.1)
    p["dt_b"] = jnp.full((N_LAYER, 1, D_INNER), -4.0, jnp.float32)
    # A stored pre-transposed (D_STATE, D_INNER) so the scan keeps D_INNER on lanes
    a_log = jnp.log(jnp.arange(1, D_STATE + 1, dtype=jnp.float32))
    p["A_T"] = -jnp.exp(jnp.broadcast_to(a_log[:, None], (N_LAYER, D_STATE, D_INNER)))
    p["Dparam"] = jnp.ones((N_LAYER, 1, D_INNER), jnp.float32)
    p["out_w"] = nrm((N_LAYER, D_INNER, D_MODEL))

    p["norm_f_w"] = jnp.ones((1, D_MODEL), jnp.float32)
    p["norm_f_b"] = jnp.zeros((1, D_MODEL), jnp.float32)

    # all lm heads concatenated along vocab axis, zero-padded to V_PAD; weights in bf16
    lm_w = nrm((D_MODEL, V_TOTAL))
    lm_b = jnp.zeros((1, V_TOTAL), jnp.float32)
    p["lm_w"] = jnp.pad(lm_w, ((0, 0), (0, V_PAD - V_TOTAL))).astype(jnp.bfloat16)
    p["lm_b"] = jnp.pad(lm_b, ((0, 0), (0, V_PAD - V_TOTAL)))
    return p


# ----------------------------- forward (glue + kernels) ----------------------
def mixer_model_forward(params, input_ids, prompt):
    # sum of per-stream token embeddings + prompt embedding (gathers = plain JAX glue)
    hid = jnp.zeros((B, L, D_MODEL), jnp.float32)
    for i, emb in enumerate(params["embedding"]):
        hid = hid + jnp.take(emb, input_ids[..., i], axis=0)
    hid = hid + jnp.take(params["embedding_prompt"], prompt, axis=0)

    hidden = layers_fn(
        hid,
        params["norm_w"], params["norm_b"],
        params["inproj_w"],
        params["conv_w"], params["conv_b"],
        params["xproj_w"],
        params["dt_w"], params["dt_b"],
        params["A_T"], params["Dparam"],
        params["out_w"],
        params["norm_f_w"], params["norm_f_b"],
    )

    h_bf16 = hidden.reshape(B * L, D_MODEL).astype(jnp.bfloat16)
    logits_full = lm_fn(h_bf16, params["lm_w"], params["lm_b"])
    logits_full = logits_full.reshape(B, L, V_PAD)

    lm_logits = []
    off = 0
    for n in N_TOKENS:
        lm_logits.append(logits_full[:, :, off:off + n])
        off += n
    out_prompt = logits_full[:, :, off:off + PROMPT_VOCAB]
    return lm_logits, out_prompt


# ----------------------------- main -------------------------------------------
if __name__ == "__main__":
    key = jax.random.PRNGKey(0)
    pkey, ikey, prkey = jax.random.split(key, 3)
    params = init_params(pkey)

    ids = [jax.random.randint(jax.random.fold_in(ikey, i), (B, L), 0, n)
           for i, n in enumerate(N_TOKENS)]
    input_ids = jnp.stack(ids, axis=-1).astype(jnp.int32)        # (B, L, n_streams)
    prompt = jax.random.randint(prkey, (B, L), 0, PROMPT_VOCAB).astype(jnp.int32)

    lm_logits, out_prompt = mixer_model_forward(params, input_ids, prompt)
    jax.block_until_ready(lm_logits)
    jax.block_until_ready(out_prompt)

    assert out_prompt.shape == (B, L, PROMPT_VOCAB)
    assert all(lg.shape == (B, L, n) for lg, n in zip(lm_logits, N_TOKENS))
    # TODO(synk): inference_params / allocate_inference_cache (incremental decoding
    # state) and num_last_tokens slicing are not implemented in the kernels.
    print("KERNEL_OK")
</pallas_src>

<mosaic_0001>
module attributes {stable_mosaic.version = 11 : i64} {
  func.func @mixer_layers_kernel(%arg0: memref<2x8x32xf32, #tpu.memory_space<vmem>>, %arg1: memref<2x1x32xf32, #tpu.memory_space<vmem>>, %arg2: memref<2x1x32xf32, #tpu.memory_space<vmem>>, %arg3: memref<2x32x128xf32, #tpu.memory_space<vmem>>, %arg4: memref<2x4x64xf32, #tpu.memory_space<vmem>>, %arg5: memref<2x1x64xf32, #tpu.memory_space<vmem>>, %arg6: memref<2x64x34xf32, #tpu.memory_space<vmem>>, %arg7: memref<2x2x64xf32, #tpu.memory_space<vmem>>, %arg8: memref<2x1x64xf32, #tpu.memory_space<vmem>>, %arg9: memref<2x16x64xf32, #tpu.memory_space<vmem>>, %arg10: memref<2x1x64xf32, #tpu.memory_space<vmem>>, %arg11: memref<2x64x32xf32, #tpu.memory_space<vmem>>, %arg12: memref<1x32xf32, #tpu.memory_space<vmem>>, %arg13: memref<1x32xf32, #tpu.memory_space<vmem>>, %arg14: memref<2x8x32xf32, #tpu.memory_space<vmem>>) attributes {dimension_semantics = [], scalar_prefetch = 0 : i64, scratch_operands = 0 : i64, tpu.core_type = #tpu.core_type<tc>} {
    %c0 = arith.constant 0 : index
    %c0_0 = arith.constant 0 : index
    %c0_1 = arith.constant 0 : index
    %0 = vector.load %arg0[%c0, %c0_0, %c0_1] : memref<2x8x32xf32, #tpu.memory_space<vmem>>, vector<2x8x32xf32>
    %cst = arith.constant 0.000000e+00 : f32
    %1 = vector.broadcast %cst : f32 to vector<2x8x32xf32>
    %2 = arith.addf %0, %1 : vector<2x8x32xf32>
    %c0_2 = arith.constant 0 : index
    %c0_3 = arith.constant 0 : index
    %c0_4 = arith.constant 0 : index
    %3 = vector.load %arg1[%c0_2, %c0_3, %c0_4] : memref<2x1x32xf32, #tpu.memory_space<vmem>>, vector<1x1x32xf32>
    %4 = vector.shape_cast %3 : vector<1x1x32xf32> to vector<1x32xf32>
    %c0_5 = arith.constant 0 : index
    %c0_6 = arith.constant 0 : index
    %c0_7 = arith.constant 0 : index
    %5 = vector.load %arg2[%c0_5, %c0_6, %c0_7] : memref<2x1x32xf32, #tpu.memory_space<vmem>>, vector<1x1x32xf32>
    %6 = vector.shape_cast %5 : vector<1x1x32xf32> to vector<1x32xf32>
    %cst_8 = arith.constant dense<0.000000e+00> : vector<2x8xf32>
    %7 = vector.multi_reduction <add>, %2, %cst_8 [2] : vector<2x8x32xf32> to vector<2x8xf32>
    %8 = vector.shape_cast %7 : vector<2x8xf32> to vector<2x8x1xf32>
    %cst_9 = arith.constant 3.200000e+01 : f32
    %9 = vector.broadcast %cst_9 : f32 to vector<2x8x1xf32>
    %10 = arith.divf %8, %9 : vector<2x8x1xf32>
    %11 = vector.broadcast %10 : vector<2x8x1xf32> to vector<2x8x32xf32>
    %12 = arith.subf %2, %11 : vector<2x8x32xf32>
    %13 = arith.mulf %12, %12 : vector<2x8x32xf32>
    %cst_10 = arith.constant dense<0.000000e+00> : vector<2x8xf32>
    %14 = vector.multi_reduction <add>, %13, %cst_10 [2] : vector<2x8x32xf32> to vector<2x8xf32>
    %15 = vector.shape_cast %14 : vector<2x8xf32> to vector<2x8x1xf32>
    %cst_11 = arith.constant 3.200000e+01 : f32
    %16 = vector.broadcast %cst_11 : f32 to vector<2x8x1xf32>
    %17 = arith.divf %15, %16 : vector<2x8x1xf32>
    %cst_12 = arith.constant 9.99999974E-6 : f32
    %18 = vector.broadcast %cst_12 : f32 to vector<2x8x1xf32>
    %19 = arith.addf %17, %18 : vector<2x8x1xf32>
    %20 = math.rsqrt %19 : vector<2x8x1xf32>
    %21 = vector.broadcast %20 : vector<2x8x1xf32> to vector<2x8x32xf32>
    %22 = arith.mulf %12, %21 : vector<2x8x32xf32>
    %23 = vector.shape_cast %4 : vector<1x32xf32> to vector<1x1x32xf32>
    %24 = vector.broadcast %23 : vector<1x1x32xf32> to vector<2x8x32xf32>
    %25 = arith.mulf %22, %24 : vector<2x8x32xf32>
    %26 = vector.shape_cast %6 : vector<1x32xf32> to vector<1x1x32xf32>
    %27 = vector.broadcast %26 : vector<1x1x32xf32> to vector<2x8x32xf32>
    %28 = arith.addf %25, %27 : vector<2x8x32xf32>
    %29 = vector.shape_cast %28 : vector<2x8x32xf32> to vector<16x32xf32>
    %c0_13 = arith.constant 0 : index
    %c0_14 = arith.constant 0 : index
    %c0_15 = arith.constant 0 : index
    %30 = vector.load %arg3[%c0_13, %c0_14, %c0_15] : memref<2x32x128xf32, #tpu.memory_space<vmem>>, vector<1x32x128xf32>
    %31 = vector.shape_cast %30 : vector<1x32x128xf32> to vector<32x128xf32>
    %cst_16 = arith.constant dense<0.000000e+00> : vector<16x128xf32>
    %32 = tpu.matmul %29, %31, %cst_16 {dimension_numbers = #tpu.dot_dimension_numbers<[1], [0], [0], [1], [0, 0, 1, 1], [], []>} : vector<16x32xf32>, vector<32x128xf32>, vector<16x128xf32> -> vector<16x128xf32>
    %33 = vector.extract_strided_slice %32 {offsets = [0, 0], sizes = [16, 64], strides = [1, 1]} : vector<16x128xf32> to vector<16x64xf32>
    %34 = vector.shape_cast %33 : vector<16x64xf32> to vector<2x8x64xf32>
    %35 = vector.extract_strided_slice %32 {offsets = [0, 64], sizes = [16, 64], strides = [1, 1]} : vector<16x128xf32> to vector<16x64xf32>
    %36 = vector.shape_cast %35 : vector<16x64xf32> to vector<2x8x64xf32>
    %c0_17 = arith.constant 0 : index
    %c0_18 = arith.constant 0 : index
    %c0_19 = arith.constant 0 : index
    %37 = vector.load %arg4[%c0_17, %c0_18, %c0_19] : memref<2x4x64xf32, #tpu.memory_space<vmem>>, vector<1x4x64xf32>
    %38 = vector.shape_cast %37 : vector<1x4x64xf32> to vector<4x64xf32>
    %c0_20 = arith.constant 0 : index
    %c0_21 = arith.constant 0 : index
    %c0_22 = arith.constant 0 : index
    %39 = vector.load %arg5[%c0_20, %c0_21, %c0_22] : memref<2x1x64xf32, #tpu.memory_space<vmem>>, vector<1x1x64xf32>
    %40 = vector.shape_cast %39 : vector<1x1x64xf32> to vector<1x64xf32>
    %cst_23 = arith.constant 0.000000e+00 : f32
    %41 = vector.broadcast %cst_23 : f32 to vector<2x3x64xf32>
    %42 = tpu.concatenate %41, %34 in 1 : vector<2x3x64xf32>, vector<2x8x64xf32> -> vector<2x11x64xf32>
    %cst_24 = arith.constant 0.000000e+00 : f32
    %43 = vector.broadcast %cst_24 : f32 to vector<2x8x64xf32>
    %44 = vector.extract_strided_slice %38 {offsets = [0, 0], sizes = [1, 64], strides = [1, 1]} : vector<4x64xf32> to vector<1x64xf32>
    %45 = vector.extract_strided_slice %42 {offsets = [0, 0, 0], sizes = [2, 8, 64], strides = [1, 1, 1]} : vector<2x11x64xf32> to vector<2x8x64xf32>
    %46 = vector.shape_cast %44 : vector<1x64xf32> to vector<1x1x64xf32>
    %47 = vector.broadcast %46 : vector<1x1x64xf32> to vector<2x8x64xf32>
    %48 = arith.mulf %47, %45 : vector<2x8x64xf32>
    %49 = arith.addf %43, %48 : vector<2x8x64xf32>
    %50 = vector.extract_strided_slice %38 {offsets = [1, 0], sizes = [1, 64], strides = [1, 1]} : vector<4x64xf32> to vector<1x64xf32>
    %51 = vector.extract_strided_slice %42 {offsets = [0, 1, 0], sizes = [2, 8, 64], strides = [1, 1, 1]} : vector<2x11x64xf32> to vector<2x8x64xf32>
    %52 = vector.shape_cast %50 : vector<1x64xf32> to vector<1x1x64xf32>
    %53 = vector.broadcast %52 : vector<1x1x64xf32> to vector<2x8x64xf32>
    %54 = arith.mulf %53, %51 : vector<2x8x64xf32>
    %55 = arith.addf %49, %54 : vector<2x8x64xf32>
    %56 = vector.extract_strided_slice %38 {offsets = [2, 0], sizes = [1, 64], strides = [1, 1]} : vector<4x64xf32> to vector<1x64xf32>
    %57 = vector.extract_strided_slice %42 {offsets = [0, 2, 0], sizes = [2, 8, 64], strides = [1, 1, 1]} : vector<2x11x64xf32> to vector<2x8x64xf32>
    %58 = vector.shape_cast %56 : vector<1x64xf32> to vector<1x1x64xf32>
    %59 = vector.broadcast %58 : vector<1x1x64xf32> to vector<2x8x64xf32>
    %60 = arith.mulf %59, %57 : vector<2x8x64xf32>
    %61 = arith.addf %55, %60 : vector<2x8x64xf32>
    %62 = vector.extract_strided_slice %38 {offsets = [3, 0], sizes = [1, 64], strides = [1, 1]} : vector<4x64xf32> to vector<1x64xf32>
    %63 = vector.extract_strided_slice %42 {offsets = [0, 3, 0], sizes = [2, 8, 64], strides = [1, 1, 1]} : vector<2x11x64xf32> to vector<2x8x64xf32>
    %64 = vector.shape_cast %62 : vector<1x64xf32> to vector<1x1x64xf32>
    %65 = vector.broadcast %64 : vector<1x1x64xf32> to vector<2x8x64xf32>
    %66 = arith.mulf %65, %63 : vector<2x8x64xf32>
    %67 = arith.addf %61, %66 : vector<2x8x64xf32>
    %68 = vector.shape_cast %40 : vector<1x64xf32> to vector<1x1x64xf32>
    %69 = vector.broadcast %68 : vector<1x1x64xf32> to vector<2x8x64xf32>
    %70 = arith.addf %67, %69 : vector<2x8x64xf32>
    %cst_25 = arith.constant 0.000000e+00 : f32
    %71 = vector.broadcast %cst_25 : f32 to vector<2x8x64xf32>
    %72 = arith.subf %71, %70 : vector<2x8x64xf32>
    %73 = math.exp %72 : vector<2x8x64xf32>
    %cst_26 = arith.constant 1.000000e+00 : f32
    %74 = vector.broadcast %cst_26 : f32 to vector<2x8x64xf32>
    %75 = arith.addf %74, %73 : vector<2x8x64xf32>
    %76 = tpu.reciprocal %75 {approx = true} : vector<2x8x64xf32> -> vector<2x8x64xf32>
    %77 = arith.mulf %70, %76 : vector<2x8x64xf32>
    %78 = vector.shape_cast %77 : vector<2x8x64xf32> to vector<16x64xf32>
    %c0_27 = arith.constant 0 : index
    %c0_28 = arith.constant 0 : index
    %c0_29 = arith.constant 0 : index
    %79 = vector.load %arg6[%c0_27, %c0_28, %c0_29] : memref<2x64x34xf32, #tpu.memory_space<vmem>>, vector<1x64x34xf32>
    %80 = vector.shape_cast %79 : vector<1x64x34xf32> to vector<64x34xf32>
    %cst_30 = arith.constant dense<0.000000e+00> : vector<16x34xf32>
    %81 = tpu.matmul %78, %80, %cst_30 {dimension_numbers = #tpu.dot_dimension_numbers<[1], [0], [0], [1], [0, 0, 1, 1], [], []>} : vector<16x64xf32>, vector<64x34xf32>, vector<16x34xf32> -> vector<16x34xf32>
    %82 = vector.extract_strided_slice %81 {offsets = [0, 0], sizes = [16, 2], strides = [1, 1]} : vector<16x34xf32> to vector<16x2xf32>
    %83 = vector.extract_strided_slice %81 {offsets = [0, 2], sizes = [16, 16], strides = [1, 1]} : vector<16x34xf32> to vector<16x16xf32>
    %84 = vector.shape_cast %83 : vector<16x16xf32> to vector<2x8x16xf32>
    %85 = vector.extract_strided_slice %81 {offsets = [0, 18], sizes = [16, 16], strides = [1, 1]} : vector<16x34xf32> to vector<16x16xf32>
    %86 = vector.shape_cast %85 : vector<16x16xf32> to vector<2x8x16xf32>
    %c0_31 = arith.constant 0 : index
    %c0_32 = arith.constant 0 : index
    %c0_33 = arith.constant 0 : index
    %87 = vector.load %arg7[%c0_31, %c0_32, %c0_33] : memref<2x2x64xf32, #tpu.memory_space<vmem>>, vector<1x2x64xf32>
    %88 = vector.shape_cast %87 : vector<1x2x64xf32> to vector<2x64xf32>
    %cst_34 = arith.constant dense<0.000000e+00> : vector<16x64xf32>
    %89 = tpu.matmul %82, %88, %cst_34 {dimension_numbers = #tpu.dot_dimension_numbers<[1], [0], [0], [1], [0, 0, 1, 1], [], []>} : vector<16x2xf32>, vector<2x64xf32>, vector<16x64xf32> -> vector<16x64xf32>
    %c0_35 = arith.constant 0 : index
    %c0_36 = arith.constant 0 : index
    %c0_37 = arith.constant 0 : index
    %90 = vector.load %arg8[%c0_35, %c0_36, %c0_37] : memref<2x1x64xf32, #tpu.memory_space<vmem>>, vector<1x1x64xf32>
    %91 = vector.shape_cast %90 : vector<1x1x64xf32> to vector<1x64xf32>
    %92 = vector.broadcast %91 : vector<1x64xf32> to vector<16x64xf32>
    %93 = arith.addf %89, %92 : vector<16x64xf32>
    %cst_38 = arith.constant 2.000000e+01 : f32
    %94 = vector.broadcast %cst_38 : f32 to vector<16x64xf32>
    %95 = arith.cmpf ogt, %93, %94 : vector<16x64xf32>
    %96 = math.exp %93 : vector<16x64xf32>
    %cst_39 = arith.constant 1.000000e+00 : f32
    %97 = vector.broadcast %cst_39 : f32 to vector<16x64xf32>
    %98 = arith.addf %97, %96 : vector<16x64xf32>
    %99 = math.log %98 : vector<16x64xf32>
    %100 = arith.select %95, %93, %99 : vector<16x64xi1>, vector<16x64xf32>
    %101 = vector.shape_cast %100 : vector<16x64xf32> to vector<2x8x64xf32>
    %c0_40 = arith.constant 0 : index
    %c0_41 = arith.constant 0 : index
    %c0_42 = arith.constant 0 : index
    %102 = vector.load %arg9[%c0_40, %c0_41, %c0_42] : memref<2x16x64xf32, #tpu.memory_space<vmem>>, vector<1x16x64xf32>
    %103 = vector.shape_cast %102 : vector<1x16x64xf32> to vector<16x64xf32>
    %cst_43 = arith.constant 0.000000e+00 : f32
    %104 = vector.broadcast %cst_43 : f32 to vector<2x16x64xf32>
    %105 = vector.extract_strided_slice %101 {offsets = [0, 0, 0], sizes = [2, 1, 64], strides = [1, 1, 1]} : vector<2x8x64xf32> to vector<2x1x64xf32>
    %106 = vector.shape_cast %105 : vector<2x1x64xf32> to vector<2x64xf32>
    %107 = vector.extract_strided_slice %77 {offsets = [0, 0, 0], sizes = [2, 1, 64], strides = [1, 1, 1]} : vector<2x8x64xf32> to vector<2x1x64xf32>
    %108 = vector.shape_cast %107 : vector<2x1x64xf32> to vector<2x64xf32>
    %109 = vector.shape_cast %106 : vector<2x64xf32> to vector<2x1x64xf32>
    %110 = vector.shape_cast %103 : vector<16x64xf32> to vector<1x16x64xf32>
    %111 = vector.broadcast %109 : vector<2x1x64xf32> to vector<2x16x64xf32>
    %112 = vector.broadcast %110 : vector<1x16x64xf32> to vector<2x16x64xf32>
    %113 = arith.mulf %111, %112 : vector<2x16x64xf32>
    %114 = math.exp %113 : vector<2x16x64xf32>
    %115 = arith.mulf %106, %108 : vector<2x64xf32>
    %116 = vector.shape_cast %115 : vector<2x64xf32> to vector<2x1x64xf32>
    %117 = vector.extract_strided_slice %84 {offsets = [0, 0, 0], sizes = [2, 1, 16], strides = [1, 1, 1]} : vector<2x8x16xf32> to vector<2x1x16xf32>
    %118 = vector.shape_cast %117 : vector<2x1x16xf32> to vector<2x16xf32>
    %119 = vector.shape_cast %118 : vector<2x16xf32> to vector<2x16x1xf32>
    %120 = vector.broadcast %116 : vector<2x1x64xf32> to vector<2x16x64xf32>
    %121 = vector.broadcast %119 : vector<2x16x1xf32> to vector<2x16x64xf32>
    %122 = arith.mulf %120, %121 : vector<2x16x64xf32>
    %123 = arith.mulf %114, %104 : vector<2x16x64xf32>
    %124 = arith.addf %123, %122 : vector<2x16x64xf32>
    %125 = vector.extract_strided_slice %86 {offsets = [0, 0, 0], sizes = [2, 1, 16], strides = [1, 1, 1]} : vector<2x8x16xf32> to vector<2x1x16xf32>
    %126 = vector.shape_cast %125 : vector<2x1x16xf32> to vector<2x16xf32>
    %127 = vector.shape_cast %126 : vector<2x16xf32> to vector<2x16x1xf32>
    %128 = vector.broadcast %127 : vector<2x16x1xf32> to vector<2x16x64xf32>
    %129 = arith.mulf %124, %128 : vector<2x16x64xf32>
    %cst_44 = arith.constant dense<0.000000e+00> : vector<2x64xf32>
    %130 = vector.multi_reduction <add>, %129, %cst_44 [1] : vector<2x16x64xf32> to vector<2x64xf32>
    %131 = vector.extract_strided_slice %101 {offsets = [0, 1, 0], sizes = [2, 1, 64], strides = [1, 1, 1]} : vector<2x8x64xf32> to vector<2x1x64xf32>
    %132 = vector.shape_cast %131 : vector<2x1x64xf32> to vector<2x64xf32>
    %133 = vector.extract_strided_slice %77 {offsets = [0, 1, 0], sizes = [2, 1, 64], strides = [1, 1, 1]} : vector<2x8x64xf32> to vector<2x1x64xf32>
    %134 = vector.shape_cast %133 : vector<2x1x64xf32> to vector<2x64xf32>
    %135 = vector.shape_cast %132 : vector<2x64xf32> to vector<2x1x64xf32>
    %136 = vector.shape_cast %103 : vector<16x64xf32> to vector<1x16x64xf32>
    %137 = vector.broadcast %135 : vector<2x1x64xf32> to vector<2x16x64xf32>
    %138 = vector.broadcast %136 : vector<1x16x64xf32> to vector<2x16x64xf32>
    %139 = arith.mulf %137, %138 : vector<2x16x64xf32>
    %140 = math.exp %139 : vector<2x16x64xf32>
    %141 = arith.mulf %132, %134 : vector<2x64xf32>
    %142 = vector.shape_cast %141 : vector<2x64xf32> to vector<2x1x64xf32>
    %143 = vector.extract_strided_slice %84 {offsets = [0, 1, 0], sizes = [2, 1, 16], strides = [1, 1, 1]} : vector<2x8x16xf32> to vector<2x1x16xf32>
    %144 = vector.shape_cast %143 : vector<2x1x16xf32> to vector<2x16xf32>
    %145 = vector.shape_cast %144 : vector<2x16xf32> to vector<2x16x1xf32>
    %146 = vector.broadcast %142 : vector<2x1x64xf32> to vector<2x16x64xf32>
    %147 = vector.broadcast %145 : vector<2x16x1xf32> to vector<2x16x64xf32>
    %148 = arith.mulf %146, %147 : vector<2x16x64xf32>
    %149 = arith.mulf %140, %124 : vector<2x16x64xf32>
    %150 = arith.addf %149, %148 : vector<2x16x64xf32>
    %151 = vector.extract_strided_slice %86 {offsets = [0, 1, 0], sizes = [2, 1, 16], strides = [1, 1, 1]} : vector<2x8x16xf32> to vector<2x1x16xf32>
    %152 = vector.shape_cast %151 : vector<2x1x16xf32> to vector<2x16xf32>
    %153 = vector.shape_cast %152 : vector<2x16xf32> to vector<2x16x1xf32>
    %154 = vector.broadcast %153 : vector<2x16x1xf32> to vector<2x16x64xf32>
    %155 = arith.mulf %150, %154 : vector<2x16x64xf32>
    %cst_45 = arith.constant dense<0.000000e+00> : vector<2x64xf32>
    %156 = vector.multi_reduction <add>, %155, %cst_45 [1] : vector<2x16x64xf32> to vector<2x64xf32>
    %157 = vector.extract_strided_slice %101 {offsets = [0, 2, 0], sizes = [2, 1, 64], strides = [1, 1, 1]} : vector<2x8x64xf32> to vector<2x1x64xf32>
    %158 = vector.shape_cast %157 : vector<2x1x64xf32> to vector<2x64xf32>
    %159 = vector.extract_strided_slice %77 {offsets = [0, 2, 0], sizes = [2, 1, 64], strides = [1, 1, 1]} : vector<2x8x64xf32> to vector<2x1x64xf32>
    %160 = vector.shape_cast %159 : vector<2x1x64xf32> to vector<2x64xf32>
    %161 = vector.shape_cast %158 : vector<2x64xf32> to vector<2x1x64xf32>
    %162 = vector.shape_cast %103 : vector<16x64xf32> to vector<1x16x64xf32>
    %163 = vector.broadcast %161 : vector<2x1x64xf32> to vector<2x16x64xf32>
    %164 = vector.broadcast %162 : vector<1x16x64xf32> to vector<2x16x64xf32>
    %165 = arith.mulf %163, %164 : vector<2x16x64xf32>
    %166 = math.exp %165 : vector<2x16x64xf32>
    %167 = arith.mulf %158, %160 : vector<2x64xf32>
    %168 = vector.shape_cast %167 : vector<2x64xf32> to vector<2x1x64xf32>
    %169 = vector.extract_strided_slice %84 {offsets = [0, 2, 0], sizes = [2, 1, 16], strides = [1, 1, 1]} : vector<2x8x16xf32> to vector<2x1x16xf32>
    %170 = vector.shape_cast %169 : vector<2x1x16xf32> to vector<2x16xf32>
    %171 = vector.shape_cast %170 : vector<2x16xf32> to vector<2x16x1xf32>
    %172 = vector.broadcast %168 : vector<2x1x64xf32> to vector<2x16x64xf32>
    %173 = vector.broadcast %171 : vector<2x16x1xf32> to vector<2x16x64xf32>
    %174 = arith.mulf %172, %173 : vector<2x16x64xf32>
    %175 = arith.mulf %166, %150 : vector<2x16x64xf32>
    %176 = arith.addf %175, %174 : vector<2x16x64xf32>
    %177 = vector.extract_strided_slice %86 {offsets = [0, 2, 0], sizes = [2, 1, 16], strides = [1, 1, 1]} : vector<2x8x16xf32> to vector<2x1x16xf32>
    %178 = vector.shape_cast %177 : vector<2x1x16xf32> to vector<2x16xf32>
    %179 = vector.shape_cast %178 : vector<2x16xf32> to vector<2x16x1xf32>
    %180 = vector.broadcast %179 : vector<2x16x1xf32> to vector<2x16x64xf32>
    %181 = arith.mulf %176, %180 : vector<2x16x64xf32>
    %cst_46 = arith.constant dense<0.000000e+00> : vector<2x64xf32>
    %182 = vector.multi_reduction <add>, %181, %cst_46 [1] : vector<2x16x64xf32> to vector<2x64xf32>
    %183 = vector.extract_strided_slice %101 {offsets = [0, 3, 0], sizes = [2, 1, 64], strides = [1, 1, 1]} : vector<2x8x64xf32> to vector<2x1x64xf32>
    %184 = vector.shape_cast %183 : vector<2x1x64xf32> to vector<2x64xf32>
    %185 = vector.extract_strided_slice %77 {offsets = [0, 3, 0], sizes = [2, 1, 64], strides = [1, 1, 1]} : vector<2x8x64xf32> to vector<2x1x64xf32>
    %186 = vector.shape_cast %185 : vector<2x1x64xf32> to vector<2x64xf32>
    %187 = vector.shape_cast %184 : vector<2x64xf32> to vector<2x1x64xf32>
    %188 = vector.shape_cast %103 : vector<16x64xf32> to vector<1x16x64xf32>
    %189 = vector.broadcast %187 : vector<2x1x64xf32> to vector<2x16x64xf32>
    %190 = vector.broadcast %188 : vector<1x16x64xf32> to vector<2x16x64xf32>
    %191 = arith.mulf %189, %190 : vector<2x16x64xf32>
    %192 = math.exp %191 : vector<2x16x64xf32>
    %193 = arith.mulf %184, %186 : vector<2x64xf32>
    %194 = vector.shape_cast %193 : vector<2x64xf32> to vector<2x1x64xf32>
    %195 = vector.extract_strided_slice %84 {offsets = [0, 3, 0], sizes = [2, 1, 16], strides = [1, 1, 1]} : vector<2x8x16xf32> to vector<2x1x16xf32>
    %196 = vector.shape_cast %195 : vector<2x1x16xf32> to vector<2x16xf32>
    %197 = vector.shape_cast %196 : vector<2x16xf32> to vector<2x16x1xf32>
    %198 = vector.broadcast %194 : vector<2x1x64xf32> to vector<2x16x64xf32>
    %199 = vector.broadcast %197 : vector<2x16x1xf32> to vector<2x16x64xf32>
    %200 = arith.mulf %198, %199 : vector<2x16x64xf32>
    %201 = arith.mulf %192, %176 : vector<2x16x64xf32>
    %202 = arith.addf %201, %200 : vector<2x16x64xf32>
    %203 = vector.extract_strided_slice %86 {offsets = [0, 3, 0], sizes = [2, 1, 16], strides = [1, 1, 1]} : vector<2x8x16xf32> to vector<2x1x16xf32>
    %204 = vector.shape_cast %203 : vector<2x1x16xf32> to vector<2x16xf32>
    %205 = vector.shape_cast %204 : vector<2x16xf32> to vector<2x16x1xf32>
    %206 = vector.broadcast %205 : vector<2x16x1xf32> to vector<2x16x64xf32>
    %207 = arith.mulf %202, %206 : vector<2x16x64xf32>
    %cst_47 = arith.constant dense<0.000000e+00> : vector<2x64xf32>
    %208 = vector.multi_reduction <add>, %207, %cst_47 [1] : vector<2x16x64xf32> to vector<2x64xf32>
    %209 = vector.extract_strided_slice %101 {offsets = [0, 4, 0], sizes = [2, 1, 64], strides = [1, 1, 1]} : vector<2x8x64xf32> to vector<2x1x64xf32>
    %210 = vector.shape_cast %209 : vector<2x1x64xf32> to vector<2x64xf32>
    %211 = vector.extract_strided_slice %77 {offsets = [0, 4, 0], sizes = [2, 1, 64], strides = [1, 1, 1]} : vector<2x8x64xf32> to vector<2x1x64xf32>
    %212 = vector.shape_cast %211 : vector<2x1x64xf32> to vector<2x64xf32>
    %213 = vector.shape_cast %210 : vector<2x64xf32> to vector<2x1x64xf32>
    %214 = vector.shape_cast %103 : vector<16x64xf32> to vector<1x16x64xf32>
    %215 = vector.broadcast %213 : vector<2x1x64xf32> to vector<2x16x64xf32>
    %216 = vector.broadcast %214 : vector<1x16x64xf32> to vector<2x16x64xf32>
    %217 = arith.mulf %215, %216 : vector<2x16x64xf32>
    %218 = math.exp %217 : vector<2x16x64xf32>
    %219 = arith.mulf %210, %212 : vector<2x64xf32>
    %220 = vector.shape_cast %219 : vector<2x64xf32> to vector<2x1x64xf32>
    %221 = vector.extract_strided_slice %84 {offsets = [0, 4, 0], sizes = [2, 1, 16], strides = [1, 1, 1]} : vector<2x8x16xf32> to vector<2x1x16xf32>
    %222 = vector.shape_cast %221 : vector<2x1x16xf32> to vector<2x16xf32>
    %223 = vector.shape_cast %222 : vector<2x16xf32> to vector<2x16x1xf32>
    %224 = vector.broadcast %220 : vector<2x1x64xf32> to vector<2x16x64xf32>
    %225 = vector.broadcast %223 : vector<2x16x1xf32> to vector<2x16x64xf32>
    %226 = arith.mulf %224, %225 : vector<2x16x64xf32>
    %227 = arith.mulf %218, %202 : vector<2x16x64xf32>
    %228 = arith.addf %227, %226 : vector<2x16x64xf32>
    %229 = vector.extract_strided_slice %86 {offsets = [0, 4, 0], sizes = [2, 1, 16], strides = [1, 1, 1]} : vector<2x8x16xf32> to vector<2x1x16xf32>
    %230 = vector.shape_cast %229 : vector<2x1x16xf32> to vector<2x16xf32>
    %231 = vector.shape_cast %230 : vector<2x16xf32> to vector<2x16x1xf32>
    %232 = vector.broadcast %231 : vector<2x16x1xf32> to vector<2x16x64xf32>
    %233 = arith.mulf %228, %232 : vector<2x16x64xf32>
    %cst_48 = arith.constant dense<0.000000e+00> : vector<2x64xf32>
    %234 = vector.multi_reduction <add>, %233, %cst_48 [1] : vector<2x16x64xf32> to vector<2x64xf32>
    %235 = vector.extract_strided_slice %101 {offsets = [0, 5, 0], sizes = [2, 1, 64], strides = [1, 1, 1]} : vector<2x8x64xf32> to vector<2x1x64xf32>
    %236 = vector.shape_cast %235 : vector<2x1x64xf32> to vector<2x64xf32>
    %237 = vector.extract_strided_slice %77 {offsets = [0, 5, 0], sizes = [2, 1, 64], strides = [1, 1, 1]} : vector<2x8x64xf32> to vector<2x1x64xf32>
    %238 = vector.shape_cast %237 : vector<2x1x64xf32> to vector<2x64xf32>
    %239 = vector.shape_cast %236 : vector<2x64xf32> to vector<2x1x64xf32>
    %240 = vector.shape_cast %103 : vector<16x64xf32> to vector<1x16x64xf32>
    %241 = vector.broadcast %239 : vector<2x1x64xf32> to vector<2x16x64xf32>
    %242 = vector.broadcast %240 : vector<1x16x64xf32> to vector<2x16x64xf32>
    %243 = arith.mulf %241, %242 : vector<2x16x64xf32>
    %244 = math.exp %243 : vector<2x16x64xf32>
    %245 = arith.mulf %236, %238 : vector<2x64xf32>
    %246 = vector.shape_cast %245 : vector<2x64xf32> to vector<2x1x64xf32>
    %247 = vector.extract_strided_slice %84 {offsets = [0, 5, 0], sizes = [2, 1, 16], strides = [1, 1, 1]} : vector<2x8x16xf32> to vector<2x1x16xf32>
    %248 = vector.shape_cast %247 : vector<2x1x16xf32> to vector<2x16xf32>
    %249 = vector.shape_cast %248 : vector<2x16xf32> to vector<2x16x1xf32>
    %250 = vector.broadcast %246 : vector<2x1x64xf32> to vector<2x16x64xf32>
    %251 = vector.broadcast %249 : vector<2x16x1xf32> to vector<2x16x64xf32>
    %252 = arith.mulf %250, %251 : vector<2x16x64xf32>
    %253 = arith.mulf %244, %228 : vector<2x16x64xf32>
    %254 = arith.addf %253, %252 : vector<2x16x64xf32>
    %255 = vector.extract_strided_slice %86 {offsets = [0, 5, 0], sizes = [2, 1, 16], strides = [1, 1, 1]} : vector<2x8x16xf32> to vector<2x1x16xf32>
    %256 = vector.shape_cast %255 : vector<2x1x16xf32> to vector<2x16xf32>
    %257 = vector.shape_cast %256 : vector<2x16xf32> to vector<2x16x1xf32>
    %258 = vector.broadcast %257 : vector<2x16x1xf32> to vector<2x16x64xf32>
    %259 = arith.mulf %254, %258 : vector<2x16x64xf32>
    %cst_49 = arith.constant dense<0.000000e+00> : vector<2x64xf32>
    %260 = vector.multi_reduction <add>, %259, %cst_49 [1] : vector<2x16x64xf32> to vector<2x64xf32>
    %261 = vector.extract_strided_slice %101 {offsets = [0, 6, 0], sizes = [2, 1, 64], strides = [1, 1, 1]} : vector<2x8x64xf32> to vector<2x1x64xf32>
    %262 = vector.shape_cast %261 : vector<2x1x64xf32> to vector<2x64xf32>
    %263 = vector.extract_strided_slice %77 {offsets = [0, 6, 0], sizes = [2, 1, 64], strides = [1, 1, 1]} : vector<2x8x64xf32> to vector<2x1x64xf32>
    %264 = vector.shape_cast %263 : vector<2x1x64xf32> to vector<2x64xf32>
    %265 = vector.shape_cast %262 : vector<2x64xf32> to vector<2x1x64xf32>
    %266 = vector.shape_cast %103 : vector<16x64xf32> to vector<1x16x64xf32>
    %267 = vector.broadcast %265 : vector<2x1x64xf32> to vector<2x16x64xf32>
    %268 = vector.broadcast %266 : vector<1x16x64xf32> to vector<2x16x64xf32>
    %269 = arith.mulf %267, %268 : vector<2x16x64xf32>
    %270 = math.exp %269 : vector<2x16x64xf32>
    %271 = arith.mulf %262, %264 : vector<2x64xf32>
    %272 = vector.shape_cast %271 : vector<2x64xf32> to vector<2x1x64xf32>
    %273 = vector.extract_strided_slice %84 {offsets = [0, 6, 0], sizes = [2, 1, 16], strides = [1, 1, 1]} : vector<2x8x16xf32> to vector<2x1x16xf32>
    %274 = vector.shape_cast %273 : vector<2x1x16xf32> to vector<2x16xf32>
    %275 = vector.shape_cast %274 : vector<2x16xf32> to vector<2x16x1xf32>
    %276 = vector.broadcast %272 : vector<2x1x64xf32> to vector<2x16x64xf32>
    %277 = vector.broadcast %275 : vector<2x16x1xf32> to vector<2x16x64xf32>
    %278 = arith.mulf %276, %277 : vector<2x16x64xf32>
    %279 = arith.mulf %270, %254 : vector<2x16x64xf32>
    %280 = arith.addf %279, %278 : vector<2x16x64xf32>
    %281 = vector.extract_strided_slice %86 {offsets = [0, 6, 0], sizes = [2, 1, 16], strides = [1, 1, 1]} : vector<2x8x16xf32> to vector<2x1x16xf32>
    %282 = vector.shape_cast %281 : vector<2x1x16xf32> to vector<2x16xf32>
    %283 = vector.shape_cast %282 : vector<2x16xf32> to vector<2x16x1xf32>
    %284 = vector.broadcast %283 : vector<2x16x1xf32> to vector<2x16x64xf32>
    %285 = arith.mulf %280, %284 : vector<2x16x64xf32>
    %cst_50 = arith.constant dense<0.000000e+00> : vector<2x64xf32>
    %286 = vector.multi_reduction <add>, %285, %cst_50 [1] : vector<2x16x64xf32> to vector<2x64xf32>
    %287 = vector.extract_strided_slice %101 {offsets = [0, 7, 0], sizes = [2, 1, 64], strides = [1, 1, 1]} : vector<2x8x64xf32> to vector<2x1x64xf32>
    %288 = vector.shape_cast %287 : vector<2x1x64xf32> to vector<2x64xf32>
    %289 = vector.extract_strided_slice %77 {offsets = [0, 7, 0], sizes = [2, 1, 64], strides = [1, 1, 1]} : vector<2x8x64xf32> to vector<2x1x64xf32>
    %290 = vector.shape_cast %289 : vector<2x1x64xf32> to vector<2x64xf32>
    %291 = vector.shape_cast %288 : vector<2x64xf32> to vector<2x1x64xf32>
    %292 = vector.shape_cast %103 : vector<16x64xf32> to vector<1x16x64xf32>
    %293 = vector.broadcast %291 : vector<2x1x64xf32> to vector<2x16x64xf32>
    %294 = vector.broadcast %292 : vector<1x16x64xf32> to vector<2x16x64xf32>
    %295 = arith.mulf %293, %294 : vector<2x16x64xf32>
    %296 = math.exp %295 : vector<2x16x64xf32>
    %297 = arith.mulf %288, %290 : vector<2x64xf32>
    %298 = vector.shape_cast %297 : vector<2x64xf32> to vector<2x1x64xf32>
    %299 = vector.extract_strided_slice %84 {offsets = [0, 7, 0], sizes = [2, 1, 16], strides = [1, 1, 1]} : vector<2x8x16xf32> to vector<2x1x16xf32>
    %300 = vector.shape_cast %299 : vector<2x1x16xf32> to vector<2x16xf32>
    %301 = vector.shape_cast %300 : vector<2x16xf32> to vector<2x16x1xf32>
    %302 = vector.broadcast %298 : vector<2x1x64xf32> to vector<2x16x64xf32>
    %303 = vector.broadcast %301 : vector<2x16x1xf32> to vector<2x16x64xf32>
    %304 = arith.mulf %302, %303 : vector<2x16x64xf32>
    %305 = arith.mulf %296, %280 : vector<2x16x64xf32>
    %306 = arith.addf %305, %304 : vector<2x16x64xf32>
    %307 = vector.extract_strided_slice %86 {offsets = [0, 7, 0], sizes = [2, 1, 16], strides = [1, 1, 1]} : vector<2x8x16xf32> to vector<2x1x16xf32>
    %308 = vector.shape_cast %307 : vector<2x1x16xf32> to vector<2x16xf32>
    %309 = vector.shape_cast %308 : vector<2x16xf32> to vector<2x16x1xf32>
    %310 = vector.broadcast %309 : vector<2x16x1xf32> to vector<2x16x64xf32>
    %311 = arith.mulf %306, %310 : vector<2x16x64xf32>
    %cst_51 = arith.constant dense<0.000000e+00> : vector<2x64xf32>
    %312 = vector.multi_reduction <add>, %311, %cst_51 [1] : vector<2x16x64xf32> to vector<2x64xf32>
    %313 = vector.shape_cast %130 : vector<2x64xf32> to vector<2x1x64xf32>
    %314 = vector.shape_cast %156 : vector<2x64xf32> to vector<2x1x64xf32>
    %315 = vector.shape_cast %182 : vector<2x64xf32> to vector<2x1x64xf32>
    %316 = vector.shape_cast %208 : vector<2x64xf32> to vector<2x1x64xf32>
    %317 = vector.shape_cast %234 : vector<2x64xf32> to vector<2x1x64xf32>
    %318 = vector.shape_cast %260 : vector<2x64xf32> to vector<2x1x64xf32>
    %319 = vector.shape_cast %286 : vector<2x64xf32> to vector<2x1x64xf32>
    %320 = vector.shape_cast %312 : vector<2x64xf32> to vector<2x1x64xf32>
    %321 = tpu.concatenate %313, %314, %315, %316, %317, %318, %319, %320 in 1 : vector<2x1x64xf32>, vector<2x1x64xf32>, vector<2x1x64xf32>, vector<2x1x64xf32>, vector<2x1x64xf32>, vector<2x1x64xf32>, vector<2x1x64xf32>, vector<2x1x64xf32> -> vector<2x8x64xf32>
    %c0_52 = arith.constant 0 : index
    %c0_53 = arith.constant 0 : index
    %c0_54 = arith.constant 0 : index
    %322 = vector.load %arg10[%c0_52, %c0_53, %c0_54] : memref<2x1x64xf32, #tpu.memory_space<vmem>>, vector<1x1x64xf32>
    %323 = vector.shape_cast %322 : vector<1x1x64xf32> to vector<1x64xf32>
    %324 = vector.shape_cast %323 : vector<1x64xf32> to vector<1x1x64xf32>
    %325 = vector.broadcast %324 : vector<1x1x64xf32> to vector<2x8x64xf32>
    %326 = arith.mulf %77, %325 : vector<2x8x64xf32>
    %327 = arith.addf %321, %326 : vector<2x8x64xf32>
    %cst_55 = arith.constant 0.000000e+00 : f32
    %328 = vector.broadcast %cst_55 : f32 to vector<2x8x64xf32>
    %329 = arith.subf %328, %36 : vector<2x8x64xf32>
    %330 = math.exp %329 : vector<2x8x64xf32>
    %cst_56 = arith.constant 1.000000e+00 : f32
    %331 = vector.broadcast %cst_56 : f32 to vector<2x8x64xf32>
    %332 = arith.addf %331, %330 : vector<2x8x64xf32>
    %333 = tpu.reciprocal %332 {approx = true} : vector<2x8x64xf32> -> vector<2x8x64xf32>
    %334 = arith.mulf %36, %333 : vector<2x8x64xf32>
    %335 = arith.mulf %327, %334 : vector<2x8x64xf32>
    %336 = vector.shape_cast %335 : vector<2x8x64xf32> to vector<16x64xf32>
    %c0_57 = arith.constant 0 : index
    %c0_58 = arith.constant 0 : index
    %c0_59 = arith.constant 0 : index
    %337 = vector.load %arg11[%c0_57, %c0_58, %c0_59] : memref<2x64x32xf32, #tpu.memory_space<vmem>>, vector<1x64x32xf32>
    %338 = vector.shape_cast %337 : vector<1x64x32xf32> to vector<64x32xf32>
    %cst_60 = arith.constant dense<0.000000e+00> : vector<16x32xf32>
    %339 = tpu.matmul %336, %338, %cst_60 {dimension_numbers = #tpu.dot_dimension_numbers<[1], [0], [0], [1], [0, 0, 1, 1], [], []>} : vector<16x64xf32>, vector<64x32xf32>, vector<16x32xf32> -> vector<16x32xf32>
    %340 = vector.shape_cast %339 : vector<16x32xf32> to vector<2x8x32xf32>
    %341 = arith.addf %340, %2 : vector<2x8x32xf32>
    %c1 = arith.constant 1 : index
    %c0_61 = arith.constant 0 : index
    %c0_62 = arith.constant 0 : index
    %342 = vector.load %arg1[%c1, %c0_61, %c0_62] : memref<2x1x32xf32, #tpu.memory_space<vmem>>, vector<1x1x32xf32>
    %343 = vector.shape_cast %342 : vector<1x1x32xf32> to vector<1x32xf32>
    %c1_63 = arith.constant 1 : index
    %c0_64 = arith.constant 0 : index
    %c0_65 = arith.constant 0 : index
    %344 = vector.load %arg2[%c1_63, %c0_64, %c0_65] : memref<2x1x32xf32, #tpu.memory_space<vmem>>, vector<1x1x32xf32>
    %345 = vector.shape_cast %344 : vector<1x1x32xf32> to vector<1x32xf32>
    %cst_66 = arith.constant dense<0.000000e+00> : vector<2x8xf32>
    %346 = vector.multi_reduction <add>, %341, %cst_66 [2] : vector<2x8x32xf32> to vector<2x8xf32>
    %347 = vector.shape_cast %346 : vector<2x8xf32> to vector<2x8x1xf32>
    %cst_67 = arith.constant 3.200000e+01 : f32
    %348 = vector.broadcast %cst_67 : f32 to vector<2x8x1xf32>
    %349 = arith.divf %347, %348 : vector<2x8x1xf32>
    %350 = vector.broadcast %349 : vector<2x8x1xf32> to vector<2x8x32xf32>
    %351 = arith.subf %341, %350 : vector<2x8x32xf32>
    %352 = arith.mulf %351, %351 : vector<2x8x32xf32>
    %cst_68 = arith.constant dense<0.000000e+00> : vector<2x8xf32>
    %353 = vector.multi_reduction <add>, %352, %cst_68 [2] : vector<2x8x32xf32> to vector<2x8xf32>
    %354 = vector.shape_cast %353 : vector<2x8xf32> to vector<2x8x1xf32>
    %cst_69 = arith.constant 3.200000e+01 : f32
    %355 = vector.broadcast %cst_69 : f32 to vector<2x8x1xf32>
    %356 = arith.divf %354, %355 : vector<2x8x1xf32>
    %cst_70 = arith.constant 9.99999974E-6 : f32
    %357 = vector.broadcast %cst_70 : f32 to vector<2x8x1xf32>
    %358 = arith.addf %356, %357 : vector<2x8x1xf32>
    %359 = math.rsqrt %358 : vector<2x8x1xf32>
    %360 = vector.broadcast %359 : vector<2x8x1xf32> to vector<2x8x32xf32>
    %361 = arith.mulf %351, %360 : vector<2x8x32xf32>
    %362 = vector.shape_cast %343 : vector<1x32xf32> to vector<1x1x32xf32>
    %363 = vector.broadcast %362 : vector<1x1x32xf32> to vector<2x8x32xf32>
    %364 = arith.mulf %361, %363 : vector<2x8x32xf32>
    %365 = vector.shape_cast %345 : vector<1x32xf32> to vector<1x1x32xf32>
    %366 = vector.broadcast %365 : vector<1x1x32xf32> to vector<2x8x32xf32>
    %367 = arith.addf %364, %366 : vector<2x8x32xf32>
    %368 = vector.shape_cast %367 : vector<2x8x32xf32> to vector<16x32xf32>
    %c1_71 = arith.constant 1 : index
    %c0_72 = arith.constant 0 : index
    %c0_73 = arith.constant 0 : index
    %369 = vector.load %arg3[%c1_71, %c0_72, %c0_73] : memref<2x32x128xf32, #tpu.memory_space<vmem>>, vector<1x32x128xf32>
    %370 = vector.shape_cast %369 : vector<1x32x128xf32> to vector<32x128xf32>
    %cst_74 = arith.constant dense<0.000000e+00> : vector<16x128xf32>
    %371 = tpu.matmul %368, %370, %cst_74 {dimension_numbers = #tpu.dot_dimension_numbers<[1], [0], [0], [1], [0, 0, 1, 1], [], []>} : vector<16x32xf32>, vector<32x128xf32>, vector<16x128xf32> -> vector<16x128xf32>
    %372 = vector.extract_strided_slice %371 {offsets = [0, 0], sizes = [16, 64], strides = [1, 1]} : vector<16x128xf32> to vector<16x64xf32>
    %373 = vector.shape_cast %372 : vector<16x64xf32> to vector<2x8x64xf32>
    %374 = vector.extract_strided_slice %371 {offsets = [0, 64], sizes = [16, 64], strides = [1, 1]} : vector<16x128xf32> to vector<16x64xf32>
    %375 = vector.shape_cast %374 : vector<16x64xf32> to vector<2x8x64xf32>
    %c1_75 = arith.constant 1 : index
    %c0_76 = arith.constant 0 : index
    %c0_77 = arith.constant 0 : index
    %376 = vector.load %arg4[%c1_75, %c0_76, %c0_77] : memref<2x4x64xf32, #tpu.memory_space<vmem>>, vector<1x4x64xf32>
    %377 = vector.shape_cast %376 : vector<1x4x64xf32> to vector<4x64xf32>
    %c1_78 = arith.constant 1 : index
    %c0_79 = arith.constant 0 : index
    %c0_80 = arith.constant 0 : index
    %378 = vector.load %arg5[%c1_78, %c0_79, %c0_80] : memref<2x1x64xf32, #tpu.memory_space<vmem>>, vector<1x1x64xf32>
    %379 = vector.shape_cast %378 : vector<1x1x64xf32> to vector<1x64xf32>
    %cst_81 = arith.constant 0.000000e+00 : f32
    %380 = vector.broadcast %cst_81 : f32 to vector<2x3x64xf32>
    %381 = tpu.concatenate %380, %373 in 1 : vector<2x3x64xf32>, vector<2x8x64xf32> -> vector<2x11x64xf32>
    %cst_82 = arith.constant 0.000000e+00 : f32
    %382 = vector.broadcast %cst_82 : f32 to vector<2x8x64xf32>
    %383 = vector.extract_strided_slice %377 {offsets = [0, 0], sizes = [1, 64], strides = [1, 1]} : vector<4x64xf32> to vector<1x64xf32>
    %384 = vector.extract_strided_slice %381 {offsets = [0, 0, 0], sizes = [2, 8, 64], strides = [1, 1, 1]} : vector<2x11x64xf32> to vector<2x8x64xf32>
    %385 = vector.shape_cast %383 : vector<1x64xf32> to vector<1x1x64xf32>
    %386 = vector.broadcast %385 : vector<1x1x64xf32> to vector<2x8x64xf32>
    %387 = arith.mulf %386, %384 : vector<2x8x64xf32>
    %388 = arith.addf %382, %387 : vector<2x8x64xf32>
    %389 = vector.extract_strided_slice %377 {offsets = [1, 0], sizes = [1, 64], strides = [1, 1]} : vector<4x64xf32> to vector<1x64xf32>
    %390 = vector.extract_strided_slice %381 {offsets = [0, 1, 0], sizes = [2, 8, 64], strides = [1, 1, 1]} : vector<2x11x64xf32> to vector<2x8x64xf32>
    %391 = vector.shape_cast %389 : vector<1x64xf32> to vector<1x1x64xf32>
    %392 = vector.broadcast %391 : vector<1x1x64xf32> to vector<2x8x64xf32>
    %393 = arith.mulf %392, %390 : vector<2x8x64xf32>
    %394 = arith.addf %388, %393 : vector<2x8x64xf32>
    %395 = vector.extract_strided_slice %377 {offsets = [2, 0], sizes = [1, 64], strides = [1, 1]} : vector<4x64xf32> to vector<1x64xf32>
    %396 = vector.extract_strided_slice %381 {offsets = [0, 2, 0], sizes = [2, 8, 64], strides = [1, 1, 1]} : vector<2x11x64xf32> to vector<2x8x64xf32>
    %397 = vector.shape_cast %395 : vector<1x64xf32> to vector<1x1x64xf32>
    %398 = vector.broadcast %397 : vector<1x1x64xf32> to vector<2x8x64xf32>
    %399 = arith.mulf %398, %396 : vector<2x8x64xf32>
    %400 = arith.addf %394, %399 : vector<2x8x64xf32>
    %401 = vector.extract_strided_slice %377 {offsets = [3, 0], sizes = [1, 64], strides = [1, 1]} : vector<4x64xf32> to vector<1x64xf32>
    %402 = vector.extract_strided_slice %381 {offsets = [0, 3, 0], sizes = [2, 8, 64], strides = [1, 1, 1]} : vector<2x11x64xf32> to vector<2x8x64xf32>
    %403 = vector.shape_cast %401 : vector<1x64xf32> to vector<1x1x64xf32>
    %404 = vector.broadcast %403 : vector<1x1x64xf32> to vector<2x8x64xf32>
    %405 = arith.mulf %404, %402 : vector<2x8x64xf32>
    %406 = arith.addf %400, %405 : vector<2x8x64xf32>
    %407 = vector.shape_cast %379 : vector<1x64xf32> to vector<1x1x64xf32>
    %408 = vector.broadcast %407 : vector<1x1x64xf32> to vector<2x8x64xf32>
    %409 = arith.addf %406, %408 : vector<2x8x64xf32>
    %cst_83 = arith.constant 0.000000e+00 : f32
    %410 = vector.broadcast %cst_83 : f32 to vector<2x8x64xf32>
    %411 = arith.subf %410, %409 : vector<2x8x64xf32>
    %412 = math.exp %411 : vector<2x8x64xf32>
    %cst_84 = arith.constant 1.000000e+00 : f32
    %413 = vector.broadcast %cst_84 : f32 to vector<2x8x64xf32>
    %414 = arith.addf %413, %412 : vector<2x8x64xf32>
    %415 = tpu.reciprocal %414 {approx = true} : vector<2x8x64xf32> -> vector<2x8x64xf32>
    %416 = arith.mulf %409, %415 : vector<2x8x64xf32>
    %417 = vector.shape_cast %416 : vector<2x8x64xf32> to vector<16x64xf32>
    %c1_85 = arith.constant 1 : index
    %c0_86 = arith.constant 0 : index
    %c0_87 = arith.constant 0 : index
    %418 = vector.load %arg6[%c1_85, %c0_86, %c0_87] : memref<2x64x34xf32, #tpu.memory_space<vmem>>, vector<1x64x34xf32>
    %419 = vector.shape_cast %418 : vector<1x64x34xf32> to vector<64x34xf32>
    %cst_88 = arith.constant dense<0.000000e+00> : vector<16x34xf32>
    %420 = tpu.matmul %417, %419, %cst_88 {dimension_numbers = #tpu.dot_dimension_numbers<[1], [0], [0], [1], [0, 0, 1, 1], [], []>} : vector<16x64xf32>, vector<64x34xf32>, vector<16x34xf32> -> vector<16x34xf32>
    %421 = vector.extract_strided_slice %420 {offsets = [0, 0], sizes = [16, 2], strides = [1, 1]} : vector<16x34xf32> to vector<16x2xf32>
    %422 = vector.extract_strided_slice %420 {offsets = [0, 2], sizes = [16, 16], strides = [1, 1]} : vector<16x34xf32> to vector<16x16xf32>
    %423 = vector.shape_cast %422 : vector<16x16xf32> to vector<2x8x16xf32>
    %424 = vector.extract_strided_slice %420 {offsets = [0, 18], sizes = [16, 16], strides = [1, 1]} : vector<16x34xf32> to vector<16x16xf32>
    %425 = vector.shape_cast %424 : vector<16x16xf32> to vector<2x8x16xf32>
    %c1_89 = arith.constant 1 : index
    %c0_90 = arith.constant 0 : index
    %c0_91 = arith.constant 0 : index
    %426 = vector.load %arg7[%c1_89, %c0_90, %c0_91] : memref<2x2x64xf32, #tpu.memory_space<vmem>>, vector<1x2x64xf32>
    %427 = vector.shape_cast %426 : vector<1x2x64xf32> to vector<2x64xf32>
    %cst_92 = arith.constant dense<0.000000e+00> : vector<16x64xf32>
    %428 = tpu.matmul %421, %427, %cst_92 {dimension_numbers = #tpu.dot_dimension_numbers<[1], [0], [0], [1], [0, 0, 1, 1], [], []>} : vector<16x2xf32>, vector<2x64xf32>, vector<16x64xf32> -> vector<16x64xf32>
    %c1_93 = arith.constant 1 : index
    %c0_94 = arith.constant 0 : index
    %c0_95 = arith.constant 0 : index
    %429 = vector.load %arg8[%c1_93, %c0_94, %c0_95] : memref<2x1x64xf32, #tpu.memory_space<vmem>>, vector<1x1x64xf32>
    %430 = vector.shape_cast %429 : vector<1x1x64xf32> to vector<1x64xf32>
    %431 = vector.broadcast %430 : vector<1x64xf32> to vector<16x64xf32>
    %432 = arith.addf %428, %431 : vector<16x64xf32>
    %cst_96 = arith.constant 2.000000e+01 : f32
    %433 = vector.broadcast %cst_96 : f32 to vector<16x64xf32>
    %434 = arith.cmpf ogt, %432, %433 : vector<16x64xf32>
    %435 = math.exp %432 : vector<16x64xf32>
    %cst_97 = arith.constant 1.000000e+00 : f32
    %436 = vector.broadcast %cst_97 : f32 to vector<16x64xf32>
    %437 = arith.addf %436, %435 : vector<16x64xf32>
    %438 = math.log %437 : vector<16x64xf32>
    %439 = arith.select %434, %432, %438 : vector<16x64xi1>, vector<16x64xf32>
    %440 = vector.shape_cast %439 : vector<16x64xf32> to vector<2x8x64xf32>
    %c1_98 = arith.constant 1 : index
    %c0_99 = arith.constant 0 : index
    %c0_100 = arith.constant 0 : index
    %441 = vector.load %arg9[%c1_98, %c0_99, %c0_100] : memref<2x16x64xf32, #tpu.memory_space<vmem>>, vector<1x16x64xf32>
    %442 = vector.shape_cast %441 : vector<1x16x64xf32> to vector<16x64xf32>
    %cst_101 = arith.constant 0.000000e+00 : f32
    %443 = vector.broadcast %cst_101 : f32 to vector<2x16x64xf32>
    %444 = vector.extract_strided_slice %440 {offsets = [0, 0, 0], sizes = [2, 1, 64], strides = [1, 1, 1]} : vector<2x8x64xf32> to vector<2x1x64xf32>
    %445 = vector.shape_cast %444 : vector<2x1x64xf32> to vector<2x64xf32>
    %446 = vector.extract_strided_slice %416 {offsets = [0, 0, 0], sizes = [2, 1, 64], strides = [1, 1, 1]} : vector<2x8x64xf32> to vector<2x1x64xf32>
    %447 = vector.shape_cast %446 : vector<2x1x64xf32> to vector<2x64xf32>
    %448 = vector.shape_cast %445 : vector<2x64xf32> to vector<2x1x64xf32>
    %449 = vector.shape_cast %442 : vector<16x64xf32> to vector<1x16x64xf32>
    %450 = vector.broadcast %448 : vector<2x1x64xf32> to vector<2x16x64xf32>
    %451 = vector.broadcast %449 : vector<1x16x64xf32> to vector<2x16x64xf32>
    %452 = arith.mulf %450, %451 : vector<2x16x64xf32>
    %453 = math.exp %452 : vector<2x16x64xf32>
    %454 = arith.mulf %445, %447 : vector<2x64xf32>
    %455 = vector.shape_cast %454 : vector<2x64xf32> to vector<2x1x64xf32>
    %456 = vector.extract_strided_slice %423 {offsets = [0, 0, 0], sizes = [2, 1, 16], strides = [1, 1, 1]} : vector<2x8x16xf32> to vector<2x1x16xf32>
    %457 = vector.shape_cast %456 : vector<2x1x16xf32> to vector<2x16xf32>
    %458 = vector.shape_cast %457 : vector<2x16xf32> to vector<2x16x1xf32>
    %459 = vector.broadcast %455 : vector<2x1x64xf32> to vector<2x16x64xf32>
    %460 = vector.broadcast %458 : vector<2x16x1xf32> to vector<2x16x64xf32>
    %461 = arith.mulf %459, %460 : vector<2x16x64xf32>
    %462 = arith.mulf %453, %443 : vector<2x16x64xf32>
    %463 = arith.addf %462, %461 : vector<2x16x64xf32>
    %464 = vector.extract_strided_slice %425 {offsets = [0, 0, 0], sizes = [2, 1, 16], strides = [1, 1, 1]} : vector<2x8x16xf32> to vector<2x1x16xf32>
    %465 = vector.shape_cast %464 : vector<2x1x16xf32> to vector<2x16xf32>
    %466 = vector.shape_cast %465 : vector<2x16xf32> to vector<2x16x1xf32>
    %467 = vector.broadcast %466 : vector<2x16x1xf32> to vector<2x16x64xf32>
    %468 = arith.mulf %463, %467 : vector<2x16x64xf32>
    %cst_102 = arith.constant dense<0.000000e+00> : vector<2x64xf32>
    %469 = vector.multi_reduction <add>, %468, %cst_102 [1] : vector<2x16x64xf32> to vector<2x64xf32>
    %470 = vector.extract_strided_slice %440 {offsets = [0, 1, 0], sizes = [2, 1, 64], strides = [1, 1, 1]} : vector<2x8x64xf32> to vector<2x1x64xf32>
    %471 = vector.shape_cast %470 : vector<2x1x64xf32> to vector<2x64xf32>
    %472 = vector.extract_strided_slice %416 {offsets = [0, 1, 0], sizes = [2, 1, 64], strides = [1, 1, 1]} : vector<2x8x64xf32> to vector<2x1x64xf32>
    %473 = vector.shape_cast %472 : vector<2x1x64xf32> to vector<2x64xf32>
    %474 = vector.shape_cast %471 : vector<2x64xf32> to vector<2x1x64xf32>
    %475 = vector.shape_cast %442 : vector<16x64xf32> to vector<1x16x64xf32>
    %476 = vector.broadcast %474 : vector<2x1x64xf32> to vector<2x16x64xf32>
    %477 = vector.broadcast %475 : vector<1x16x64xf32> to vector<2x16x64xf32>
    %478 = arith.mulf %476, %477 : vector<2x16x64xf32>
    %479 = math.exp %478 : vector<2x16x64xf32>
    %480 = arith.mulf %471, %473 : vector<2x64xf32>
    %481 = vector.shape_cast %480 : vector<2x64xf32> to vector<2x1x64xf32>
    %482 = vector.extract_strided_slice %423 {offsets = [0, 1, 0], sizes = [2, 1, 16], strides = [1, 1, 1]} : vector<2x8x16xf32> to vector<2x1x16xf32>
    %483 = vector.shape_cast %482 : vector<2x1x16xf32> to vector<2x16xf32>
    %484 = vector.shape_cast %483 : vector<2x16xf32> to vector<2x16x1xf32>
    %485 = vector.broadcast %481 : vector<2x1x64xf32> to vector<2x16x64xf32>
    %486 = vector.broadcast %484 : vector<2x16x1xf32> to vector<2x16x64xf32>
    %487 = arith.mulf %485, %486 : vector<2x16x64xf32>
    %488 = arith.mulf %479, %463 : vector<2x16x64xf32>
    %489 = arith.addf %488, %487 : vector<2x16x64xf32>
    %490 = vector.extract_strided_slice %425 {offsets = [0, 1, 0], sizes = [2, 1, 16], strides = [1, 1, 1]} : vector<2x8x16xf32> to vector<2x1x16xf32>
    %491 = vector.shape_cast %490 : vector<2x1x16xf32> to vector<2x16xf32>
    %492 = vector.shape_cast %491 : vector<2x16xf32> to vector<2x16x1xf32>
    %493 = vector.broadcast %492 : vector<2x16x1xf32> to vector<2x16x64xf32>
    %494 = arith.mulf %489, %493 : vector<2x16x64xf32>
    %cst_103 = arith.constant dense<0.000000e+00> : vector<2x64xf32>
    %495 = vector.multi_reduction <add>, %494, %cst_103 [1] : vector<2x16x64xf32> to vector<2x64xf32>
    %496 = vector.extract_strided_slice %440 {offsets = [0, 2, 0], sizes = [2, 1, 64], strides = [1, 1, 1]} : vector<2x8x64xf32> to vector<2x1x64xf32>
    %497 = vector.shape_cast %496 : vector<2x1x64xf32> to vector<2x64xf32>
    %498 = vector.extract_strided_slice %416 {offsets = [0, 2, 0], sizes = [2, 1, 64], strides = [1, 1, 1]} : vector<2x8x64xf32> to vector<2x1x64xf32>
    %499 = vector.shape_cast %498 : vector<2x1x64xf32> to vector<2x64xf32>
    %500 = vector.shape_cast %497 : vector<2x64xf32> to vector<2x1x64xf32>
    %501 = vector.shape_cast %442 : vector<16x64xf32> to vector<1x16x64xf32>
    %502 = vector.broadcast %500 : vector<2x1x64xf32> to vector<2x16x64xf32>
    %503 = vector.broadcast %501 : vector<1x16x64xf32> to vector<2x16x64xf32>
    %504 = arith.mulf %502, %503 : vector<2x16x64xf32>
    %505 = math.exp %504 : vector<2x16x64xf32>
    %506 = arith.mulf %497, %499 : vector<2x64xf32>
    %507 = vector.shape_cast %506 : vector<2x64xf32> to vector<2x1x64xf32>
    %508 = vector.extract_strided_slice %423 {offsets = [0, 2, 0], sizes = [2, 1, 16], strides = [1, 1, 1]} : vector<2x8x16xf32> to vector<2x1x16xf32>
    %509 = vector.shape_cast %508 : vector<2x1x16xf32> to vector<2x16xf32>
    %510 = vector.shape_cast %509 : vector<2x16xf32> to vector<2x16x1xf32>
    %511 = vector.broadcast %507 : vector<2x1x64xf32> to vector<2x16x64xf32>
    %512 = vector.broadcast %510 : vector<2x16x1xf32> to vector<2x16x64xf32>
    %513 = arith.mulf %511, %512 : vector<2x16x64xf32>
    %514 = arith.mulf %505, %489 : vector<2x16x64xf32>
    %515 = arith.addf %514, %513 : vector<2x16x64xf32>
    %516 = vector.extract_strided_slice %425 {offsets = [0, 2, 0], sizes = [2, 1, 16], strides = [1, 1, 1]} : vector<2x8x16xf32> to vector<2x1x16xf32>
    %517 = vector.shape_cast %516 : vector<2x1x16xf32> to vector<2x16xf32>
    %518 = vector.shape_cast %517 : vector<2x16xf32> to vector<2x16x1xf32>
    %519 = vector.broadcast %518 : vector<2x16x1xf32> to vector<2x16x64xf32>
    %520 = arith.mulf %515, %519 : vector<2x16x64xf32>
    %cst_104 = arith.constant dense<0.000000e+00> : vector<2x64xf32>
    %521 = vector.multi_reduction <add>, %520, %cst_104 [1] : vector<2x16x64xf32> to vector<2x64xf32>
    %522 = vector.extract_strided_slice %440 {offsets = [0, 3, 0], sizes = [2, 1, 64], strides = [1, 1, 1]} : vector<2x8x64xf32> to vector<2x1x64xf32>
    %523 = vector.shape_cast %522 : vector<2x1x64xf32> to vector<2x64xf32>
    %524 = vector.extract_strided_slice %416 {offsets = [0, 3, 0], sizes = [2, 1, 64], strides = [1, 1, 1]} : vector<2x8x64xf32> to vector<2x1x64xf32>
    %525 = vector.shape_cast %524 : vector<2x1x64xf32> to vector<2x64xf32>
    %526 = vector.shape_cast %523 : vector<2x64xf32> to vector<2x1x64xf32>
    %527 = vector.shape_cast %442 : vector<16x64xf32> to vector<1x16x64xf32>
    %528 = vector.broadcast %526 : vector<2x1x64xf32> to vector<2x16x64xf32>
    %529 = vector.broadcast %527 : vector<1x16x64xf32> to vector<2x16x64xf32>
    %530 = arith.mulf %528, %529 : vector<2x16x64xf32>
    %531 = math.exp %530 : vector<2x16x64xf32>
    %532 = arith.mulf %523, %525 : vector<2x64xf32>
    %533 = vector.shape_cast %532 : vector<2x64xf32> to vector<2x1x64xf32>
    %534 = vector.extract_strided_slice %423 {offsets = [0, 3, 0], sizes = [2, 1, 16], strides = [1, 1, 1]} : vector<2x8x16xf32> to vector<2x1x16xf32>
    %535 = vector.shape_cast %534 : vector<2x1x16xf32> to vector<2x16xf32>
    %536 = vector.shape_cast %535 : vector<2x16xf32> to vector<2x16x1xf32>
    %537 = vector.broadcast %533 : vector<2x1x64xf32> to vector<2x16x64xf32>
    %538 = vector.broadcast %536 : vector<2x16x1xf32> to vector<2x16x64xf32>
    %539 = arith.mulf %537, %538 : vector<2x16x64xf32>
    %540 = arith.mulf %531, %515 : vector<2x16x64xf32>
    %541 = arith.addf %540, %539 : vector<2x16x64xf32>
    %542 = vector.extract_strided_slice %425 {offsets = [0, 3, 0], sizes = [2, 1, 16], strides = [1, 1, 1]} : vector<2x8x16xf32> to vector<2x1x16xf32>
    %543 = vector.shape_cast %542 : vector<2x1x16xf32> to vector<2x16xf32>
    %544 = vector.shape_cast %543 : vector<2x16xf32> to vector<2x16x1xf32>
    %545 = vector.broadcast %544 : vector<2x16x1xf32> to vector<2x16x64xf32>
    %546 = arith.mulf %541, %545 : vector<2x16x64xf32>
    %cst_105 = arith.constant dense<0.000000e+00> : vector<2x64xf32>
    %547 = vector.multi_reduction <add>, %546, %cst_105 [1] : vector<2x16x64xf32> to vector<2x64xf32>
    %548 = vector.extract_strided_slice %440 {offsets = [0, 4, 0], sizes = [2, 1, 64], strides = [1, 1, 1]} : vector<2x8x64xf32> to vector<2x1x64xf32>
    %549 = vector.shape_cast %548 : vector<2x1x64xf32> to vector<2x64xf32>
    %550 = vector.extract_strided_slice %416 {offsets = [0, 4, 0], sizes = [2, 1, 64], strides = [1, 1, 1]} : vector<2x8x64xf32> to vector<2x1x64xf32>
    %551 = vector.shape_cast %550 : vector<2x1x64xf32> to vector<2x64xf32>
    %552 = vector.shape_cast %549 : vector<2x64xf32> to vector<2x1x64xf32>
    %553 = vector.shape_cast %442 : vector<16x64xf32> to vector<1x16x64xf32>
    %554 = vector.broadcast %552 : vector<2x1x64xf32> to vector<2x16x64xf32>
    %555 = vector.broadcast %553 : vector<1x16x64xf32> to vector<2x16x64xf32>
    %556 = arith.mulf %554, %555 : vector<2x16x64xf32>
    %557 = math.exp %556 : vector<2x16x64xf32>
    %558 = arith.mulf %549, %551 : vector<2x64xf32>
    %559 = vector.shape_cast %558 : vector<2x64xf32> to vector<2x1x64xf32>
    %560 = vector.extract_strided_slice %423 {offsets = [0, 4, 0], sizes = [2, 1, 16], strides = [1, 1, 1]} : vector<2x8x16xf32> to vector<2x1x16xf32>
    %561 = vector.shape_cast %560 : vector<2x1x16xf32> to vector<2x16xf32>
    %562 = vector.shape_cast %561 : vector<2x16xf32> to vector<2x16x1xf32>
    %563 = vector.broadcast %559 : vector<2x1x64xf32> to vector<2x16x64xf32>
    %564 = vector.broadcast %562 : vector<2x16x1xf32> to vector<2x16x64xf32>
    %565 = arith.mulf %563, %564 : vector<2x16x64xf32>
    %566 = arith.mulf %557, %541 : vector<2x16x64xf32>
    %567 = arith.addf %566, %565 : vector<2x16x64xf32>
    %568 = vector.extract_strided_slice %425 {offsets = [0, 4, 0], sizes = [2, 1, 16], strides = [1, 1, 1]} : vector<2x8x16xf32> to vector<2x1x16xf32>
    %569 = vector.shape_cast %568 : vector<2x1x16xf32> to vector<2x16xf32>
    %570 = vector.shape_cast %569 : vector<2x16xf32> to vector<2x16x1xf32>
    %571 = vector.broadcast %570 : vector<2x16x1xf32> to vector<2x16x64xf32>
    %572 = arith.mulf %567, %571 : vector<2x16x64xf32>
    %cst_106 = arith.constant dense<0.000000e+00> : vector<2x64xf32>
    %573 = vector.multi_reduction <add>, %572, %cst_106 [1] : vector<2x16x64xf32> to vector<2x64xf32>
    %574 = vector.extract_strided_slice %440 {offsets = [0, 5, 0], sizes = [2, 1, 64], strides = [1, 1, 1]} : vector<2x8x64xf32> to vector<2x1x64xf32>
    %575 = vector.shape_cast %574 : vector<2x1x64xf32> to vector<2x64xf32>
    %576 = vector.extract_strided_slice %416 {offsets = [0, 5, 0], sizes = [2, 1, 64], strides = [1, 1, 1]} : vector<2x8x64xf32> to vector<2x1x64xf32>
    %577 = vector.shape_cast %576 : vector<2x1x64xf32> to vector<2x64xf32>
    %578 = vector.shape_cast %575 : vector<2x64xf32> to vector<2x1x64xf32>
    %579 = vector.shape_cast %442 : vector<16x64xf32> to vector<1x16x64xf32>
    %580 = vector.broadcast %578 : vector<2x1x64xf32> to vector<2x16x64xf32>
    %581 = vector.broadcast %579 : vector<1x16x64xf32> to vector<2x16x64xf32>
    %582 = arith.mulf %580, %581 : vector<2x16x64xf32>
    %583 = math.exp %582 : vector<2x16x64xf32>
    %584 = arith.mulf %575, %577 : vector<2x64xf32>
    %585 = vector.shape_cast %584 : vector<2x64xf32> to vector<2x1x64xf32>
    %586 = vector.extract_strided_slice %423 {offsets = [0, 5, 0], sizes = [2, 1, 16], strides = [1, 1, 1]} : vector<2x8x16xf32> to vector<2x1x16xf32>
    %587 = vector.shape_cast %586 : vector<2x1x16xf32> to vector<2x16xf32>
    %588 = vector.shape_cast %587 : vector<2x16xf32> to vector<2x16x1xf32>
    %589 = vector.broadcast %585 : vector<2x1x64xf32> to vector<2x16x64xf32>
    %590 = vector.broadcast %588 : vector<2x16x1xf32> to vector<2x16x64xf32>
    %591 = arith.mulf %589, %590 : vector<2x16x64xf32>
    %592 = arith.mulf %583, %567 : vector<2x16x64xf32>
    %593 = arith.addf %592, %591 : vector<2x16x64xf32>
    %594 = vector.extract_strided_slice %425 {offsets = [0, 5, 0], sizes = [2, 1, 16], strides = [1, 1, 1]} : vector<2x8x16xf32> to vector<2x1x16xf32>
    %595 = vector.shape_cast %594 : vector<2x1x16xf32> to vector<2x16xf32>
    %596 = vector.shape_cast %595 : vector<2x16xf32> to vector<2x16x1xf32>
    %597 = vector.broadcast %596 : vector<2x16x1xf32> to vector<2x16x64xf32>
    %598 = arith.mulf %593, %597 : vector<2x16x64xf32>
    %cst_107 = arith.constant dense<0.000000e+00> : vector<2x64xf32>
    %599 = vector.multi_reduction <add>, %598, %cst_107 [1] : vector<2x16x64xf32> to vector<2x64xf32>
    %600 = vector.extract_strided_slice %440 {offsets = [0, 6, 0], sizes = [2, 1, 64], strides = [1, 1, 1]} : vector<2x8x64xf32> to vector<2x1x64xf32>
    %601 = vector.shape_cast %600 : vector<2x1x64xf32> to vector<2x64xf32>
    %602 = vector.extract_strided_slice %416 {offsets = [0, 6, 0], sizes = [2, 1, 64], strides = [1, 1, 1]} : vector<2x8x64xf32> to vector<2x1x64xf32>
    %603 = vector.shape_cast %602 : vector<2x1x64xf32> to vector<2x64xf32>
    %604 = vector.shape_cast %601 : vector<2x64xf32> to vector<2x1x64xf32>
    %605 = vector.shape_cast %442 : vector<16x64xf32> to vector<1x16x64xf32>
    %606 = vector.broadcast %604 : vector<2x1x64xf32> to vector<2x16x64xf32>
    %607 = vector.broadcast %605 : vector<1x16x64xf32> to vector<2x16x64xf32>
    %608 = arith.mulf %606, %607 : vector<2x16x64xf32>
    %609 = math.exp %608 : vector<2x16x64xf32>
    %610 = arith.mulf %601, %603 : vector<2x64xf32>
    %611 = vector.shape_cast %610 : vector<2x64xf32> to vector<2x1x64xf32>
    %612 = vector.extract_strided_slice %423 {offsets = [0, 6, 0], sizes = [2, 1, 16], strides = [1, 1, 1]} : vector<2x8x16xf32> to vector<2x1x16xf32>
    %613 = vector.shape_cast %612 : vector<2x1x16xf32> to vector<2x16xf32>
    %614 = vector.shape_cast %613 : vector<2x16xf32> to vector<2x16x1xf32>
    %615 = vector.broadcast %611 : vector<2x1x64xf32> to vector<2x16x64xf32>
    %616 = vector.broadcast %614 : vector<2x16x1xf32> to vector<2x16x64xf32>
    %617 = arith.mulf %615, %616 : vector<2x16x64xf32>
    %618 = arith.mulf %609, %593 : vector<2x16x64xf32>
    %619 = arith.addf %618, %617 : vector<2x16x64xf32>
    %620 = vector.extract_strided_slice %425 {offsets = [0, 6, 0], sizes = [2, 1, 16], strides = [1, 1, 1]} : vector<2x8x16xf32> to vector<2x1x16xf32>
    %621 = vector.shape_cast %620 : vector<2x1x16xf32> to vector<2x16xf32>
    %622 = vector.shape_cast %621 : vector<2x16xf32> to vector<2x16x1xf32>
    %623 = vector.broadcast %622 : vector<2x16x1xf32> to vector<2x16x64xf32>
    %624 = arith.mulf %619, %623 : vector<2x16x64xf32>
    %cst_108 = arith.constant dense<0.000000e+00> : vector<2x64xf32>
    %625 = vector.multi_reduction <add>, %624, %cst_108 [1] : vector<2x16x64xf32> to vector<2x64xf32>
    %626 = vector.extract_strided_slice %440 {offsets = [0, 7, 0], sizes = [2, 1, 64], strides = [1, 1, 1]} : vector<2x8x64xf32> to vector<2x1x64xf32>
    %627 = vector.shape_cast %626 : vector<2x1x64xf32> to vector<2x64xf32>
    %628 = vector.extract_strided_slice %416 {offsets = [0, 7, 0], sizes = [2, 1, 64], strides = [1, 1, 1]} : vector<2x8x64xf32> to vector<2x1x64xf32>
    %629 = vector.shape_cast %628 : vector<2x1x64xf32> to vector<2x64xf32>
    %630 = vector.shape_cast %627 : vector<2x64xf32> to vector<2x1x64xf32>
    %631 = vector.shape_cast %442 : vector<16x64xf32> to vector<1x16x64xf32>
    %632 = vector.broadcast %630 : vector<2x1x64xf32> to vector<2x16x64xf32>
    %633 = vector.broadcast %631 : vector<1x16x64xf32> to vector<2x16x64xf32>
    %634 = arith.mulf %632, %633 : vector<2x16x64xf32>
    %635 = math.exp %634 : vector<2x16x64xf32>
    %636 = arith.mulf %627, %629 : vector<2x64xf32>
    %637 = vector.shape_cast %636 : vector<2x64xf32> to vector<2x1x64xf32>
    %638 = vector.extract_strided_slice %423 {offsets = [0, 7, 0], sizes = [2, 1, 16], strides = [1, 1, 1]} : vector<2x8x16xf32> to vector<2x1x16xf32>
    %639 = vector.shape_cast %638 : vector<2x1x16xf32> to vector<2x16xf32>
    %640 = vector.shape_cast %639 : vector<2x16xf32> to vector<2x16x1xf32>
    %641 = vector.broadcast %637 : vector<2x1x64xf32> to vector<2x16x64xf32>
    %642 = vector.broadcast %640 : vector<2x16x1xf32> to vector<2x16x64xf32>
    %643 = arith.mulf %641, %642 : vector<2x16x64xf32>
    %644 = arith.mulf %635, %619 : vector<2x16x64xf32>
    %645 = arith.addf %644, %643 : vector<2x16x64xf32>
    %646 = vector.extract_strided_slice %425 {offsets = [0, 7, 0], sizes = [2, 1, 16], strides = [1, 1, 1]} : vector<2x8x16xf32> to vector<2x1x16xf32>
    %647 = vector.shape_cast %646 : vector<2x1x16xf32> to vector<2x16xf32>
    %648 = vector.shape_cast %647 : vector<2x16xf32> to vector<2x16x1xf32>
    %649 = vector.broadcast %648 : vector<2x16x1xf32> to vector<2x16x64xf32>
    %650 = arith.mulf %645, %649 : vector<2x16x64xf32>
    %cst_109 = arith.constant dense<0.000000e+00> : vector<2x64xf32>
    %651 = vector.multi_reduction <add>, %650, %cst_109 [1] : vector<2x16x64xf32> to vector<2x64xf32>
    %652 = vector.shape_cast %469 : vector<2x64xf32> to vector<2x1x64xf32>
    %653 = vector.shape_cast %495 : vector<2x64xf32> to vector<2x1x64xf32>
    %654 = vector.shape_cast %521 : vector<2x64xf32> to vector<2x1x64xf32>
    %655 = vector.shape_cast %547 : vector<2x64xf32> to vector<2x1x64xf32>
    %656 = vector.shape_cast %573 : vector<2x64xf32> to vector<2x1x64xf32>
    %657 = vector.shape_cast %599 : vector<2x64xf32> to vector<2x1x64xf32>
    %658 = vector.shape_cast %625 : vector<2x64xf32> to vector<2x1x64xf32>
    %659 = vector.shape_cast %651 : vector<2x64xf32> to vector<2x1x64xf32>
    %660 = tpu.concatenate %652, %653, %654, %655, %656, %657, %658, %659 in 1 : vector<2x1x64xf32>, vector<2x1x64xf32>, vector<2x1x64xf32>, vector<2x1x64xf32>, vector<2x1x64xf32>, vector<2x1x64xf32>, vector<2x1x64xf32>, vector<2x1x64xf32> -> vector<2x8x64xf32>
    %c1_110 = arith.constant 1 : index
    %c0_111 = arith.constant 0 : index
    %c0_112 = arith.constant 0 : index
    %661 = vector.load %arg10[%c1_110, %c0_111, %c0_112] : memref<2x1x64xf32, #tpu.memory_space<vmem>>, vector<1x1x64xf32>
    %662 = vector.shape_cast %661 : vector<1x1x64xf32> to vector<1x64xf32>
    %663 = vector.shape_cast %662 : vector<1x64xf32> to vector<1x1x64xf32>
    %664 = vector.broadcast %663 : vector<1x1x64xf32> to vector<2x8x64xf32>
    %665 = arith.mulf %416, %664 : vector<2x8x64xf32>
    %666 = arith.addf %660, %665 : vector<2x8x64xf32>
    %cst_113 = arith.constant 0.000000e+00 : f32
    %667 = vector.broadcast %cst_113 : f32 to vector<2x8x64xf32>
    %668 = arith.subf %667, %375 : vector<2x8x64xf32>
    %669 = math.exp %668 : vector<2x8x64xf32>
    %cst_114 = arith.constant 1.000000e+00 : f32
    %670 = vector.broadcast %cst_114 : f32 to vector<2x8x64xf32>
    %671 = arith.addf %670, %669 : vector<2x8x64xf32>
    %672 = tpu.reciprocal %671 {approx = true} : vector<2x8x64xf32> -> vector<2x8x64xf32>
    %673 = arith.mulf %375, %672 : vector<2x8x64xf32>
    %674 = arith.mulf %666, %673 : vector<2x8x64xf32>
    %675 = vector.shape_cast %674 : vector<2x8x64xf32> to vector<16x64xf32>
    %c1_115 = arith.constant 1 : index
    %c0_116 = arith.constant 0 : index
    %c0_117 = arith.constant 0 : index
    %676 = vector.load %arg11[%c1_115, %c0_116, %c0_117] : memref<2x64x32xf32, #tpu.memory_space<vmem>>, vector<1x64x32xf32>
    %677 = vector.shape_cast %676 : vector<1x64x32xf32> to vector<64x32xf32>
    %cst_118 = arith.constant dense<0.000000e+00> : vector<16x32xf32>
    %678 = tpu.matmul %675, %677, %cst_118 {dimension_numbers = #tpu.dot_dimension_numbers<[1], [0], [0], [1], [0, 0, 1, 1], [], []>} : vector<16x64xf32>, vector<64x32xf32>, vector<16x32xf32> -> vector<16x32xf32>
    %679 = vector.shape_cast %678 : vector<16x32xf32> to vector<2x8x32xf32>
    %680 = arith.addf %679, %341 : vector<2x8x32xf32>
    %c0_119 = arith.constant 0 : index
    %c0_120 = arith.constant 0 : index
    %681 = vector.load %arg12[%c0_119, %c0_120] : memref<1x32xf32, #tpu.memory_space<vmem>>, vector<1x32xf32>
    %c0_121 = arith.constant 0 : index
    %c0_122 = arith.constant 0 : index
    %682 = vector.load %arg13[%c0_121, %c0_122] : memref<1x32xf32, #tpu.memory_space<vmem>>, vector<1x32xf32>
    %cst_123 = arith.constant dense<0.000000e+00> : vector<2x8xf32>
    %683 = vector.multi_reduction <add>, %680, %cst_123 [2] : vector<2x8x32xf32> to vector<2x8xf32>
    %684 = vector.shape_cast %683 : vector<2x8xf32> to vector<2x8x1xf32>
    %cst_124 = arith.constant 3.200000e+01 : f32
    %685 = vector.broadcast %cst_124 : f32 to vector<2x8x1xf32>
    %686 = arith.divf %684, %685 : vector<2x8x1xf32>
    %687 = vector.broadcast %686 : vector<2x8x1xf32> to vector<2x8x32xf32>
    %688 = arith.subf %680, %687 : vector<2x8x32xf32>
    %689 = arith.mulf %688, %688 : vector<2x8x32xf32>
    %cst_125 = arith.constant dense<0.000000e+00> : vector<2x8xf32>
    %690 = vector.multi_reduction <add>, %689, %cst_125 [2] : vector<2x8x32xf32> to vector<2x8xf32>
    %691 = vector.shape_cast %690 : vector<2x8xf32> to vector<2x8x1xf32>
    %cst_126 = arith.constant 3.200000e+01 : f32
    %692 = vector.broadcast %cst_126 : f32 to vector<2x8x1xf32>
    %693 = arith.divf %691, %692 : vector<2x8x1xf32>
    %cst_127 = arith.constant 9.99999974E-6 : f32
    %694 = vector.broadcast %cst_127 : f32 to vector<2x8x1xf32>
    %695 = arith.addf %693, %694 : vector<2x8x1xf32>
    %696 = math.rsqrt %695 : vector<2x8x1xf32>
    %697 = vector.broadcast %696 : vector<2x8x1xf32> to vector<2x8x32xf32>
    %698 = arith.mulf %688, %697 : vector<2x8x32xf32>
    %699 = vector.shape_cast %681 : vector<1x32xf32> to vector<1x1x32xf32>
    %700 = vector.broadcast %699 : vector<1x1x32xf32> to vector<2x8x32xf32>
    %701 = arith.mulf %698, %700 : vector<2x8x32xf32>
    %702 = vector.shape_cast %682 : vector<1x32xf32> to vector<1x1x32xf32>
    %703 = vector.broadcast %702 : vector<1x1x32xf32> to vector<2x8x32xf32>
    %704 = arith.addf %701, %703 : vector<2x8x32xf32>
    %c0_128 = arith.constant 0 : index
    %c0_129 = arith.constant 0 : index
    %c0_130 = arith.constant 0 : index
    %705 = vector.load %arg14[%c0_128, %c0_129, %c0_130] : memref<2x8x32xf32, #tpu.memory_space<vmem>>, vector<2x8x32xf32>
    tpu.vector_store %arg14[%c0_128, %c0_129, %c0_130], %704 {strides = array<i32>} : memref<2x8x32xf32, #tpu.memory_space<vmem>>, vector<2x8x32xf32>,
    return
  }
}

</mosaic_0001>

<llo_original>
// kernel: tpu_custom_call.1
$region0: #{tpu_custom_call.1}
  #allocation0 [shape = 'u32[]', space=smem, size = 0x4, offset = 0x4, fixed_abs, tag = 'smem constant byte address 0x4 - core index']
  #allocation1 [shape = 'u32[144,128]{1,0:T(1,128)}', space=vmem, size = 0x12000, scoped, tag = 'internal scratch']
  %s0 = inlined_call_operand.vmem [shape: f32[2,8,32], index: 0, kind: input, shape index: {}]
  %s1 = inlined_call_operand.vmem [shape: f32[2,1,32], index: 1, kind: input, shape index: {}]
  %s2 = inlined_call_operand.vmem [shape: f32[2,1,32], index: 2, kind: input, shape index: {}]
  %s3 = inlined_call_operand.vmem [shape: f32[2,32,128], index: 3, kind: input, shape index: {}]
  %s4 = inlined_call_operand.vmem [shape: f32[2,4,64], index: 4, kind: input, shape index: {}]
  %s5 = inlined_call_operand.vmem [shape: f32[2,1,64], index: 5, kind: input, shape index: {}]
  %s6 = inlined_call_operand.vmem [shape: f32[2,64,34], index: 6, kind: input, shape index: {}]
  %s7 = inlined_call_operand.vmem [shape: f32[2,2,64], index: 7, kind: input, shape index: {}]
  %s8 = inlined_call_operand.vmem [shape: f32[2,1,64], index: 8, kind: input, shape index: {}]
  %s9 = inlined_call_operand.vmem [shape: f32[2,16,64], index: 9, kind: input, shape index: {}]
  %s10 = inlined_call_operand.vmem [shape: f32[2,1,64], index: 10, kind: input, shape index: {}]
  %s11 = inlined_call_operand.vmem [shape: f32[2,64,32], index: 11, kind: input, shape index: {}]
  %s12 = inlined_call_operand.vmem [shape: f32[1,32], index: 12, kind: input, shape index: {}]
  %s13 = inlined_call_operand.vmem [shape: f32[1,32], index: 13, kind: input, shape index: {}]
  %s14 = inlined_call_operand.hbm [shape: f32[2,8,32], index: 14, kind: output, shape index: {}]
  %s15 = sld [smem:[#allocation0]]
  $region66: #{tpu_custom_call.1} parent=0
    _
  %s17 = ssub.s32 1, %s15
  %s18 = scalar_select 0, %s17, %s15
  $region1: #{tpu_custom_call.1} parent=0
    #allocation2 [shape = 'u8[8192]{0}', space=vmem, size = 0x2000, scoped, tag = 'output window, operand 0, single buffered']
    #allocation3 [shape = 's32[1]{0}', space=sflag, size = 0x4, scoped, tag = 'scoped memory for tpu_custom_call.1']
    %19 = vsyncpa [#allocation3], 0
    // Predicated region
    $region2: #{tpu_custom_call.1} parent=1 // pred_check
      _
    $region3: #{tpu_custom_call.1} parent=1 // pred_check_branch
      %21 = sbr.rel (0) target = $region5
    $region4: #{tpu_custom_call.1} parent=1 // pred_region
      _
    $region5: #{tpu_custom_call.1} parent=1 // pred_fallthru
      _
    // Predicated region
    $region6: #{tpu_custom_call.1} parent=1 // pred_check
      _
    $region7: #{tpu_custom_call.1} parent=1 // pred_check_branch
      %23 = sbr.rel (0) target = $region9
    $region8: #{tpu_custom_call.1} parent=1 // pred_region
      _
    $region9: #{tpu_custom_call.1} parent=1 // pred_fallthru
      _
    // Predicated region
    $region10: #{tpu_custom_call.1} parent=1 // pred_check
      _
    $region11: #{tpu_custom_call.1} parent=1 // pred_check_branch
      %25 = sbr.rel (0) target = $region13
    $region12: #{tpu_custom_call.1} parent=1 // pred_region
      _
    $region13: #{tpu_custom_call.1} parent=1 // pred_fallthru
      _
    // Predicated region
    $region14: #{tpu_custom_call.1} parent=1 // pred_check
      _
    $region15: #{tpu_custom_call.1} parent=1 // pred_check_branch
      %27 = sbr.rel (0) target = $region17
    $region16: #{tpu_custom_call.1} parent=1 // pred_region
      _
    $region17: #{tpu_custom_call.1} parent=1 // pred_fallthru
      _
    // Predicated region
    $region18: #{tpu_custom_call.1} parent=1 // pred_check
      _
    $region19: #{tpu_custom_call.1} parent=1 // pred_check_branch
      %29 = sbr.rel (0) target = $region21
    $region20: #{tpu_custom_call.1} parent=1 // pred_region
      _
    $region21: #{tpu_custom_call.1} parent=1 // pred_fallthru
      _
    // Predicated region
    $region22: #{tpu_custom_call.1} parent=1 // pred_check
      _
    $region23: #{tpu_custom_call.1} parent=1 // pred_check_branch
      %31 = sbr.rel (0) target = $region25
    $region24: #{tpu_custom_call.1} parent=1 // pred_region
      _
    $region25: #{tpu_custom_call.1} parent=1 // pred_fallthru
      _
    // Predicated region
    $region26: #{tpu_custom_call.1} parent=1 // pred_check
      _
    $region27: #{tpu_custom_call.1} parent=1 // pred_check_branch
      %33 = sbr.rel (0) target = $region29
    $region28: #{tpu_custom_call.1} parent=1 // pred_region
      _
    $region29: #{tpu_custom_call.1} parent=1 // pred_fallthru
      _
    // Predicated region
    $region30: #{tpu_custom_call.1} parent=1 // pred_check
      _
    $region31: #{tpu_custom_call.1} parent=1 // pred_check_branch
      %35 = sbr.rel (0) target = $region33
    $region32: #{tpu_custom_call.1} parent=1 // pred_region
      _
    $region33: #{tpu_custom_call.1} parent=1 // pred_fallthru
      _
    // Predicated region
    $region34: #{tpu_custom_call.1} parent=1 // pred_check
      _
    $region35: #{tpu_custom_call.1} parent=1 // pred_check_branch
      %37 = sbr.rel (0) target = $region37
    $region36: #{tpu_custom_call.1} parent=1 // pred_region
      _
    $region37: #{tpu_custom_call.1} parent=1 // pred_fallthru
      _
    // Predicated region
    $region38: #{tpu_custom_call.1} parent=1 // pred_check
      _
    $region39: #{tpu_custom_call.1} parent=1 // pred_check_branch
      %39 = sbr.rel (0) target = $region41
    $region40: #{tpu_custom_call.1} parent=1 // pred_region
      _
    $region41: #{tpu_custom_call.1} parent=1 // pred_fallthru
      _
    // Predicated region
    $region42: #{tpu_custom_call.1} parent=1 // pred_check
      _
    $region43: #{tpu_custom_call.1} parent=1 // pred_check_branch
      %41 = sbr.rel (0) target = $region45
    $region44: #{tpu_custom_call.1} parent=1 // pred_region
      _
    $region45: #{tpu_custom_call.1} parent=1 // pred_fallthru
      _
    // Predicated region
    $region46: #{tpu_custom_call.1} parent=1 // pred_check
      _
    $region47: #{tpu_custom_call.1} parent=1 // pred_check_branch
      %43 = sbr.rel (0) target = $region49
    $region48: #{tpu_custom_call.1} parent=1 // pred_region
      _
    $region49: #{tpu_custom_call.1} parent=1 // pred_fallthru
      _
    // Predicated region
    $region50: #{tpu_custom_call.1} parent=1 // pred_check
      _
    $region51: #{tpu_custom_call.1} parent=1 // pred_check_branch
      %45 = sbr.rel (0) target = $region53
    $region52: #{tpu_custom_call.1} parent=1 // pred_region
      _
    $region53: #{tpu_custom_call.1} parent=1 // pred_fallthru
      _
    // Predicated region
    $region54: #{tpu_custom_call.1} parent=1 // pred_check
      _
    $region55: #{tpu_custom_call.1} parent=1 // pred_check_branch
      %47 = sbr.rel (0) target = $region57
    $region56: #{tpu_custom_call.1} parent=1 // pred_region
      _
    $region57: #{tpu_custom_call.1} parent=1 // pred_fallthru
      _
    %v48 = vld [vmem:[%s0] sm:$0xff]
    %v49 = vld [vmem:[%s0 + $0x8] sm:$0xff]
    %v50 = vadd.f32 %v48, 0.0
    %v51 = vadd.f32 %v49, 0.0
    %v52 = vld [vmem:[%s1] sm:$0x1]
    %v53 = vld [vmem:[%s2] sm:$0x1]
    %vm54 = vcmask 261120
    %v55 = vsel %vm54, %v50, 0.0
    %56 = vadd.xlane.f32.xlu0 %v55
    %v57 = vpop.xlane.xlu0 %56
    %v58 = vsel %vm54, %v51, 0.0
    %59 = vadd.xlane.f32.xlu0 %v58
    %v60 = vpop.xlane.xlu0 %59
    %v61 = vrcp.pop 32.0
    %v62 = vmul.f32 %v57, %v61
    %v63 = vmul.f32 %v60, %v61
    %v64 = vsub.f32 %v50, %v62
    %v65 = vsub.f32 %v51, %v63
    %v66 = vmul.f32 %v64, %v64
    %v67 = vmul.f32 %v65, %v65
    %v68 = vsel %vm54, %v66, 0.0
    %69 = vadd.xlane.f32.xlu0 %v68
    %v70 = vpop.xlane.xlu0 %69
    %v71 = vsel %vm54, %v67, 0.0
    %72 = vadd.xlane.f32.xlu0 %v71
    %v73 = vpop.xlane.xlu0 %72
    %v74 = vmul.f32 %v70, %v61
    %v75 = vmul.f32 %v73, %v61
    %v76 = vadd.f32 %v74, 1e-05
    %v77 = vadd.f32 %v75, 1e-05
    %v78 = vrsqrt.pop %v76
    %v79 = vrsqrt.pop %v77
    %v80 = vmul.f32 %v64, %v78
    %v81 = vmul.f32 %v65, %v79
    %v83 = vlaneseq
    %v84 = vshrl.u32 %v83, 7
    %v85 = vsub.s32 0, %v84
    %v86 = vrot.slane %v52, %v85
    %v88 = vmul.f32 %v80, %v86
    %v89 = vmul.f32 %v81, %v86
    %v91 = vlaneseq
    %v92 = vshrl.u32 %v91, 7
    %v93 = vsub.s32 0, %v92
    %v94 = vrot.slane %v53, %v93
    %v96 = vadd.f32 %v88, %v94
    %v97 = vadd.f32 %v89, %v94
    %v98 = vld [vmem:[%s3] sm:$0xff]
    %v99 = vld [vmem:[%s3 + $0x8] sm:$0xff]
    %v100 = vld [vmem:[%s3 + $0x10] sm:$0xff]
    %v101 = vld [vmem:[%s3 + $0x18] sm:$0xff]
    %v103 = vsel %vm54, %v96, 0
    %v106 = vsel %vm54, %v97, 0
    %108 = vmatprep.subr.mxu0 0.0
    %109 = vmatpush1.msra.mxu0 %v98
    %110 = vmatprep.subr.mxu0 0.0
    %111 = vmatpush1.msra.mxu0 %v99
    %112 = vmatprep.subr.mxu0 0.0
    %113 = vmatpush1.msra.mxu0 %v100
    %114 = vmatprep.subr.mxu0 0.0
    %115 = vmatpush1.msra.mxu0 %v101
    %116 = vmatprep.subr.mxu0 0.0
    %117 = vmatpush1.msra.mxu0 0.0
    %118 = vmatprep.subr.mxu0 0.0
    %119 = vmatpush1.msra.mxu0 0.0
    %120 = vmatprep.subr.mxu0 0.0
    %121 = vmatpush1.msra.mxu0 0.0
    %122 = vmatprep.subr.mxu0 0.0
    %123 = vmatpush1.msra.mxu0 0.0
    %124 = vmatprep.subr.mxu0 0.0
    %125 = vmatpush1.msra.mxu0 0.0
    %126 = vmatprep.subr.mxu0 0.0
    %127 = vmatpush1.msra.mxu0 0.0
    %128 = vmatprep.subr.mxu0 0.0
    %129 = vmatpush1.msra.mxu0 0.0
    %130 = vmatprep.subr.mxu0 0.0
    %131 = vmatpush1.msra.mxu0 0.0
    %132 = vmatprep.subr.mxu0 0.0
    %133 = vmatpush1.msra.mxu0 0.0
    %134 = vmatprep.subr.mxu0 0.0
    %135 = vmatpush1.msra.mxu0 0.0
    %136 = vmatprep.subr.mxu0 0.0
    %137 = vmatpush1.msra.mxu0 0.0
    %138 = vmatprep.subr.mxu0 0.0
    %139 = vmatpush1.msra.mxu0 0.0
    %140 = vmatprep.subr.mxu0 0.0
    %141 = vmatpush1.msra.mxu0 0.0
    %142 = vmatprep.subr.mxu0 0.0
    %143 = vmatpush1.msra.mxu0 0.0
    %144 = vmatprep.subr.mxu0 0.0
    %145 = vmatpush1.msra.mxu0 0.0
    %146 = vmatprep.subr.mxu0 0.0
    %147 = vmatpush1.msra.mxu0 0.0
    %148 = vmatprep.subr.mxu0 0.0
    %149 = vmatpush1.msra.mxu0 0.0
    %150 = vmatprep.subr.mxu0 0.0
    %151 = vmatpush1.msra.mxu0 0.0
    %152 = vmatprep.subr.mxu0 0.0
    %153 = vmatpush1.msra.mxu0 0.0
    %154 = vmatprep.subr.mxu0 0.0
    %155 = vmatpush1.msra.mxu0 0.0
    %156 = vmatprep.subr.mxu0 0.0
    %157 = vmatpush1.msra.mxu0 0.0
    %158 = vmatprep.subr.mxu0 0.0
    %159 = vmatpush1.msra.mxu0 0.0
    %160 = vmatprep.subr.mxu0 0.0
    %161 = vmatpush1.msra.mxu0 0.0
    %162 = vmatprep.subr.mxu0 0.0
    %163 = vmatpush1.msra.mxu0 0.0
    %164 = vmatprep.subr.mxu0 0.0
    %165 = vmatpush1.msra.mxu0 0.0
    %166 = vmatprep.subr.mxu0 0.0
    %167 = vmatpush1.msra.mxu0 0.0
    %168 = vmatprep.subr.mxu0 0.0
    %169 = vmatpush1.msra.mxu0 0.0
    %170 = vmatprep.subr.mxu0 0.0
    %171 = vmatpush1.msra.mxu0 0.0
    %172 = vmatprep.mubr.f32.mxu0 0.0
    %173 = vmatmul.mubr.f32.gmra.mrb[0].mxu0 %v103
    %v174 = vpop.f32.mrb[0].mxu0
    %v175 = vadd.f32 0.0, %v174
    %v176 = vpop.f32.mrb[0].mxu0
    %177 = vmatprep.mubr.f32.mxu0 0.0
    %178 = vmatmul.mubr.f32.gmra.mrb[0].mxu0 %v106
    %v179 = vpop.f32.mrb[0].mxu0
    %v180 = vadd.f32 0.0, %v179
    %v181 = vpop.f32.mrb[0].mxu0
    %182 = vdwg.mxu0
    %v183 = vld [vmem:[%s4] sm:$0xf]
    %v184 = vld [vmem:[%s5] sm:$0x1]
    %v187 = vrot.slane %v175, 5
    %v188 = vrot.slane %v180, 5
    %vm191 = vcmask 1042432
    %v192 = vsel %vm191, 0.0, %v187
    %v193 = vsel %vm191, 0.0, %v188
    %v194 = vlaneseq
    %v195 = vshrl.u32 %v194, 7
    %v196 = vsub.s32 0, %v195
    %v197 = vrot.slane %v183, %v196
    %v198 = vmul.f32 %v197, %v192
    %v199 = vmul.f32 %v197, %v193
    %v200 = vadd.f32 %v198, 0.0
    %v201 = vadd.f32 %v199, 0.0
    %v202 = vlaneseq
    %v203 = vshrl.u32 %v202, 7
    %v204 = vsub.s32 1, %v203
    %v205 = vrot.slane %v183, %v204
    %v206 = vmul.f32 %v205, %v192
    %v207 = vmul.f32 %v205, %v187
    %v208 = vmul.f32 %v205, %v193
    %v209 = vmul.f32 %v205, %v188
    %vm214 = vcmask 1046528
    %v215 = vrot.slane %v206, 1
    %v216 = vrot.slane %v207, 1
    %v217 = vsel %vm214, %v215, %v216
    %v218 = vrot.slane %v208, 1
    %v219 = vrot.slane %v209, 1
    %v220 = vsel %vm214, %v218, %v219
    %v223 = vadd.f32 %v200, %v217
    %v224 = vadd.f32 %v201, %v220
    %v225 = vlaneseq
    %v226 = vshrl.u32 %v225, 7
    %v227 = vsub.s32 2, %v226
    %v228 = vrot.slane %v183, %v227
    %v229 = vmul.f32 %v228, %v192
    %v230 = vmul.f32 %v228, %v187
    %v231 = vmul.f32 %v228, %v193
    %v232 = vmul.f32 %v228, %v188
    %vm237 = vcmask 1045504
    %v238 = vrot.slane %v229, 2
    %v239 = vrot.slane %v230, 2
    %v240 = vsel %vm237, %v238, %v239
    %v241 = vrot.slane %v231, 2
    %v242 = vrot.slane %v232, 2
    %v243 = vsel %vm237, %v241, %v242
    %v246 = vadd.f32 %v223, %v240
    %v247 = vadd.f32 %v224, %v243
    %v248 = vlaneseq
    %v249 = vshrl.u32 %v248, 7
    %v250 = vsub.s32 3, %v249
    %v251 = vrot.slane %v183, %v250
    %v252 = vmul.f32 %v251, %v192
    %v253 = vmul.f32 %v251, %v187
    %v254 = vmul.f32 %v251, %v193
    %v255 = vmul.f32 %v251, %v188
    %vm260 = vcmask 1044480
    %v261 = vrot.slane %v252, 3
    %v262 = vrot.slane %v253, 3
    %v263 = vsel %vm260, %v261, %v262
    %v264 = vrot.slane %v254, 3
    %v265 = vrot.slane %v255, 3
    %v266 = vsel %vm260, %v264, %v265
    %v269 = vadd.f32 %v246, %v263
    %v270 = vadd.f32 %v247, %v266
    %v272 = vlaneseq
    %v273 = vshrl.u32 %v272, 7
    %v274 = vsub.s32 0, %v273
    %v275 = vrot.slane %v184, %v274
    %v277 = vadd.f32 %v269, %v275
    %v278 = vadd.f32 %v270, %v275
    %v279 = vsub.f32 0.0, %v277
    %v280 = vsub.f32 0.0, %v278
    %v281 = vmul.f32 %v279, 1.442695
    %v282 = vpow.pop %v281
    %v283 = vmul.f32 %v280, 1.442695
    %v284 = vpow.pop %v283
    %v285 = vadd.f32 %v282, 1.0
    %v286 = vadd.f32 %v284, 1.0
    %v287 = vrcp.pop %v285
    %v288 = vrcp.pop %v286
    %v289 = vmul.f32 %v277, %v287
    %v290 = vmul.f32 %v278, %v288
    %v291 = vld [vmem:[%s6] sm:$0xff]
    %v292 = vld [vmem:[%s6 + $0x8] sm:$0xff]
    %v293 = vld [vmem:[%s6 + $0x10] sm:$0xff]
    %v294 = vld [vmem:[%s6 + $0x18] sm:$0xff]
    %v295 = vld [vmem:[%s6 + $0x20] sm:$0xff]
    %v296 = vld [vmem:[%s6 + $0x28] sm:$0xff]
    %v297 = vld [vmem:[%s6 + $0x30] sm:$0xff]
    %v298 = vld [vmem:[%s6 + $0x38] sm:$0xff]
    %vm299 = vcmask 523264
    %v301 = vsel %vm299, %v289, 0
    %v304 = vsel %vm299, %v290, 0
    %306 = vmatprep.subr.mxu0 0.0
    %307 = vmatpush1.msra.mxu0 %v291
    %308 = vmatprep.subr.mxu0 0.0
    %309 = vmatpush1.msra.mxu0 %v292
    %310 = vmatprep.subr.mxu0 0.0
    %311 = vmatpush1.msra.mxu0 %v293
    %312 = vmatprep.subr.mxu0 0.0
    %313 = vmatpush1.msra.mxu0 %v294
    %314 = vmatprep.subr.mxu0 0.0
    %315 = vmatpush1.msra.mxu0 %v295
    %316 = vmatprep.subr.mxu0 0.0
    %317 = vmatpush1.msra.mxu0 %v296
    %318 = vmatprep.subr.mxu0 0.0
    %319 = vmatpush1.msra.mxu0 %v297
    %320 = vmatprep.subr.mxu0 0.0
    %321 = vmatpush1.msra.mxu0 %v298
    %322 = vmatprep.subr.mxu0 0.0
    %323 = vmatpush1.msra.mxu0 0.0
    %324 = vmatprep.subr.mxu0 0.0
    %325 = vmatpush1.msra.mxu0 0.0
    %326 = vmatprep.subr.mxu0 0.0
    %327 = vmatpush1.msra.mxu0 0.0
    %328 = vmatprep.subr.mxu0 0.0
    %329 = vmatpush1.msra.mxu0 0.0
    %330 = vmatprep.subr.mxu0 0.0
    %331 = vmatpush1.msra.mxu0 0.0
    %332 = vmatprep.subr.mxu0 0.0
    %333 = vmatpush1.msra.mxu0 0.0
    %334 = vmatprep.subr.mxu0 0.0
    %335 = vmatpush1.msra.mxu0 0.0
    %336 = vmatprep.subr.mxu0 0.0
    %337 = vmatpush1.msra.mxu0 0.0
    %338 = vmatprep.subr.mxu0 0.0
    %339 = vmatpush1.msra.mxu0 0.0
    %340 = vmatprep.subr.mxu0 0.0
    %341 = vmatpush1.msra.mxu0 0.0
    %342 = vmatprep.subr.mxu0 0.0
    %343 = vmatpush1.msra.mxu0 0.0
    %344 = vmatprep.subr.mxu0 0.0
    %345 = vmatpush1.msra.mxu0 0.0
    %346 = vmatprep.subr.mxu0 0.0
    %347 = vmatpush1.msra.mxu0 0.0
    %348 = vmatprep.subr.mxu0 0.0
    %349 = vmatpush1.msra.mxu0 0.0
    %350 = vmatprep.subr.mxu0 0.0
    %351 = vmatpush1.msra.mxu0 0.0
    %352 = vmatprep.subr.mxu0 0.0
    %353 = vmatpush1.msra.mxu0 0.0
    %354 = vmatprep.subr.mxu0 0.0
    %355 = vmatpush1.msra.mxu0 0.0
    %356 = vmatprep.subr.mxu0 0.0
    %357 = vmatpush1.msra.mxu0 0.0
    %358 = vmatprep.subr.mxu0 0.0
    %359 = vmatpush1.msra.mxu0 0.0
    %360 = vmatprep.subr.mxu0 0.0
    %361 = vmatpush1.msra.mxu0 0.0
    %362 = vmatprep.subr.mxu0 0.0
    %363 = vmatpush1.msra.mxu0 0.0
    %364 = vmatprep.subr.mxu0 0.0
    %365 = vmatpush1.msra.mxu0 0.0
    %366 = vmatprep.subr.mxu0 0.0
    %367 = vmatpush1.msra.mxu0 0.0
    %368 = vmatprep.subr.mxu0 0.0
    %369 = vmatpush1.msra.mxu0 0.0
    %370 = vmatprep.mubr.f32.mxu0 0.0
    %371 = vmatmul.mubr.f32.gmra.mrb[0].mxu0 %v301
    %v372 = vpop.f32.mrb[0].mxu0
    %v373 = vadd.f32 0.0, %v372
    %v374 = vpop.f32.mrb[0].mxu0
    %375 = vmatprep.mubr.f32.mxu0 0.0
    %376 = vmatmul.mubr.f32.gmra.mrb[0].mxu0 %v304
    %v377 = vpop.f32.mrb[0].mxu0
    %v378 = vadd.f32 0.0, %v377
    %v379 = vpop.f32.mrb[0].mxu0
    %380 = vdwg.mxu0
    %v381 = vld [vmem:[%s7] sm:$0x3]
    %v382 = vld [vmem:[%s8] sm:$0x1]
    %v384 = vlaneseq
    %v385 = vshrl.u32 %v384, 7
    %v386 = vsub.s32 0, %v385
    %v387 = vrot.slane %v382, %v386
    %vm389 = vcmask 15360
    %v391 = vsel %vm389, %v373, 0
    %v394 = vsel %vm389, %v378, 0
    %vm396 = vcmask 1041408
    %v398 = vsel %vm396, %v381, 0
    %400 = vmatprep.subr.mxu0 0.0
    %401 = vmatpush1.msra.mxu0 %v398
    %402 = vmatprep.subr.mxu0 0.0
    %403 = vmatpush1.msra.mxu0 0.0
    %404 = vmatprep.subr.mxu0 0.0
    %405 = vmatpush1.msra.mxu0 0.0
    %406 = vmatprep.subr.mxu0 0.0
    %407 = vmatpush1.msra.mxu0 0.0
    %408 = vmatprep.subr.mxu0 0.0
    %409 = vmatpush1.msra.mxu0 0.0
    %410 = vmatprep.subr.mxu0 0.0
    %411 = vmatpush1.msra.mxu0 0.0
    %412 = vmatprep.subr.mxu0 0.0
    %413 = vmatpush1.msra.mxu0 0.0
    %414 = vmatprep.subr.mxu0 0.0
    %415 = vmatpush1.msra.mxu0 0.0
    %416 = vmatprep.subr.mxu0 0.0
    %417 = vmatpush1.msra.mxu0 0.0
    %418 = vmatprep.subr.mxu0 0.0
    %419 = vmatpush1.msra.mxu0 0.0
    %420 = vmatprep.subr.mxu0 0.0
    %421 = vmatpush1.msra.mxu0 0.0
    %422 = vmatprep.subr.mxu0 0.0
    %423 = vmatpush1.msra.mxu0 0.0
    %424 = vmatprep.subr.mxu0 0.0
    %425 = vmatpush1.msra.mxu0 0.0
    %426 = vmatprep.subr.mxu0 0.0
    %427 = vmatpush1.msra.mxu0 0.0
    %428 = vmatprep.subr.mxu0 0.0
    %429 = vmatpush1.msra.mxu0 0.0
    %430 = vmatprep.subr.mxu0 0.0
    %431 = vmatpush1.msra.mxu0 0.0
    %432 = vmatprep.subr.mxu0 0.0
    %433 = vmatpush1.msra.mxu0 0.0
    %434 = vmatprep.subr.mxu0 0.0
    %435 = vmatpush1.msra.mxu0 0.0
    %436 = vmatprep.subr.mxu0 0.0
    %437 = vmatpush1.msra.mxu0 0.0
    %438 = vmatprep.subr.mxu0 0.0
    %439 = vmatpush1.msra.mxu0 0.0
    %440 = vmatprep.subr.mxu0 0.0
    %441 = vmatpush1.msra.mxu0 0.0
    %442 = vmatprep.subr.mxu0 0.0
    %443 = vmatpush1.msra.mxu0 0.0
    %444 = vmatprep.subr.mxu0 0.0
    %445 = vmatpush1.msra.mxu0 0.0
    %446 = vmatprep.subr.mxu0 0.0
    %447 = vmatpush1.msra.mxu0 0.0
    %448 = vmatprep.subr.mxu0 0.0
    %449 = vmatpush1.msra.mxu0 0.0
    %450 = vmatprep.subr.mxu0 0.0
    %451 = vmatpush1.msra.mxu0 0.0
    %452 = vmatprep.subr.mxu0 0.0
    %453 = vmatpush1.msra.mxu0 0.0
    %454 = vmatprep.subr.mxu0 0.0
    %455 = vmatpush1.msra.mxu0 0.0
    %456 = vmatprep.subr.mxu0 0.0
    %457 = vmatpush1.msra.mxu0 0.0
    %458 = vmatprep.subr.mxu0 0.0
    %459 = vmatpush1.msra.mxu0 0.0
    %460 = vmatprep.subr.mxu0 0.0
    %461 = vmatpush1.msra.mxu0 0.0
    %462 = vmatprep.subr.mxu0 0.0
    %463 = vmatpush1.msra.mxu0 0.0
    %464 = vmatprep.mubr.f32.mxu0 0.0
    %465 = vmatmul.mubr.f32.gmra.mrb[0].mxu0 %v391
    %v466 = vpop.f32.mrb[0].mxu0
    %v467 = vadd.f32 %v387, %v466
    %v468 = vpop.f32.mrb[0].mxu0
    %469 = vmatprep.mubr.f32.mxu0 0.0
    %470 = vmatmul.mubr.f32.gmra.mrb[0].mxu0 %v394
    %v471 = vpop.f32.mrb[0].mxu0
    %v472 = vadd.f32 %v387, %v471
    %v473 = vpop.f32.mrb[0].mxu0
    %474 = vdwg.mxu0
    %vm475 = vcmp.gt.f32.partialorder %v467, 20.0
    %vm476 = vcmp.gt.f32.partialorder %v472, 20.0
    %v477 = vmul.f32 %v467, 1.442695
    %v478 = vpow.pop %v477
    %v479 = vmul.f32 %v472, 1.442695
    %v480 = vpow.pop %v479
    %v481 = vadd.f32 %v478, 1.0
    %v482 = vadd.f32 %v480, 1.0
    %v483 = vlog2.pop %v481
    %v484 = vmul.f32 %v483, 0.6931472
    %v485 = vlog2.pop %v482
    %v486 = vmul.f32 %v485, 0.6931472
    %v487 = vsel %vm475, %v467, %v484
    %v488 = vsel %vm476, %v472, %v486
    %v489 = vld [vmem:[%s9] sm:$0xff]
    %v490 = vld [vmem:[%s9 + $0x8] sm:$0xff]
    %v491 = vlaneseq
    %v492 = vshrl.u32 %v491, 7
    %v493 = vsub.s32 0, %v492
    %v494 = vrot.slane %v487, %v493
    %v495 = vlaneseq
    %v496 = vshrl.u32 %v495, 7
    %v497 = vsub.s32 0, %v496
    %v498 = vrot.slane %v488, %v497
    %v499 = vmul.f32 %v494, %v489
    %v500 = vmul.f32 %v494, %v490
    %v501 = vmul.f32 %v498, %v489
    %v502 = vmul.f32 %v498, %v490
    %v503 = vmul.f32 %v499, 1.442695
    %v504 = vpow.pop %v503
    %v505 = vmul.f32 %v500, 1.442695
    %v506 = vpow.pop %v505
    %v507 = vmul.f32 %v501, 1.442695
    %v508 = vpow.pop %v507
    %v509 = vmul.f32 %v502, 1.442695
    %v510 = vpow.pop %v509
    %v511 = vmul.f32 %v487, %v289
    %v512 = vmul.f32 %v488, %v290
    %v513 = vlaneseq
    %v514 = vshrl.u32 %v513, 7
    %v515 = vsub.s32 0, %v514
    %v516 = vrot.slane %v373, %v515
    %s518 = sor.u32 256, 2
    %519 = vbcast.lane.b32.xlu0 %v516, %s518
    %v520 = vpop.permute.xlu0 %519
    %s522 = sor.u32 256, 10
    %523 = vbcast.lane.b32.xlu0 %v516, %s522
    %v524 = vpop.permute.xlu0 %523
    %v525 = vlaneseq
    %v526 = vshrl.u32 %v525, 7
    %v527 = vsub.s32 0, %v526
    %v528 = vrot.slane %v378, %v527
    %s530 = sor.u32 256, 2
    %531 = vbcast.lane.b32.xlu0 %v528, %s530
    %v532 = vpop.permute.xlu0 %531
    %s534 = sor.u32 256, 10
    %535 = vbcast.lane.b32.xlu0 %v528, %s534
    %v536 = vpop.permute.xlu0 %535
    %v537 = vlaneseq
    %v538 = vshrl.u32 %v537, 7
    %v539 = vsub.s32 0, %v538
    %v540 = vrot.slane %v511, %v539
    %v541 = vlaneseq
    %v542 = vshrl.u32 %v541, 7
    %v543 = vsub.s32 0, %v542
    %v544 = vrot.slane %v512, %v543
    %v545 = vmul.f32 %v540, %v520
    %v546 = vmul.f32 %v540, %v524
    %v547 = vmul.f32 %v544, %v532
    %v548 = vmul.f32 %v544, %v536
    %v549 = vmul.f32 %v504, 0.0
    %v550 = vmul.f32 %v506, 0.0
    %v551 = vmul.f32 %v508, 0.0
    %v552 = vmul.f32 %v510, 0.0
    %v553 = vadd.f32 %v549, %v545
    %v554 = vadd.f32 %v550, %v546
    %v555 = vadd.f32 %v551, %v547
    %v556 = vadd.f32 %v552, %v548
    %s558 = sor.u32 256, 18
    %559 = vbcast.lane.b32.xlu0 %v516, %s558
    %v560 = vpop.permute.xlu0 %559
    %s562 = sor.u32 256, 26
    %563 = vbcast.lane.b32.xlu0 %v516, %s562
    %v564 = vpop.permute.xlu0 %563
    %s566 = sor.u32 256, 18
    %567 = vbcast.lane.b32.xlu0 %v528, %s566
    %v568 = vpop.permute.xlu0 %567
    %s570 = sor.u32 256, 26
    %571 = vbcast.lane.b32.xlu0 %v528, %s570
    %v572 = vpop.permute.xlu0 %571
    %v573 = vmul.f32 %v553, %v560
    %v574 = vmul.f32 %v554, %v564
    %v575 = vmul.f32 %v555, %v568
    %v576 = vmul.f32 %v556, %v572
    %v577 = vsel %vm299, %v573, 0.0
    %v578 = vsel %vm299, %v574, 0.0
    %v579 = vadd.f32 %v577, %v578
    %v580 = vrot.slane %v579, 4
    %v581 = vadd.f32 %v579, %v580
    %v582 = vrot.slane %v581, 2
    %v583 = vadd.f32 %v581, %v582
    %v584 = vrot.slane %v583, 1
    %v585 = vadd.f32 %v583, %v584
    %v586 = vsel %vm299, %v575, 0.0
    %v587 = vsel %vm299, %v576, 0.0
    %v588 = vadd.f32 %v586, %v587
    %v589 = vrot.slane %v588, 4
    %v590 = vadd.f32 %v588, %v589
    %v591 = vrot.slane %v590, 2
    %v592 = vadd.f32 %v590, %v591
    %v593 = vrot.slane %v592, 1
    %v594 = vadd.f32 %v592, %v593
    %v595 = vlaneseq
    %v596 = vshrl.u32 %v595, 7
    %v597 = vsub.s32 1, %v596
    %v598 = vrot.slane %v487, %v597
    %v599 = vlaneseq
    %v600 = vshrl.u32 %v599, 7
    %v601 = vsub.s32 1, %v600
    %v602 = vrot.slane %v488, %v601
    %v603 = vmul.f32 %v598, %v489
    %v604 = vmul.f32 %v598, %v490
    %v605 = vmul.f32 %v602, %v489
    %v606 = vmul.f32 %v602, %v490
    %v607 = vmul.f32 %v603, 1.442695
    %v608 = vpow.pop %v607
    %v609 = vmul.f32 %v604, 1.442695
    %v610 = vpow.pop %v609
    %v611 = vmul.f32 %v605, 1.442695
    %v612 = vpow.pop %v611
    %v613 = vmul.f32 %v606, 1.442695
    %v614 = vpow.pop %v613
    %v615 = vlaneseq
    %v616 = vshrl.u32 %v615, 7
    %v617 = vsub.s32 1, %v616
    %v618 = vrot.slane %v373, %v617
    %s620 = sor.u32 256, 2
    %621 = vbcast.lane.b32.xlu0 %v618, %s620
    %v622 = vpop.permute.xlu0 %621
    %s624 = sor.u32 256, 10
    %625 = vbcast.lane.b32.xlu0 %v618, %s624
    %v626 = vpop.permute.xlu0 %625
    %v627 = vlaneseq
    %v628 = vshrl.u32 %v627, 7
    %v629 = vsub.s32 1, %v628
    %v630 = vrot.slane %v378, %v629
    %s632 = sor.u32 256, 2
    %633 = vbcast.lane.b32.xlu0 %v630, %s632
    %v634 = vpop.permute.xlu0 %633
    %s636 = sor.u32 256, 10
    %637 = vbcast.lane.b32.xlu0 %v630, %s636
    %v638 = vpop.permute.xlu0 %637
    %v639 = vlaneseq
    %v640 = vshrl.u32 %v639, 7
    %v641 = vsub.s32 1, %v640
    %v642 = vrot.slane %v511, %v641
    %v643 = vlaneseq
    %v644 = vshrl.u32 %v643, 7
    %v645 = vsub.s32 1, %v644
    %v646 = vrot.slane %v512, %v645
    %v647 = vmul.f32 %v642, %v622
    %v648 = vmul.f32 %v642, %v626
    %v649 = vmul.f32 %v646, %v634
    %v650 = vmul.f32 %v646, %v638
    %v651 = vmul.f32 %v608, %v553
    %v652 = vmul.f32 %v610, %v554
    %v653 = vmul.f32 %v612, %v555
    %v654 = vmul.f32 %v614, %v556
    %v655 = vadd.f32 %v651, %v647
    %v656 = vadd.f32 %v652, %v648
    %v657 = vadd.f32 %v653, %v649
    %v658 = vadd.f32 %v654, %v650
    %s660 = sor.u32 256, 18
    %661 = vbcast.lane.b32.xlu0 %v618, %s660
    %v662 = vpop.permute.xlu0 %661
    %s664 = sor.u32 256, 26
    %665 = vbcast.lane.b32.xlu0 %v618, %s664
    %v666 = vpop.permute.xlu0 %665
    %s668 = sor.u32 256, 18
    %669 = vbcast.lane.b32.xlu0 %v630, %s668
    %v670 = vpop.permute.xlu0 %669
    %s672 = sor.u32 256, 26
    %673 = vbcast.lane.b32.xlu0 %v630, %s672
    %v674 = vpop.permute.xlu0 %673
    %v675 = vmul.f32 %v655, %v662
    %v676 = vmul.f32 %v656, %v666
    %v677 = vmul.f32 %v657, %v670
    %v678 = vmul.f32 %v658, %v674
    %v679 = vsel %vm299, %v675, 0.0
    %v680 = vsel %vm299, %v676, 0.0
    %v681 = vadd.f32 %v679, %v680
    %v682 = vrot.slane %v681, 4
    %v683 = vadd.f32 %v681, %v682
    %v684 = vrot.slane %v683, 2
    %v685 = vadd.f32 %v683, %v684
    %v686 = vrot.slane %v685, 1
    %v687 = vadd.f32 %v685, %v686
    %v688 = vsel %vm299, %v677, 0.0
    %v689 = vsel %vm299, %v678, 0.0
    %v690 = vadd.f32 %v688, %v689
    %v691 = vrot.slane %v690, 4
    %v692 = vadd.f32 %v690, %v691
    %v693 = vrot.slane %v692, 2
    %v694 = vadd.f32 %v692, %v693
    %v695 = vrot.slane %v694, 1
    %v696 = vadd.f32 %v694, %v695
    %v697 = vlaneseq
    %v698 = vshrl.u32 %v697, 7
    %v699 = vsub.s32 2, %v698
    %v700 = vrot.slane %v487, %v699
    %v701 = vlaneseq
    %v702 = vshrl.u32 %v701, 7
    %v703 = vsub.s32 2, %v702
    %v704 = vrot.slane %v488, %v703
    %v705 = vmul.f32 %v700, %v489
    %v706 = vmul.f32 %v700, %v490
    %v707 = vmul.f32 %v704, %v489
    %v708 = vmul.f32 %v704, %v490
    %v709 = vmul.f32 %v705, 1.442695
    %v710 = vpow.pop %v709
    %v711 = vmul.f32 %v706, 1.442695
    %v712 = vpow.pop %v711
    %v713 = vmul.f32 %v707, 1.442695
    %v714 = vpow.pop %v713
    %v715 = vmul.f32 %v708, 1.442695
    %v716 = vpow.pop %v715
    %v717 = vlaneseq
    %v718 = vshrl.u32 %v717, 7
    %v719 = vsub.s32 2, %v718
    %v720 = vrot.slane %v373, %v719
    %s722 = sor.u32 256, 2
    %723 = vbcast.lane.b32.xlu0 %v720, %s722
    %v724 = vpop.permute.xlu0 %723
    %s726 = sor.u32 256, 10
    %727 = vbcast.lane.b32.xlu0 %v720, %s726
    %v728 = vpop.permute.xlu0 %727
    %v729 = vlaneseq
    %v730 = vshrl.u32 %v729, 7
    %v731 = vsub.s32 2, %v730
    %v732 = vrot.slane %v378, %v731
    %s734 = sor.u32 256, 2
    %735 = vbcast.lane.b32.xlu0 %v732, %s734
    %v736 = vpop.permute.xlu0 %735
    %s738 = sor.u32 256, 10
    %739 = vbcast.lane.b32.xlu0 %v732, %s738
    %v740 = vpop.permute.xlu0 %739
    %v741 = vlaneseq
    %v742 = vshrl.u32 %v741, 7
    %v743 = vsub.s32 2, %v742
    %v744 = vrot.slane %v511, %v743
    %v745 = vlaneseq
    %v746 = vshrl.u32 %v745, 7
    %v747 = vsub.s32 2, %v746
    %v748 = vrot.slane %v512, %v747
    %v749 = vmul.f32 %v744, %v724
    %v750 = vmul.f32 %v744, %v728
    %v751 = vmul.f32 %v748, %v736
    %v752 = vmul.f32 %v748, %v740
    %v753 = vmul.f32 %v710, %v655
    %v754 = vmul.f32 %v712, %v656
    %v755 = vmul.f32 %v714, %v657
    %v756 = vmul.f32 %v716, %v658
    %v757 = vadd.f32 %v753, %v749
    %v758 = vadd.f32 %v754, %v750
    %v759 = vadd.f32 %v755, %v751
    %v760 = vadd.f32 %v756, %v752
    %s762 = sor.u32 256, 18
    %763 = vbcast.lane.b32.xlu0 %v720, %s762
    %v764 = vpop.permute.xlu0 %763
    %s766 = sor.u32 256, 26
    %767 = vbcast.lane.b32.xlu0 %v720, %s766
    %v768 = vpop.permute.xlu0 %767
    %s770 = sor.u32 256, 18
    %771 = vbcast.lane.b32.xlu0 %v732, %s770
    %v772 = vpop.permute.xlu0 %771
    %s774 = sor.u32 256, 26
    %775 = vbcast.lane.b32.xlu0 %v732, %s774
    %v776 = vpop.permute.xlu0 %775
    %v777 = vmul.f32 %v757, %v764
    %v778 = vmul.f32 %v758, %v768
    %v779 = vmul.f32 %v759, %v772
    %v780 = vmul.f32 %v760, %v776
    %v781 = vsel %vm299, %v777, 0.0
    %v782 = vsel %vm299, %v778, 0.0
    %v783 = vadd.f32 %v781, %v782
    %v784 = vrot.slane %v783, 4
    %v785 = vadd.f32 %v783, %v784
    %v786 = vrot.slane %v785, 2
    %v787 = vadd.f32 %v785, %v786
    %v788 = vrot.slane %v787, 1
    %v789 = vadd.f32 %v787, %v788
    %v790 = vsel %vm299, %v779, 0.0
    %v791 = vsel %vm299, %v780, 0.0
    %v792 = vadd.f32 %v790, %v791
    %v793 = vrot.slane %v792, 4
    %v794 = vadd.f32 %v792, %v793
    %v795 = vrot.slane %v794, 2
    %v796 = vadd.f32 %v794, %v795
    %v797 = vrot.slane %v796, 1
    %v798 = vadd.f32 %v796, %v797
    %v799 = vlaneseq
    %v800 = vshrl.u32 %v799, 7
    %v801 = vsub.s32 3, %v800
    %v802 = vrot.slane %v487, %v801
    %v803 = vlaneseq
    %v804 = vshrl.u32 %v803, 7
    %v805 = vsub.s32 3, %v804
    %v806 = vrot.slane %v488, %v805
    %v807 = vmul.f32 %v802, %v489
    %v808 = vmul.f32 %v802, %v490
    %v809 = vmul.f32 %v806, %v489
    %v810 = vmul.f32 %v806, %v490
    %v811 = vmul.f32 %v807, 1.442695
    %v812 = vpow.pop %v811
    %v813 = vmul.f32 %v808, 1.442695
    %v814 = vpow.pop %v813
    %v815 = vmul.f32 %v809, 1.442695
    %v816 = vpow.pop %v815
    %v817 = vmul.f32 %v810, 1.442695
    %v818 = vpow.pop %v817
    %v819 = vlaneseq
    %v820 = vshrl.u32 %v819, 7
    %v821 = vsub.s32 3, %v820
    %v822 = vrot.slane %v373, %v821
    %s824 = sor.u32 256, 2
    %825 = vbcast.lane.b32.xlu0 %v822, %s824
    %v826 = vpop.permute.xlu0 %825
    %s828 = sor.u32 256, 10
    %829 = vbcast.lane.b32.xlu0 %v822, %s828
    %v830 = vpop.permute.xlu0 %829
    %v831 = vlaneseq
    %v832 = vshrl.u32 %v831, 7
    %v833 = vsub.s32 3, %v832
    %v834 = vrot.slane %v378, %v833
    %s836 = sor.u32 256, 2
    %837 = vbcast.lane.b32.xlu0 %v834, %s836
    %v838 = vpop.permute.xlu0 %837
    %s840 = sor.u32 256, 10
    %841 = vbcast.lane.b32.xlu0 %v834, %s840
    %v842 = vpop.permute.xlu0 %841
    %v843 = vlaneseq
    %v844 = vshrl.u32 %v843, 7
    %v845 = vsub.s32 3, %v844
    %v846 = vrot.slane %v511, %v845
    %v847 = vlaneseq
    %v848 = vshrl.u32 %v847, 7
    %v849 = vsub.s32 3, %v848
    %v850 = vrot.slane %v512, %v849
    %v851 = vmul.f32 %v846, %v826
    %v852 = vmul.f32 %v846, %v830
    %v853 = vmul.f32 %v850, %v838
    %v854 = vmul.f32 %v850, %v842
    %v855 = vmul.f32 %v812, %v757
    %v856 = vmul.f32 %v814, %v758
    %v857 = vmul.f32 %v816, %v759
    %v858 = vmul.f32 %v818, %v760
    %v859 = vadd.f32 %v855, %v851
    %v860 = vadd.f32 %v856, %v852
    %v861 = vadd.f32 %v857, %v853
    %v862 = vadd.f32 %v858, %v854
    %s864 = sor.u32 256, 18
    %865 = vbcast.lane.b32.xlu0 %v822, %s864
    %v866 = vpop.permute.xlu0 %865
    %s868 = sor.u32 256, 26
    %869 = vbcast.lane.b32.xlu0 %v822, %s868
    %v870 = vpop.permute.xlu0 %869
    %s872 = sor.u32 256, 18
    %873 = vbcast.lane.b32.xlu0 %v834, %s872
    %v874 = vpop.permute.xlu0 %873
    %s876 = sor.u32 256, 26
    %877 = vbcast.lane.b32.xlu0 %v834, %s876
    %v878 = vpop.permute.xlu0 %877
    %v879 = vmul.f32 %v859, %v866
    %v880 = vmul.f32 %v860, %v870
    %v881 = vmul.f32 %v861, %v874
    %v882 = vmul.f32 %v862, %v878
    %v883 = vsel %vm299, %v879, 0.0
    %v884 = vsel %vm299, %v880, 0.0
    %v885 = vadd.f32 %v883, %v884
    %v886 = vrot.slane %v885, 4
    %v887 = vadd.f32 %v885, %v886
    %v888 = vrot.slane %v887, 2
    %v889 = vadd.f32 %v887, %v888
    %v890 = vrot.slane %v889, 1
    %v891 = vadd.f32 %v889, %v890
    %v892 = vsel %vm299, %v881, 0.0
    %v893 = vsel %vm299, %v882, 0.0
    %v894 = vadd.f32 %v892, %v893
    %v895 = vrot.slane %v894, 4
    %v896 = vadd.f32 %v894, %v895
    %v897 = vrot.slane %v896, 2
    %v898 = vadd.f32 %v896, %v897
    %v899 = vrot.slane %v898, 1
    %v900 = vadd.f32 %v898, %v899
    %v901 = vlaneseq
    %v902 = vshrl.u32 %v901, 7
    %v903 = vsub.s32 4, %v902
    %v904 = vrot.slane %v487, %v903
    %v905 = vlaneseq
    %v906 = vshrl.u32 %v905, 7
    %v907 = vsub.s32 4, %v906
    %v908 = vrot.slane %v488, %v907
    %v909 = vmul.f32 %v904, %v489
    %v910 = vmul.f32 %v904, %v490
    %v911 = vmul.f32 %v908, %v489
    %v912 = vmul.f32 %v908, %v490
    %v913 = vmul.f32 %v909, 1.442695
    %v914 = vpow.pop %v913
    %v915 = vmul.f32 %v910, 1.442695
    %v916 = vpow.pop %v915
    %v917 = vmul.f32 %v911, 1.442695
    %v918 = vpow.pop %v917
    %v919 = vmul.f32 %v912, 1.442695
    %v920 = vpow.pop %v919
    %v921 = vlaneseq
    %v922 = vshrl.u32 %v921, 7
    %v923 = vsub.s32 4, %v922
    %v924 = vrot.slane %v373, %v923
    %s926 = sor.u32 256, 2
    %927 = vbcast.lane.b32.xlu0 %v924, %s926
    %v928 = vpop.permute.xlu0 %927
    %s930 = sor.u32 256, 10
    %931 = vbcast.lane.b32.xlu0 %v924, %s930
    %v932 = vpop.permute.xlu0 %931
    %v933 = vlaneseq
    %v934 = vshrl.u32 %v933, 7
    %v935 = vsub.s32 4, %v934
    %v936 = vrot.slane %v378, %v935
    %s938 = sor.u32 256, 2
    %939 = vbcast.lane.b32.xlu0 %v936, %s938
    %v940 = vpop.permute.xlu0 %939
    %s942 = sor.u32 256, 10
    %943 = vbcast.lane.b32.xlu0 %v936, %s942
    %v944 = vpop.permute.xlu0 %943
    %v945 = vlaneseq
    %v946 = vshrl.u32 %v945, 7
    %v947 = vsub.s32 4, %v946
    %v948 = vrot.slane %v511, %v947
    %v949 = vlaneseq
    %v950 = vshrl.u32 %v949, 7
    %v951 = vsub.s32 4, %v950
    %v952 = vrot.slane %v512, %v951
    %v953 = vmul.f32 %v948, %v928
    %v954 = vmul.f32 %v948, %v932
    %v955 = vmul.f32 %v952, %v940
    %v956 = vmul.f32 %v952, %v944
    %v957 = vmul.f32 %v914, %v859
    %v958 = vmul.f32 %v916, %v860
    %v959 = vmul.f32 %v918, %v861
    %v960 = vmul.f32 %v920, %v862
    %v961 = vadd.f32 %v957, %v953
    %v962 = vadd.f32 %v958, %v954
    %v963 = vadd.f32 %v959, %v955
    %v964 = vadd.f32 %v960, %v956
    %s966 = sor.u32 256, 18
    %967 = vbcast.lane.b32.xlu0 %v924, %s966
    %v968 = vpop.permute.xlu0 %967
    %s970 = sor.u32 256, 26
    %971 = vbcast.lane.b32.xlu0 %v924, %s970
    %v972 = vpop.permute.xlu0 %971
    %s974 = sor.u32 256, 18
    %975 = vbcast.lane.b32.xlu0 %v936, %s974
    %v976 = vpop.permute.xlu0 %975
    %s978 = sor.u32 256, 26
    %979 = vbcast.lane.b32.xlu0 %v936, %s978
    %v980 = vpop.permute.xlu0 %979
    %v981 = vmul.f32 %v961, %v968
    %v982 = vmul.f32 %v962, %v972
    %v983 = vmul.f32 %v963, %v976
    %v984 = vmul.f32 %v964, %v980
    %v985 = vsel %vm299, %v981, 0.0
    %v986 = vsel %vm299, %v982, 0.0
    %v987 = vadd.f32 %v985, %v986
    %v988 = vrot.slane %v987, 4
    %v989 = vadd.f32 %v987, %v988
    %v990 = vrot.slane %v989, 2
    %v991 = vadd.f32 %v989, %v990
    %v992 = vrot.slane %v991, 1
    %v993 = vadd.f32 %v991, %v992
    %v994 = vsel %vm299, %v983, 0.0
    %v995 = vsel %vm299, %v984, 0.0
    %v996 = vadd.f32 %v994, %v995
    %v997 = vrot.slane %v996, 4
    %v998 = vadd.f32 %v996, %v997
    %v999 = vrot.slane %v998, 2
    %v1000 = vadd.f32 %v998, %v999
    %v1001 = vrot.slane %v1000, 1
    %v1002 = vadd.f32 %v1000, %v1001
    %v1003 = vlaneseq
    %v1004 = vshrl.u32 %v1003, 7
    %v1005 = vsub.s32 5, %v1004
    %v1006 = vrot.slane %v487, %v1005
    %v1007 = vlaneseq
    %v1008 = vshrl.u32 %v1007, 7
    %v1009 = vsub.s32 5, %v1008
    %v1010 = vrot.slane %v488, %v1009
    %v1011 = vmul.f32 %v1006, %v489
    %v1012 = vmul.f32 %v1006, %v490
    %v1013 = vmul.f32 %v1010, %v489
    %v1014 = vmul.f32 %v1010, %v490
    %v1015 = vmul.f32 %v1011, 1.442695
    %v1016 = vpow.pop %v1015
    %v1017 = vmul.f32 %v1012, 1.442695
    %v1018 = vpow.pop %v1017
    %v1019 = vmul.f32 %v1013, 1.442695
    %v1020 = vpow.pop %v1019
    %v1021 = vmul.f32 %v1014, 1.442695
    %v1022 = vpow.pop %v1021
    %v1023 = vlaneseq
    %v1024 = vshrl.u32 %v1023, 7
    %v1025 = vsub.s32 5, %v1024
    %v1026 = vrot.slane %v373, %v1025
    %s1028 = sor.u32 256, 2
    %1029 = vbcast.lane.b32.xlu0 %v1026, %s1028
    %v1030 = vpop.permute.xlu0 %1029
    %s1032 = sor.u32 256, 10
    %1033 = vbcast.lane.b32.xlu0 %v1026, %s1032
    %v1034 = vpop.permute.xlu0 %1033
    %v1035 = vlaneseq
    %v1036 = vshrl.u32 %v1035, 7
    %v1037 = vsub.s32 5, %v1036
    %v1038 = vrot.slane %v378, %v1037
    %s1040 = sor.u32 256, 2
    %1041 = vbcast.lane.b32.xlu0 %v1038, %s1040
    %v1042 = vpop.permute.xlu0 %1041
    %s1044 = sor.u32 256, 10
    %1045 = vbcast.lane.b32.xlu0 %v1038, %s1044
    %v1046 = vpop.permute.xlu0 %1045
    %v1047 = vlaneseq
    %v1048 = vshrl.u32 %v1047, 7
    %v1049 = vsub.s32 5, %v1048
    %v1050 = vrot.slane %v511, %v1049
    %v1051 = vlaneseq
    %v1052 = vshrl.u32 %v1051, 7
    %v1053 = vsub.s32 5, %v1052
    %v1054 = vrot.slane %v512, %v1053
    %v1055 = vmul.f32 %v1050, %v1030
    %v1056 = vmul.f32 %v1050, %v1034
    %v1057 = vmul.f32 %v1054, %v1042
    %v1058 = vmul.f32 %v1054, %v1046
    %v1059 = vmul.f32 %v1016, %v961
    %v1060 = vmul.f32 %v1018, %v962
    %v1061 = vmul.f32 %v1020, %v963
    %v1062 = vmul.f32 %v1022, %v964
    %v1063 = vadd.f32 %v1059, %v1055
    %v1064 = vadd.f32 %v1060, %v1056
    %v1065 = vadd.f32 %v1061, %v1057
    %v1066 = vadd.f32 %v1062, %v1058
    %s1068 = sor.u32 256, 18
    %1069 = vbcast.lane.b32.xlu0 %v1026, %s1068
    %v1070 = vpop.permute.xlu0 %1069
    %s1072 = sor.u32 256, 26
    %1073 = vbcast.lane.b32.xlu0 %v1026, %s1072
    %v1074 = vpop.permute.xlu0 %1073
    %s1076 = sor.u32 256, 18
    %1077 = vbcast.lane.b32.xlu0 %v1038, %s1076
    %v1078 = vpop.permute.xlu0 %1077
    %s1080 = sor.u32 256, 26
    %1081 = vbcast.lane.b32.xlu0 %v1038, %s1080
    %v1082 = vpop.permute.xlu0 %1081
    %v1083 = vmul.f32 %v1063, %v1070
    %v1084 = vmul.f32 %v1064, %v1074
    %v1085 = vmul.f32 %v1065, %v1078
    %v1086 = vmul.f32 %v1066, %v1082
    %v1087 = vsel %vm299, %v1083, 0.0
    %v1088 = vsel %vm299, %v1084, 0.0
    %v1089 = vadd.f32 %v1087, %v1088
    %v1090 = vrot.slane %v1089, 4
    %v1091 = vadd.f32 %v1089, %v1090
    %v1092 = vrot.slane %v1091, 2
    %v1093 = vadd.f32 %v1091, %v1092
    %v1094 = vrot.slane %v1093, 1
    %v1095 = vadd.f32 %v1093, %v1094
    %v1096 = vsel %vm299, %v1085, 0.0
    %v1097 = vsel %vm299, %v1086, 0.0
    %v1098 = vadd.f32 %v1096, %v1097
    %v1099 = vrot.slane %v1098, 4
    %v1100 = vadd.f32 %v1098, %v1099
    %v1101 = vrot.slane %v1100, 2
    %v1102 = vadd.f32 %v1100, %v1101
    %v1103 = vrot.slane %v1102, 1
    %v1104 = vadd.f32 %v1102, %v1103
    %v1105 = vlaneseq
    %v1106 = vshrl.u32 %v1105, 7
    %v1107 = vsub.s32 6, %v1106
    %v1108 = vrot.slane %v487, %v1107
    %v1109 = vlaneseq
    %v1110 = vshrl.u32 %v1109, 7
    %v1111 = vsub.s32 6, %v1110
    %v1112 = vrot.slane %v488, %v1111
    %v1113 = vmul.f32 %v1108, %v489
    %v1114 = vmul.f32 %v1108, %v490
    %v1115 = vmul.f32 %v1112, %v489
    %v1116 = vmul.f32 %v1112, %v490
    %v1117 = vmul.f32 %v1113, 1.442695
    %v1118 = vpow.pop %v1117
    %v1119 = vmul.f32 %v1114, 1.442695
    %v1120 = vpow.pop %v1119
    %v1121 = vmul.f32 %v1115, 1.442695
    %v1122 = vpow.pop %v1121
    %v1123 = vmul.f32 %v1116, 1.442695
    %v1124 = vpow.pop %v1123
    %v1125 = vlaneseq
    %v1126 = vshrl.u32 %v1125, 7
    %v1127 = vsub.s32 6, %v1126
    %v1128 = vrot.slane %v373, %v1127
    %s1130 = sor.u32 256, 2
    %1131 = vbcast.lane.b32.xlu0 %v1128, %s1130
    %v1132 = vpop.permute.xlu0 %1131
    %s1134 = sor.u32 256, 10
    %1135 = vbcast.lane.b32.xlu0 %v1128, %s1134
    %v1136 = vpop.permute.xlu0 %1135
    %v1137 = vlaneseq
    %v1138 = vshrl.u32 %v1137, 7
    %v1139 = vsub.s32 6, %v1138
    %v1140 = vrot.slane %v378, %v1139
    %s1142 = sor.u32 256, 2
    %1143 = vbcast.lane.b32.xlu0 %v1140, %s1142
    %v1144 = vpop.permute.xlu0 %1143
    %s1146 = sor.u32 256, 10
    %1147 = vbcast.lane.b32.xlu0 %v1140, %s1146
    %v1148 = vpop.permute.xlu0 %1147
    %v1149 = vlaneseq
    %v1150 = vshrl.u32 %v1149, 7
    %v1151 = vsub.s32 6, %v1150
    %v1152 = vrot.slane %v511, %v1151
    %v1153 = vlaneseq
    %v1154 = vshrl.u32 %v1153, 7
    %v1155 = vsub.s32 6, %v1154
    %v1156 = vrot.slane %v512, %v1155
    %v1157 = vmul.f32 %v1152, %v1132
    %v1158 = vmul.f32 %v1152, %v1136
    %v1159 = vmul.f32 %v1156, %v1144
    %v1160 = vmul.f32 %v1156, %v1148
    %v1161 = vmul.f32 %v1118, %v1063
    %v1162 = vmul.f32 %v1120, %v1064
    %v1163 = vmul.f32 %v1122, %v1065
    %v1164 = vmul.f32 %v1124, %v1066
    %v1165 = vadd.f32 %v1161, %v1157
    %v1166 = vadd.f32 %v1162, %v1158
    %v1167 = vadd.f32 %v1163, %v1159
    %v1168 = vadd.f32 %v1164, %v1160
    %s1170 = sor.u32 256, 18
    %1171 = vbcast.lane.b32.xlu0 %v1128, %s1170
    %v1172 = vpop.permute.xlu0 %1171
    %s1174 = sor.u32 256, 26
    %1175 = vbcast.lane.b32.xlu0 %v1128, %s1174
    %v1176 = vpop.permute.xlu0 %1175
    %s1178 = sor.u32 256, 18
    %1179 = vbcast.lane.b32.xlu0 %v1140, %s1178
    %v1180 = vpop.permute.xlu0 %1179
    %s1182 = sor.u32 256, 26
    %1183 = vbcast.lane.b32.xlu0 %v1140, %s1182
    %v1184 = vpop.permute.xlu0 %1183
    %v1185 = vmul.f32 %v1165, %v1172
    %v1186 = vmul.f32 %v1166, %v1176
    %v1187 = vmul.f32 %v1167, %v1180
    %v1188 = vmul.f32 %v1168, %v1184
    %v1189 = vsel %vm299, %v1185, 0.0
    %v1190 = vsel %vm299, %v1186, 0.0
    %v1191 = vadd.f32 %v1189, %v1190
    %v1192 = vrot.slane %v1191, 4
    %v1193 = vadd.f32 %v1191, %v1192
    %v1194 = vrot.slane %v1193, 2
    %v1195 = vadd.f32 %v1193, %v1194
    %v1196 = vrot.slane %v1195, 1
    %v1197 = vadd.f32 %v1195, %v1196
    %v1198 = vsel %vm299, %v1187, 0.0
    %v1199 = vsel %vm299, %v1188, 0.0
    %v1200 = vadd.f32 %v1198, %v1199
    %v1201 = vrot.slane %v1200, 4
    %v1202 = vadd.f32 %v1200, %v1201
    %v1203 = vrot.slane %v1202, 2
    %v1204 = vadd.f32 %v1202, %v1203
    %v1205 = vrot.slane %v1204, 1
    %v1206 = vadd.f32 %v1204, %v1205
    %v1207 = vlaneseq
    %v1208 = vshrl.u32 %v1207, 7
    %v1209 = vsub.s32 7, %v1208
    %v1210 = vrot.slane %v487, %v1209
    %v1211 = vlaneseq
    %v1212 = vshrl.u32 %v1211, 7
    %v1213 = vsub.s32 7, %v1212
    %v1214 = vrot.slane %v488, %v1213
    %v1215 = vmul.f32 %v1210, %v489
    %v1216 = vmul.f32 %v1210, %v490
    %v1217 = vmul.f32 %v1214, %v489
    %v1218 = vmul.f32 %v1214, %v490
    %v1219 = vmul.f32 %v1215, 1.442695
    %v1220 = vpow.pop %v1219
    %v1221 = vmul.f32 %v1216, 1.442695
    %v1222 = vpow.pop %v1221
    %v1223 = vmul.f32 %v1217, 1.442695
    %v1224 = vpow.pop %v1223
    %v1225 = vmul.f32 %v1218, 1.442695
    %v1226 = vpow.pop %v1225
    %v1227 = vlaneseq
    %v1228 = vshrl.u32 %v1227, 7
    %v1229 = vsub.s32 7, %v1228
    %v1230 = vrot.slane %v373, %v1229
    %s1232 = sor.u32 256, 2
    %1233 = vbcast.lane.b32.xlu0 %v1230, %s1232
    %v1234 = vpop.permute.xlu0 %1233
    %s1236 = sor.u32 256, 10
    %1237 = vbcast.lane.b32.xlu0 %v1230, %s1236
    %v1238 = vpop.permute.xlu0 %1237
    %v1239 = vlaneseq
    %v1240 = vshrl.u32 %v1239, 7
    %v1241 = vsub.s32 7, %v1240
    %v1242 = vrot.slane %v378, %v1241
    %s1244 = sor.u32 256, 2
    %1245 = vbcast.lane.b32.xlu0 %v1242, %s1244
    %v1246 = vpop.permute.xlu0 %1245
    %s1248 = sor.u32 256, 10
    %1249 = vbcast.lane.b32.xlu0 %v1242, %s1248
    %v1250 = vpop.permute.xlu0 %1249
    %v1251 = vlaneseq
    %v1252 = vshrl.u32 %v1251, 7
    %v1253 = vsub.s32 7, %v1252
    %v1254 = vrot.slane %v511, %v1253
    %v1255 = vlaneseq
    %v1256 = vshrl.u32 %v1255, 7
    %v1257 = vsub.s32 7, %v1256
    %v1258 = vrot.slane %v512, %v1257
    %v1259 = vmul.f32 %v1254, %v1234
    %v1260 = vmul.f32 %v1254, %v1238
    %v1261 = vmul.f32 %v1258, %v1246
    %v1262 = vmul.f32 %v1258, %v1250
    %v1263 = vmul.f32 %v1220, %v1165
    %v1264 = vmul.f32 %v1222, %v1166
    %v1265 = vmul.f32 %v1224, %v1167
    %v1266 = vmul.f32 %v1226, %v1168
    %v1267 = vadd.f32 %v1263, %v1259
    %v1268 = vadd.f32 %v1264, %v1260
    %v1269 = vadd.f32 %v1265, %v1261
    %v1270 = vadd.f32 %v1266, %v1262
    %s1272 = sor.u32 256, 18
    %1273 = vbcast.lane.b32.xlu0 %v1230, %s1272
    %v1274 = vpop.permute.xlu0 %1273
    %s1276 = sor.u32 256, 26
    %1277 = vbcast.lane.b32.xlu0 %v1230, %s1276
    %v1278 = vpop.permute.xlu0 %1277
    %s1280 = sor.u32 256, 18
    %1281 = vbcast.lane.b32.xlu0 %v1242, %s1280
    %v1282 = vpop.permute.xlu0 %1281
    %s1284 = sor.u32 256, 26
    %1285 = vbcast.lane.b32.xlu0 %v1242, %s1284
    %v1286 = vpop.permute.xlu0 %1285
    %v1287 = vmul.f32 %v1267, %v1274
    %v1288 = vmul.f32 %v1268, %v1278
    %v1289 = vmul.f32 %v1269, %v1282
    %v1290 = vmul.f32 %v1270, %v1286
    %v1291 = vsel %vm299, %v1287, 0.0
    %v1292 = vsel %vm299, %v1288, 0.0
    %v1293 = vadd.f32 %v1291, %v1292
    %v1294 = vrot.slane %v1293, 4
    %v1295 = vadd.f32 %v1293, %v1294
    %v1296 = vrot.slane %v1295, 2
    %v1297 = vadd.f32 %v1295, %v1296
    %v1298 = vrot.slane %v1297, 1
    %v1299 = vadd.f32 %v1297, %v1298
    %v1300 = vsel %vm299, %v1289, 0.0
    %v1301 = vsel %vm299, %v1290, 0.0
    %v1302 = vadd.f32 %v1300, %v1301
    %v1303 = vrot.slane %v1302, 4
    %v1304 = vadd.f32 %v1302, %v1303
    %v1305 = vrot.slane %v1304, 2
    %v1306 = vadd.f32 %v1304, %v1305
    %v1307 = vrot.slane %v1306, 1
    %v1308 = vadd.f32 %v1306, %v1307
    %vm1309 = vcmask 1040384
    %v1310 = vsel %vm1309, %v585, %v687
    %v1311 = vsel %vm1309, %v594, %v696
    %v1312 = vsel %vm396, %v1310, %v789
    %v1313 = vsel %vm396, %v1311, %v798
    %v1314 = vsel %vm191, %v1312, %v891
    %v1315 = vsel %vm191, %v1313, %v900
    %vm1316 = vcmask 1043456
    %v1317 = vsel %vm1316, %v1314, %v993
    %v1318 = vsel %vm1316, %v1315, %v1002
    %v1319 = vsel %vm260, %v1317, %v1095
    %v1320 = vsel %vm260, %v1318, %v1104
    %v1321 = vsel %vm237, %v1319, %v1197
    %v1322 = vsel %vm237, %v1320, %v1206
    %v1323 = vsel %vm214, %v1321, %v1299
    %v1324 = vsel %vm214, %v1322, %v1308
    %v1325 = vld [vmem:[%s10] sm:$0x1]
    %v1327 = vlaneseq
    %v1328 = vshrl.u32 %v1327, 7
    %v1329 = vsub.s32 0, %v1328
    %v1330 = vrot.slane %v1325, %v1329
    %v1332 = vmul.f32 %v289, %v1330
    %v1333 = vmul.f32 %v290, %v1330
    %v1334 = vadd.f32 %v1323, %v1332
    %v1335 = vadd.f32 %v1324, %v1333
    %v1336 = vsub.f32 0.0, %v175
    %v1337 = vsub.f32 0.0, %v180
    %v1338 = vmul.f32 %v1336, 1.442695
    %v1339 = vpow.pop %v1338
    %v1340 = vmul.f32 %v1337, 1.442695
    %v1341 = vpow.pop %v1340
    %v1342 = vadd.f32 %v1339, 1.0
    %v1343 = vadd.f32 %v1341, 1.0
    %v1344 = vrcp.pop %v1342
    %v1345 = vrcp.pop %v1343
    %v1346 = vmul.f32 %v175, %v1344
    %v1347 = vmul.f32 %v180, %v1345
    %1350 = vrot.lane.b32.xlu0 %v1346, 64
    %v1351 = vpop.permute.xlu0 %1350
    %1352 = vrot.lane.b32.xlu0 %v1347, 64
    %v1353 = vpop.permute.xlu0 %1352
    %v1356 = vmul.f32 %v1334, %v1351
    %v1357 = vmul.f32 %v1335, %v1353
    %v1358 = vld [vmem:[%s11] sm:$0xff]
    %v1359 = vld [vmem:[%s11 + $0x8] sm:$0xff]
    %v1360 = vld [vmem:[%s11 + $0x10] sm:$0xff]
    %v1361 = vld [vmem:[%s11 + $0x18] sm:$0xff]
    %v1362 = vld [vmem:[%s11 + $0x20] sm:$0xff]
    %v1363 = vld [vmem:[%s11 + $0x28] sm:$0xff]
    %v1364 = vld [vmem:[%s11 + $0x30] sm:$0xff]
    %v1365 = vld [vmem:[%s11 + $0x38] sm:$0xff]
    %v1367 = vsel %vm299, %v1356, 0
    %v1370 = vsel %vm299, %v1357, 0
    %1372 = vmatprep.subr.mxu0 0.0
    %1373 = vmatpush1.msra.mxu0 %v1358
    %1374 = vmatprep.subr.mxu0 0.0
    %1375 = vmatpush1.msra.mxu0 %v1359
    %1376 = vmatprep.subr.mxu0 0.0
    %1377 = vmatpush1.msra.mxu0 %v1360
    %1378 = vmatprep.subr.mxu0 0.0
    %1379 = vmatpush1.msra.mxu0 %v1361
    %1380 = vmatprep.subr.mxu0 0.0
    %1381 = vmatpush1.msra.mxu0 %v1362
    %1382 = vmatprep.subr.mxu0 0.0
    %1383 = vmatpush1.msra.mxu0 %v1363
    %1384 = vmatprep.subr.mxu0 0.0
    %1385 = vmatpush1.msra.mxu0 %v1364
    %1386 = vmatprep.subr.mxu0 0.0
    %1387 = vmatpush1.msra.mxu0 %v1365
    %1388 = vmatprep.subr.mxu0 0.0
    %1389 = vmatpush1.msra.mxu0 0.0
    %1390 = vmatprep.subr.mxu0 0.0
    %1391 = vmatpush1.msra.mxu0 0.0
    %1392 = vmatprep.subr.mxu0 0.0
    %1393 = vmatpush1.msra.mxu0 0.0
    %1394 = vmatprep.subr.mxu0 0.0
    %1395 = vmatpush1.msra.mxu0 0.0
    %1396 = vmatprep.subr.mxu0 0.0
    %1397 = vmatpush1.msra.mxu0 0.0
    %1398 = vmatprep.subr.mxu0 0.0
    %1399 = vmatpush1.msra.mxu0 0.0
    %1400 = vmatprep.subr.mxu0 0.0
    %1401 = vmatpush1.msra.mxu0 0.0
    %1402 = vmatprep.subr.mxu0 0.0
    %1403 = vmatpush1.msra.mxu0 0.0
    %1404 = vmatprep.subr.mxu0 0.0
    %1405 = vmatpush1.msra.mxu0 0.0
    %1406 = vmatprep.subr.mxu0 0.0
    %1407 = vmatpush1.msra.mxu0 0.0
    %1408 = vmatprep.subr.mxu0 0.0
    %1409 = vmatpush1.msra.mxu0 0.0
    %1410 = vmatprep.subr.mxu0 0.0
    %1411 = vmatpush1.msra.mxu0 0.0
    %1412 = vmatprep.subr.mxu0 0.0
    %1413 = vmatpush1.msra.mxu0 0.0
    %1414 = vmatprep.subr.mxu0 0.0
    %1415 = vmatpush1.msra.mxu0 0.0
    %1416 = vmatprep.subr.mxu0 0.0
    %1417 = vmatpush1.msra.mxu0 0.0
    %1418 = vmatprep.subr.mxu0 0.0
    %1419 = vmatpush1.msra.mxu0 0.0
    %1420 = vmatprep.subr.mxu0 0.0
    %1421 = vmatpush1.msra.mxu0 0.0
    %1422 = vmatprep.subr.mxu0 0.0
    %1423 = vmatpush1.msra.mxu0 0.0
    %1424 = vmatprep.subr.mxu0 0.0
    %1425 = vmatpush1.msra.mxu0 0.0
    %1426 = vmatprep.subr.mxu0 0.0
    %1427 = vmatpush1.msra.mxu0 0.0
    %1428 = vmatprep.subr.mxu0 0.0
    %1429 = vmatpush1.msra.mxu0 0.0
    %1430 = vmatprep.subr.mxu0 0.0
    %1431 = vmatpush1.msra.mxu0 0.0
    %1432 = vmatprep.subr.mxu0 0.0
    %1433 = vmatpush1.msra.mxu0 0.0
    %1434 = vmatprep.subr.mxu0 0.0
    %1435 = vmatpush1.msra.mxu0 0.0
    %1436 = vmatprep.mubr.f32.mxu0 0.0
    %1437 = vmatmul.mubr.f32.gmra.mrb[0].mxu0 %v1367
    %v1438 = vpop.f32.mrb[0].mxu0
    %v1439 = vadd.f32 0.0, %v1438
    %v1440 = vpop.f32.mrb[0].mxu0
    %1441 = vmatprep.mubr.f32.mxu0 0.0
    %1442 = vmatmul.mubr.f32.gmra.mrb[0].mxu0 %v1370
    %v1443 = vpop.f32.mrb[0].mxu0
    %v1444 = vadd.f32 0.0, %v1443
    %v1445 = vpop.f32.mrb[0].mxu0
    %1446 = vdwg.mxu0
    %v1447 = vadd.f32 %v1439, %v50
    %v1448 = vadd.f32 %v1444, %v51
    %s1449 = scalar_lea.vmem %s1, 1
    %v1450 = vld [vmem:[%s1449] sm:$0x1]
    %s1451 = scalar_lea.vmem %s2, 1
    %v1452 = vld [vmem:[%s1451] sm:$0x1]
    %v1453 = vsel %vm54, %v1447, 0.0
    %1454 = vadd.xlane.f32.xlu0 %v1453
    %v1455 = vpop.xlane.xlu0 %1454
    %v1456 = vsel %vm54, %v1448, 0.0
    %1457 = vadd.xlane.f32.xlu0 %v1456
    %v1458 = vpop.xlane.xlu0 %1457
    %v1459 = vmul.f32 %v1455, %v61
    %v1460 = vmul.f32 %v1458, %v61
    %v1461 = vsub.f32 %v1447, %v1459
    %v1462 = vsub.f32 %v1448, %v1460
    %v1463 = vmul.f32 %v1461, %v1461
    %v1464 = vmul.f32 %v1462, %v1462
    %v1465 = vsel %vm54, %v1463, 0.0
    %1466 = vadd.xlane.f32.xlu0 %v1465
    %v1467 = vpop.xlane.xlu0 %1466
    %v1468 = vsel %vm54, %v1464, 0.0
    %1469 = vadd.xlane.f32.xlu0 %v1468
    %v1470 = vpop.xlane.xlu0 %1469
    %v1471 = vmul.f32 %v1467, %v61
    %v1472 = vmul.f32 %v1470, %v61
    %v1473 = vadd.f32 %v1471, 1e-05
    %v1474 = vadd.f32 %v1472, 1e-05
    %v1475 = vrsqrt.pop %v1473
    %v1476 = vrsqrt.pop %v1474
    %v1477 = vmul.f32 %v1461, %v1475
    %v1478 = vmul.f32 %v1462, %v1476
    %v1480 = vlaneseq
    %v1481 = vshrl.u32 %v1480, 7
    %v1482 = vsub.s32 0, %v1481
    %v1483 = vrot.slane %v1450, %v1482
    %v1485 = vmul.f32 %v1477, %v1483
    %v1486 = vmul.f32 %v1478, %v1483
    %v1488 = vlaneseq
    %v1489 = vshrl.u32 %v1488, 7
    %v1490 = vsub.s32 0, %v1489
    %v1491 = vrot.slane %v1452, %v1490
    %v1493 = vadd.f32 %v1485, %v1491
    %v1494 = vadd.f32 %v1486, %v1491
    %s1495 = scalar_lea.vmem %s3, 32
    %v1496 = vld [vmem:[%s1495] sm:$0xff]
    %v1497 = vld [vmem:[%s1495 + $0x8] sm:$0xff]
    %v1498 = vld [vmem:[%s1495 + $0x10] sm:$0xff]
    %v1499 = vld [vmem:[%s1495 + $0x18] sm:$0xff]
    %v1501 = vsel %vm54, %v1493, 0
    %v1504 = vsel %vm54, %v1494, 0
    %1506 = vmatprep.subr.mxu0 0.0
    %1507 = vmatpush1.msra.mxu0 %v1496
    %1508 = vmatprep.subr.mxu0 0.0
    %1509 = vmatpush1.msra.mxu0 %v1497
    %1510 = vmatprep.subr.mxu0 0.0
    %1511 = vmatpush1.msra.mxu0 %v1498
    %1512 = vmatprep.subr.mxu0 0.0
    %1513 = vmatpush1.msra.mxu0 %v1499
    %1514 = vmatprep.subr.mxu0 0.0
    %1515 = vmatpush1.msra.mxu0 0.0
    %1516 = vmatprep.subr.mxu0 0.0
    %1517 = vmatpush1.msra.mxu0 0.0
    %1518 = vmatprep.subr.mxu0 0.0
    %1519 = vmatpush1.msra.mxu0 0.0
    %1520 = vmatprep.subr.mxu0 0.0
    %1521 = vmatpush1.msra.mxu0 0.0
    %1522 = vmatprep.subr.mxu0 0.0
    %1523 = vmatpush1.msra.mxu0 0.0
    %1524 = vmatprep.subr.mxu0 0.0
    %1525 = vmatpush1.msra.mxu0 0.0
    %1526 = vmatprep.subr.mxu0 0.0
    %1527 = vmatpush1.msra.mxu0 0.0
    %1528 = vmatprep.subr.mxu0 0.0
    %1529 = vmatpush1.msra.mxu0 0.0
    %1530 = vmatprep.subr.mxu0 0.0
    %1531 = vmatpush1.msra.mxu0 0.0
    %1532 = vmatprep.subr.mxu0 0.0
    %1533 = vmatpush1.msra.mxu0 0.0
    %1534 = vmatprep.subr.mxu0 0.0
    %1535 = vmatpush1.msra.mxu0 0.0
    %1536 = vmatprep.subr.mxu0 0.0
    %1537 = vmatpush1.msra.mxu0 0.0
    %1538 = vmatprep.subr.mxu0 0.0
    %1539 = vmatpush1.msra.mxu0 0.0
    %1540 = vmatprep.subr.mxu0 0.0
    %1541 = vmatpush1.msra.mxu0 0.0
    %1542 = vmatprep.subr.mxu0 0.0
    %1543 = vmatpush1.msra.mxu0 0.0
    %1544 = vmatprep.subr.mxu0 0.0
    %1545 = vmatpush1.msra.mxu0 0.0
    %1546 = vmatprep.subr.mxu0 0.0
    %1547 = vmatpush1.msra.mxu0 0.0
    %1548 = vmatprep.subr.mxu0 0.0
    %1549 = vmatpush1.msra.mxu0 0.0
    %1550 = vmatprep.subr.mxu0 0.0
    %1551 = vmatpush1.msra.mxu0 0.0
    %1552 = vmatprep.subr.mxu0 0.0
    %1553 = vmatpush1.msra.mxu0 0.0
    %1554 = vmatprep.subr.mxu0 0.0
    %1555 = vmatpush1.msra.mxu0 0.0
    %1556 = vmatprep.subr.mxu0 0.0
    %1557 = vmatpush1.msra.mxu0 0.0
    %1558 = vmatprep.subr.mxu0 0.0
    %1559 = vmatpush1.msra.mxu0 0.0
    %1560 = vmatprep.subr.mxu0 0.0
    %1561 = vmatpush1.msra.mxu0 0.0
    %1562 = vmatprep.subr.mxu0 0.0
    %1563 = vmatpush1.msra.mxu0 0.0
    %1564 = vmatprep.subr.mxu0 0.0
    %1565 = vmatpush1.msra.mxu0 0.0
    %1566 = vmatprep.subr.mxu0 0.0
    %1567 = vmatpush1.msra.mxu0 0.0
    %1568 = vmatprep.subr.mxu0 0.0
    %1569 = vmatpush1.msra.mxu0 0.0
    %1570 = vmatprep.mubr.f32.mxu0 0.0
    %1571 = vmatmul.mubr.f32.gmra.mrb[0].mxu0 %v1501
    %v1572 = vpop.f32.mrb[0].mxu0
    %v1573 = vadd.f32 0.0, %v1572
    %v1574 = vpop.f32.mrb[0].mxu0
    %1575 = vmatprep.mubr.f32.mxu0 0.0
    %1576 = vmatmul.mubr.f32.gmra.mrb[0].mxu0 %v1504
    %v1577 = vpop.f32.mrb[0].mxu0
    %v1578 = vadd.f32 0.0, %v1577
    %v1579 = vpop.f32.mrb[0].mxu0
    %1580 = vdwg.mxu0
    %s1581 = scalar_lea.vmem %s4, 4
    %v1582 = vld [vmem:[%s1581] sm:$0xf]
    %s1583 = scalar_lea.vmem %s5, 1
    %v1584 = vld [vmem:[%s1583] sm:$0x1]
    %v1587 = vrot.slane %v1573, 5
    %v1588 = vrot.slane %v1578, 5
    %v1591 = vsel %vm191, 0.0, %v1587
    %v1592 = vsel %vm191, 0.0, %v1588
    %v1593 = vlaneseq
    %v1594 = vshrl.u32 %v1593, 7
    %v1595 = vsub.s32 0, %v1594
    %v1596 = vrot.slane %v1582, %v1595
    %v1597 = vmul.f32 %v1596, %v1591
    %v1598 = vmul.f32 %v1596, %v1592
    %v1599 = vadd.f32 %v1597, 0.0
    %v1600 = vadd.f32 %v1598, 0.0
    %v1601 = vlaneseq
    %v1602 = vshrl.u32 %v1601, 7
    %v1603 = vsub.s32 1, %v1602
    %v1604 = vrot.slane %v1582, %v1603
    %v1605 = vmul.f32 %v1604, %v1591
    %v1606 = vmul.f32 %v1604, %v1587
    %v1607 = vmul.f32 %v1604, %v1592
    %v1608 = vmul.f32 %v1604, %v1588
    %v1613 = vrot.slane %v1605, 1
    %v1614 = vrot.slane %v1606, 1
    %v1615 = vsel %vm214, %v1613, %v1614
    %v1616 = vrot.slane %v1607, 1
    %v1617 = vrot.slane %v1608, 1
    %v1618 = vsel %vm214, %v1616, %v1617
    %v1621 = vadd.f32 %v1599, %v1615
    %v1622 = vadd.f32 %v1600, %v1618
    %v1623 = vlaneseq
    %v1624 = vshrl.u32 %v1623, 7
    %v1625 = vsub.s32 2, %v1624
    %v1626 = vrot.slane %v1582, %v1625
    %v1627 = vmul.f32 %v1626, %v1591
    %v1628 = vmul.f32 %v1626, %v1587
    %v1629 = vmul.f32 %v1626, %v1592
    %v1630 = vmul.f32 %v1626, %v1588
    %v1635 = vrot.slane %v1627, 2
    %v1636 = vrot.slane %v1628, 2
    %v1637 = vsel %vm237, %v1635, %v1636
    %v1638 = vrot.slane %v1629, 2
    %v1639 = vrot.slane %v1630, 2
    %v1640 = vsel %vm237, %v1638, %v1639
    %v1643 = vadd.f32 %v1621, %v1637
    %v1644 = vadd.f32 %v1622, %v1640
    %v1645 = vlaneseq
    %v1646 = vshrl.u32 %v1645, 7
    %v1647 = vsub.s32 3, %v1646
    %v1648 = vrot.slane %v1582, %v1647
    %v1649 = vmul.f32 %v1648, %v1591
    %v1650 = vmul.f32 %v1648, %v1587
    %v1651 = vmul.f32 %v1648, %v1592
    %v1652 = vmul.f32 %v1648, %v1588
    %v1657 = vrot.slane %v1649, 3
    %v1658 = vrot.slane %v1650, 3
    %v1659 = vsel %vm260, %v1657, %v1658
    %v1660 = vrot.slane %v1651, 3
    %v1661 = vrot.slane %v1652, 3
    %v1662 = vsel %vm260, %v1660, %v1661
    %v1665 = vadd.f32 %v1643, %v1659
    %v1666 = vadd.f32 %v1644, %v1662
    %v1668 = vlaneseq
    %v1669 = vshrl.u32 %v1668, 7
    %v1670 = vsub.s32 0, %v1669
    %v1671 = vrot.slane %v1584, %v1670
    %v1673 = vadd.f32 %v1665, %v1671
    %v1674 = vadd.f32 %v1666, %v1671
    %v1675 = vsub.f32 0.0, %v1673
    %v1676 = vsub.f32 0.0, %v1674
    %v1677 = vmul.f32 %v1675, 1.442695
    %v1678 = vpow.pop %v1677
    %v1679 = vmul.f32 %v1676, 1.442695
    %v1680 = vpow.pop %v1679
    %v1681 = vadd.f32 %v1678, 1.0
    %v1682 = vadd.f32 %v1680, 1.0
    %v1683 = vrcp.pop %v1681
    %v1684 = vrcp.pop %v1682
    %v1685 = vmul.f32 %v1673, %v1683
    %v1686 = vmul.f32 %v1674, %v1684
    %s1687 = scalar_lea.vmem %s6, 64
    %v1688 = vld [vmem:[%s1687] sm:$0xff]
    %v1689 = vld [vmem:[%s1687 + $0x8] sm:$0xff]
    %v1690 = vld [vmem:[%s1687 + $0x10] sm:$0xff]
    %v1691 = vld [vmem:[%s1687 + $0x18] sm:$0xff]
    %v1692 = vld [vmem:[%s1687 + $0x20] sm:$0xff]
    %v1693 = vld [vmem:[%s1687 + $0x28] sm:$0xff]
    %v1694 = vld [vmem:[%s1687 + $0x30] sm:$0xff]
    %v1695 = vld [vmem:[%s1687 + $0x38] sm:$0xff]
    %v1697 = vsel %vm299, %v1685, 0
    %v1700 = vsel %vm299, %v1686, 0
    %1702 = vmatprep.subr.mxu0 0.0
    %1703 = vmatpush1.msra.mxu0 %v1688
    %1704 = vmatprep.subr.mxu0 0.0
    %1705 = vmatpush1.msra.mxu0 %v1689
    %1706 = vmatprep.subr.mxu0 0.0
    %1707 = vmatpush1.msra.mxu0 %v1690
    %1708 = vmatprep.subr.mxu0 0.0
    %1709 = vmatpush1.msra.mxu0 %v1691
    %1710 = vmatprep.subr.mxu0 0.0
    %1711 = vmatpush1.msra.mxu0 %v1692
    %1712 = vmatprep.subr.mxu0 0.0
    %1713 = vmatpush1.msra.mxu0 %v1693
    %1714 = vmatprep.subr.mxu0 0.0
    %1715 = vmatpush1.msra.mxu0 %v1694
    %1716 = vmatprep.subr.mxu0 0.0
    %1717 = vmatpush1.msra.mxu0 %v1695
    %1718 = vmatprep.subr.mxu0 0.0
    %1719 = vmatpush1.msra.mxu0 0.0
    %1720 = vmatprep.subr.mxu0 0.0
    %1721 = vmatpush1.msra.mxu0 0.0
    %1722 = vmatprep.subr.mxu0 0.0
    %1723 = vmatpush1.msra.mxu0 0.0
    %1724 = vmatprep.subr.mxu0 0.0
    %1725 = vmatpush1.msra.mxu0 0.0
    %1726 = vmatprep.subr.mxu0 0.0
    %1727 = vmatpush1.msra.mxu0 0.0
    %1728 = vmatprep.subr.mxu0 0.0
    %1729 = vmatpush1.msra.mxu0 0.0
    %1730 = vmatprep.subr.mxu0 0.0
    %1731 = vmatpush1.msra.mxu0 0.0
    %1732 = vmatprep.subr.mxu0 0.0
    %1733 = vmatpush1.msra.mxu0 0.0
    %1734 = vmatprep.subr.mxu0 0.0
    %1735 = vmatpush1.msra.mxu0 0.0
    %1736 = vmatprep.subr.mxu0 0.0
    %1737 = vmatpush1.msra.mxu0 0.0
    %1738 = vmatprep.subr.mxu0 0.0
    %1739 = vmatpush1.msra.mxu0 0.0
    %1740 = vmatprep.subr.mxu0 0.0
    %1741 = vmatpush1.msra.mxu0 0.0
    %1742 = vmatprep.subr.mxu0 0.0
    %1743 = vmatpush1.msra.mxu0 0.0
    %1744 = vmatprep.subr.mxu0 0.0
    %1745 = vmatpush1.msra.mxu0 0.0
    %1746 = vmatprep.subr.mxu0 0.0
    %1747 = vmatpush1.msra.mxu0 0.0
    %1748 = vmatprep.subr.mxu0 0.0
    %1749 = vmatpush1.msra.mxu0 0.0
    %1750 = vmatprep.subr.mxu0 0.0
    %1751 = vmatpush1.msra.mxu0 0.0
    %1752 = vmatprep.subr.mxu0 0.0
    %1753 = vmatpush1.msra.mxu0 0.0
    %1754 = vmatprep.subr.mxu0 0.0
    %1755 = vmatpush1.msra.mxu0 0.0
    %1756 = vmatprep.subr.mxu0 0.0
    %1757 = vmatpush1.msra.mxu0 0.0
    %1758 = vmatprep.subr.mxu0 0.0
    %1759 = vmatpush1.msra.mxu0 0.0
    %1760 = vmatprep.subr.mxu0 0.0
    %1761 = vmatpush1.msra.mxu0 0.0
    %1762 = vmatprep.subr.mxu0 0.0
    %1763 = vmatpush1.msra.mxu0 0.0
    %1764 = vmatprep.subr.mxu0 0.0
    %1765 = vmatpush1.msra.mxu0 0.0
    %1766 = vmatprep.mubr.f32.mxu0 0.0
    %1767 = vmatmul.mubr.f32.gmra.mrb[0].mxu0 %v1697
    %v1768 = vpop.f32.mrb[0].mxu0
    %v1769 = vadd.f32 0.0, %v1768
    %v1770 = vpop.f32.mrb[0].mxu0
    %1771 = vmatprep.mubr.f32.mxu0 0.0
    %1772 = vmatmul.mubr.f32.gmra.mrb[0].mxu0 %v1700
    %v1773 = vpop.f32.mrb[0].mxu0
    %v1774 = vadd.f32 0.0, %v1773
    %v1775 = vpop.f32.mrb[0].mxu0
    %1776 = vdwg.mxu0
    %s1777 = scalar_lea.vmem %s7, 2
    %v1778 = vld [vmem:[%s1777] sm:$0x3]
    %s1779 = scalar_lea.vmem %s8, 1
    %v1780 = vld [vmem:[%s1779] sm:$0x1]
    %v1782 = vlaneseq
    %v1783 = vshrl.u32 %v1782, 7
    %v1784 = vsub.s32 0, %v1783
    %v1785 = vrot.slane %v1780, %v1784
    %v1788 = vsel %vm389, %v1769, 0
    %v1791 = vsel %vm389, %v1774, 0
    %v1794 = vsel %vm396, %v1778, 0
    %1796 = vmatprep.subr.mxu0 0.0
    %1797 = vmatpush1.msra.mxu0 %v1794
    %1798 = vmatprep.subr.mxu0 0.0
    %1799 = vmatpush1.msra.mxu0 0.0
    %1800 = vmatprep.subr.mxu0 0.0
    %1801 = vmatpush1.msra.mxu0 0.0
    %1802 = vmatprep.subr.mxu0 0.0
    %1803 = vmatpush1.msra.mxu0 0.0
    %1804 = vmatprep.subr.mxu0 0.0
    %1805 = vmatpush1.msra.mxu0 0.0
    %1806 = vmatprep.subr.mxu0 0.0
    %1807 = vmatpush1.msra.mxu0 0.0
    %1808 = vmatprep.subr.mxu0 0.0
    %1809 = vmatpush1.msra.mxu0 0.0
    %1810 = vmatprep.subr.mxu0 0.0
    %1811 = vmatpush1.msra.mxu0 0.0
    %1812 = vmatprep.subr.mxu0 0.0
    %1813 = vmatpush1.msra.mxu0 0.0
    %1814 = vmatprep.subr.mxu0 0.0
    %1815 = vmatpush1.msra.mxu0 0.0
    %1816 = vmatprep.subr.mxu0 0.0
    %1817 = vmatpush1.msra.mxu0 0.0
    %1818 = vmatprep.subr.mxu0 0.0
    %1819 = vmatpush1.msra.mxu0 0.0
    %1820 = vmatprep.subr.mxu0 0.0
    %1821 = vmatpush1.msra.mxu0 0.0
    %1822 = vmatprep.subr.mxu0 0.0
    %1823 = vmatpush1.msra.mxu0 0.0
    %1824 = vmatprep.subr.mxu0 0.0
    %1825 = vmatpush1.msra.mxu0 0.0
    %1826 = vmatprep.subr.mxu0 0.0
    %1827 = vmatpush1.msra.mxu0 0.0
    %1828 = vmatprep.subr.mxu0 0.0
    %1829 = vmatpush1.msra.mxu0 0.0
    %1830 = vmatprep.subr.mxu0 0.0
    %1831 = vmatpush1.msra.mxu0 0.0
    %1832 = vmatprep.subr.mxu0 0.0
    %1833 = vmatpush1.msra.mxu0 0.0
    %1834 = vmatprep.subr.mxu0 0.0
    %1835 = vmatpush1.msra.mxu0 0.0
    %1836 = vmatprep.subr.mxu0 0.0
    %1837 = vmatpush1.msra.mxu0 0.0
    %1838 = vmatprep.subr.mxu0 0.0
    %1839 = vmatpush1.msra.mxu0 0.0
    %1840 = vmatprep.subr.mxu0 0.0
    %1841 = vmatpush1.msra.mxu0 0.0
    %1842 = vmatprep.subr.mxu0 0.0
    %1843 = vmatpush1.msra.mxu0 0.0
    %1844 = vmatprep.subr.mxu0 0.0
    %1845 = vmatpush1.msra.mxu0 0.0
    %1846 = vmatprep.subr.mxu0 0.0
    %1847 = vmatpush1.msra.mxu0 0.0
    %1848 = vmatprep.subr.mxu0 0.0
    %1849 = vmatpush1.msra.mxu0 0.0
    %1850 = vmatprep.subr.mxu0 0.0
    %1851 = vmatpush1.msra.mxu0 0.0
    %1852 = vmatprep.subr.mxu0 0.0
    %1853 = vmatpush1.msra.mxu0 0.0
    %1854 = vmatprep.subr.mxu0 0.0
    %1855 = vmatpush1.msra.mxu0 0.0
    %1856 = vmatprep.subr.mxu0 0.0
    %1857 = vmatpush1.msra.mxu0 0.0
    %1858 = vmatprep.subr.mxu0 0.0
    %1859 = vmatpush1.msra.mxu0 0.0
    %1860 = vmatprep.mubr.f32.mxu0 0.0
    %1861 = vmatmul.mubr.f32.gmra.mrb[0].mxu0 %v1788
    %v1862 = vpop.f32.mrb[0].mxu0
    %v1863 = vadd.f32 %v1785, %v1862
    %v1864 = vpop.f32.mrb[0].mxu0
    %1865 = vmatprep.mubr.f32.mxu0 0.0
    %1866 = vmatmul.mubr.f32.gmra.mrb[0].mxu0 %v1791
    %v1867 = vpop.f32.mrb[0].mxu0
    %v1868 = vadd.f32 %v1785, %v1867
    %v1869 = vpop.f32.mrb[0].mxu0
    %1870 = vdwg.mxu0
    %vm1871 = vcmp.gt.f32.partialorder %v1863, 20.0
    %vm1872 = vcmp.gt.f32.partialorder %v1868, 20.0
    %v1873 = vmul.f32 %v1863, 1.442695
    %v1874 = vpow.pop %v1873
    %v1875 = vmul.f32 %v1868, 1.442695
    %v1876 = vpow.pop %v1875
    %v1877 = vadd.f32 %v1874, 1.0
    %v1878 = vadd.f32 %v1876, 1.0
    %v1879 = vlog2.pop %v1877
    %v1880 = vmul.f32 %v1879, 0.6931472
    %v1881 = vlog2.pop %v1878
    %v1882 = vmul.f32 %v1881, 0.6931472
    %v1883 = vsel %vm1871, %v1863, %v1880
    %v1884 = vsel %vm1872, %v1868, %v1882
    %s1885 = scalar_lea.vmem %s9, 16
    %v1886 = vld [vmem:[%s1885] sm:$0xff]
    %v1887 = vld [vmem:[%s1885 + $0x8] sm:$0xff]
    %v1888 = vlaneseq
    %v1889 = vshrl.u32 %v1888, 7
    %v1890 = vsub.s32 0, %v1889
    %v1891 = vrot.slane %v1883, %v1890
    %v1892 = vlaneseq
    %v1893 = vshrl.u32 %v1892, 7
    %v1894 = vsub.s32 0, %v1893
    %v1895 = vrot.slane %v1884, %v1894
    %v1896 = vmul.f32 %v1891, %v1886
    %v1897 = vmul.f32 %v1891, %v1887
    %v1898 = vmul.f32 %v1895, %v1886
    %v1899 = vmul.f32 %v1895, %v1887
    %v1900 = vmul.f32 %v1896, 1.442695
    %v1901 = vpow.pop %v1900
    %v1902 = vmul.f32 %v1897, 1.442695
    %v1903 = vpow.pop %v1902
    %v1904 = vmul.f32 %v1898, 1.442695
    %v1905 = vpow.pop %v1904
    %v1906 = vmul.f32 %v1899, 1.442695
    %v1907 = vpow.pop %v1906
    %v1908 = vmul.f32 %v1883, %v1685
    %v1909 = vmul.f32 %v1884, %v1686
    %v1910 = vlaneseq
    %v1911 = vshrl.u32 %v1910, 7
    %v1912 = vsub.s32 0, %v1911
    %v1913 = vrot.slane %v1769, %v1912
    %s1915 = sor.u32 256, 2
    %1916 = vbcast.lane.b32.xlu0 %v1913, %s1915
    %v1917 = vpop.permute.xlu0 %1916
    %s1919 = sor.u32 256, 10
    %1920 = vbcast.lane.b32.xlu0 %v1913, %s1919
    %v1921 = vpop.permute.xlu0 %1920
    %v1922 = vlaneseq
    %v1923 = vshrl.u32 %v1922, 7
    %v1924 = vsub.s32 0, %v1923
    %v1925 = vrot.slane %v1774, %v1924
    %s1927 = sor.u32 256, 2
    %1928 = vbcast.lane.b32.xlu0 %v1925, %s1927
    %v1929 = vpop.permute.xlu0 %1928
    %s1931 = sor.u32 256, 10
    %1932 = vbcast.lane.b32.xlu0 %v1925, %s1931
    %v1933 = vpop.permute.xlu0 %1932
    %v1934 = vlaneseq
    %v1935 = vshrl.u32 %v1934, 7
    %v1936 = vsub.s32 0, %v1935
    %v1937 = vrot.slane %v1908, %v1936
    %v1938 = vlaneseq
    %v1939 = vshrl.u32 %v1938, 7
    %v1940 = vsub.s32 0, %v1939
    %v1941 = vrot.slane %v1909, %v1940
    %v1942 = vmul.f32 %v1937, %v1917
    %v1943 = vmul.f32 %v1937, %v1921
    %v1944 = vmul.f32 %v1941, %v1929
    %v1945 = vmul.f32 %v1941, %v1933
    %v1946 = vmul.f32 %v1901, 0.0
    %v1947 = vmul.f32 %v1903, 0.0
    %v1948 = vmul.f32 %v1905, 0.0
    %v1949 = vmul.f32 %v1907, 0.0
    %v1950 = vadd.f32 %v1946, %v1942
    %v1951 = vadd.f32 %v1947, %v1943
    %v1952 = vadd.f32 %v1948, %v1944
    %v1953 = vadd.f32 %v1949, %v1945
    %s1955 = sor.u32 256, 18
    %1956 = vbcast.lane.b32.xlu0 %v1913, %s1955
    %v1957 = vpop.permute.xlu0 %1956
    %s1959 = sor.u32 256, 26
    %1960 = vbcast.lane.b32.xlu0 %v1913, %s1959
    %v1961 = vpop.permute.xlu0 %1960
    %s1963 = sor.u32 256, 18
    %1964 = vbcast.lane.b32.xlu0 %v1925, %s1963
    %v1965 = vpop.permute.xlu0 %1964
    %s1967 = sor.u32 256, 26
    %1968 = vbcast.lane.b32.xlu0 %v1925, %s1967
    %v1969 = vpop.permute.xlu0 %1968
    %v1970 = vmul.f32 %v1950, %v1957
    %v1971 = vmul.f32 %v1951, %v1961
    %v1972 = vmul.f32 %v1952, %v1965
    %v1973 = vmul.f32 %v1953, %v1969
    %v1974 = vsel %vm299, %v1970, 0.0
    %v1975 = vsel %vm299, %v1971, 0.0
    %v1976 = vadd.f32 %v1974, %v1975
    %v1977 = vrot.slane %v1976, 4
    %v1978 = vadd.f32 %v1976, %v1977
    %v1979 = vrot.slane %v1978, 2
    %v1980 = vadd.f32 %v1978, %v1979
    %v1981 = vrot.slane %v1980, 1
    %v1982 = vadd.f32 %v1980, %v1981
    %v1983 = vsel %vm299, %v1972, 0.0
    %v1984 = vsel %vm299, %v1973, 0.0
    %v1985 = vadd.f32 %v1983, %v1984
    %v1986 = vrot.slane %v1985, 4
    %v1987 = vadd.f32 %v1985, %v1986
    %v1988 = vrot.slane %v1987, 2
    %v1989 = vadd.f32 %v1987, %v1988
    %v1990 = vrot.slane %v1989, 1
    %v1991 = vadd.f32 %v1989, %v1990
    %v1992 = vlaneseq
    %v1993 = vshrl.u32 %v1992, 7
    %v1994 = vsub.s32 1, %v1993
    %v1995 = vrot.slane %v1883, %v1994
    %v1996 = vlaneseq
    %v1997 = vshrl.u32 %v1996, 7
    %v1998 = vsub.s32 1, %v1997
    %v1999 = vrot.slane %v1884, %v1998
    %v2000 = vmul.f32 %v1995, %v1886
    %v2001 = vmul.f32 %v1995, %v1887
    %v2002 = vmul.f32 %v1999, %v1886
    %v2003 = vmul.f32 %v1999, %v1887
    %v2004 = vmul.f32 %v2000, 1.442695
    %v2005 = vpow.pop %v2004
    %v2006 = vmul.f32 %v2001, 1.442695
    %v2007 = vpow.pop %v2006
    %v2008 = vmul.f32 %v2002, 1.442695
    %v2009 = vpow.pop %v2008
    %v2010 = vmul.f32 %v2003, 1.442695
    %v2011 = vpow.pop %v2010
    %v2012 = vlaneseq
    %v2013 = vshrl.u32 %v2012, 7
    %v2014 = vsub.s32 1, %v2013
    %v2015 = vrot.slane %v1769, %v2014
    %s2017 = sor.u32 256, 2
    %2018 = vbcast.lane.b32.xlu0 %v2015, %s2017
    %v2019 = vpop.permute.xlu0 %2018
    %s2021 = sor.u32 256, 10
    %2022 = vbcast.lane.b32.xlu0 %v2015, %s2021
    %v2023 = vpop.permute.xlu0 %2022
    %v2024 = vlaneseq
    %v2025 = vshrl.u32 %v2024, 7
    %v2026 = vsub.s32 1, %v2025
    %v2027 = vrot.slane %v1774, %v2026
    %s2029 = sor.u32 256, 2
    %2030 = vbcast.lane.b32.xlu0 %v2027, %s2029
    %v2031 = vpop.permute.xlu0 %2030
    %s2033 = sor.u32 256, 10
    %2034 = vbcast.lane.b32.xlu0 %v2027, %s2033
    %v2035 = vpop.permute.xlu0 %2034
    %v2036 = vlaneseq
    %v2037 = vshrl.u32 %v2036, 7
    %v2038 = vsub.s32 1, %v2037
    %v2039 = vrot.slane %v1908, %v2038
    %v2040 = vlaneseq
    %v2041 = vshrl.u32 %v2040, 7
    %v2042 = vsub.s32 1, %v2041
    %v2043 = vrot.slane %v1909, %v2042
    %v2044 = vmul.f32 %v2039, %v2019
    %v2045 = vmul.f32 %v2039, %v2023
    %v2046 = vmul.f32 %v2043, %v2031
    %v2047 = vmul.f32 %v2043, %v2035
    %v2048 = vmul.f32 %v2005, %v1950
    %v2049 = vmul.f32 %v2007, %v1951
    %v2050 = vmul.f32 %v2009, %v1952
    %v2051 = vmul.f32 %v2011, %v1953
    %v2052 = vadd.f32 %v2048, %v2044
    %v2053 = vadd.f32 %v2049, %v2045
    %v2054 = vadd.f32 %v2050, %v2046
    %v2055 = vadd.f32 %v2051, %v2047
    %s2057 = sor.u32 256, 18
    %2058 = vbcast.lane.b32.xlu0 %v2015, %s2057
    %v2059 = vpop.permute.xlu0 %2058
    %s2061 = sor.u32 256, 26
    %2062 = vbcast.lane.b32.xlu0 %v2015, %s2061
    %v2063 = vpop.permute.xlu0 %2062
    %s2065 = sor.u32 256, 18
    %2066 = vbcast.lane.b32.xlu0 %v2027, %s2065
    %v2067 = vpop.permute.xlu0 %2066
    %s2069 = sor.u32 256, 26
    %2070 = vbcast.lane.b32.xlu0 %v2027, %s2069
    %v2071 = vpop.permute.xlu0 %2070
    %v2072 = vmul.f32 %v2052, %v2059
    %v2073 = vmul.f32 %v2053, %v2063
    %v2074 = vmul.f32 %v2054, %v2067
    %v2075 = vmul.f32 %v2055, %v2071
    %v2076 = vsel %vm299, %v2072, 0.0
    %v2077 = vsel %vm299, %v2073, 0.0
    %v2078 = vadd.f32 %v2076, %v2077
    %v2079 = vrot.slane %v2078, 4
    %v2080 = vadd.f32 %v2078, %v2079
    %v2081 = vrot.slane %v2080, 2
    %v2082 = vadd.f32 %v2080, %v2081
    %v2083 = vrot.slane %v2082, 1
    %v2084 = vadd.f32 %v2082, %v2083
    %v2085 = vsel %vm299, %v2074, 0.0
    %v2086 = vsel %vm299, %v2075, 0.0
    %v2087 = vadd.f32 %v2085, %v2086
    %v2088 = vrot.slane %v2087, 4
    %v2089 = vadd.f32 %v2087, %v2088
    %v2090 = vrot.slane %v2089, 2
    %v2091 = vadd.f32 %v2089, %v2090
    %v2092 = vrot.slane %v2091, 1
    %v2093 = vadd.f32 %v2091, %v2092
    %v2094 = vlaneseq
    %v2095 = vshrl.u32 %v2094, 7
    %v2096 = vsub.s32 2, %v2095
    %v2097 = vrot.slane %v1883, %v2096
    %v2098 = vlaneseq
    %v2099 = vshrl.u32 %v2098, 7
    %v2100 = vsub.s32 2, %v2099
    %v2101 = vrot.slane %v1884, %v2100
    %v2102 = vmul.f32 %v2097, %v1886
    %v2103 = vmul.f32 %v2097, %v1887
    %v2104 = vmul.f32 %v2101, %v1886
    %v2105 = vmul.f32 %v2101, %v1887
    %v2106 = vmul.f32 %v2102, 1.442695
    %v2107 = vpow.pop %v2106
    %v2108 = vmul.f32 %v2103, 1.442695
    %v2109 = vpow.pop %v2108
    %v2110 = vmul.f32 %v2104, 1.442695
    %v2111 = vpow.pop %v2110
    %v2112 = vmul.f32 %v2105, 1.442695
    %v2113 = vpow.pop %v2112
    %v2114 = vlaneseq
    %v2115 = vshrl.u32 %v2114, 7
    %v2116 = vsub.s32 2, %v2115
    %v2117 = vrot.slane %v1769, %v2116
    %s2119 = sor.u32 256, 2
    %2120 = vbcast.lane.b32.xlu0 %v2117, %s2119
    %v2121 = vpop.permute.xlu0 %2120
    %s2123 = sor.u32 256, 10
    %2124 = vbcast.lane.b32.xlu0 %v2117, %s2123
    %v2125 = vpop.permute.xlu0 %2124
    %v2126 = vlaneseq
    %v2127 = vshrl.u32 %v2126, 7
    %v2128 = vsub.s32 2, %v2127
    %v2129 = vrot.slane %v1774, %v2128
    %s2131 = sor.u32 256, 2
    %2132 = vbcast.lane.b32.xlu0 %v2129, %s2131
    %v2133 = vpop.permute.xlu0 %2132
    %s2135 = sor.u32 256, 10
    %2136 = vbcast.lane.b32.xlu0 %v2129, %s2135
    %v2137 = vpop.permute.xlu0 %2136
    %v2138 = vlaneseq
    %v2139 = vshrl.u32 %v2138, 7
    %v2140 = vsub.s32 2, %v2139
    %v2141 = vrot.slane %v1908, %v2140
    %v2142 = vlaneseq
    %v2143 = vshrl.u32 %v2142, 7
    %v2144 = vsub.s32 2, %v2143
    %v2145 = vrot.slane %v1909, %v2144
    %v2146 = vmul.f32 %v2141, %v2121
    %v2147 = vmul.f32 %v2141, %v2125
    %v2148 = vmul.f32 %v2145, %v2133
    %v2149 = vmul.f32 %v2145, %v2137
    %v2150 = vmul.f32 %v2107, %v2052
    %v2151 = vmul.f32 %v2109, %v2053
    %v2152 = vmul.f32 %v2111, %v2054
    %v2153 = vmul.f32 %v2113, %v2055
    %v2154 = vadd.f32 %v2150, %v2146
    %v2155 = vadd.f32 %v2151, %v2147
    %v2156 = vadd.f32 %v2152, %v2148
    %v2157 = vadd.f32 %v2153, %v2149
    %s2159 = sor.u32 256, 18
    %2160 = vbcast.lane.b32.xlu0 %v2117, %s2159
    %v2161 = vpop.permute.xlu0 %2160
    %s2163 = sor.u32 256, 26
    %2164 = vbcast.lane.b32.xlu0 %v2117, %s2163
    %v2165 = vpop.permute.xlu0 %2164
    %s2167 = sor.u32 256, 18
    %2168 = vbcast.lane.b32.xlu0 %v2129, %s2167
    %v2169 = vpop.permute.xlu0 %2168
    %s2171 = sor.u32 256, 26
    %2172 = vbcast.lane.b32.xlu0 %v2129, %s2171
    %v2173 = vpop.permute.xlu0 %2172
    %v2174 = vmul.f32 %v2154, %v2161
    %v2175 = vmul.f32 %v2155, %v2165
    %v2176 = vmul.f32 %v2156, %v2169
    %v2177 = vmul.f32 %v2157, %v2173
    %v2178 = vsel %vm299, %v2174, 0.0
    %v2179 = vsel %vm299, %v2175, 0.0
    %v2180 = vadd.f32 %v2178, %v2179
    %v2181 = vrot.slane %v2180, 4
    %v2182 = vadd.f32 %v2180, %v2181
    %v2183 = vrot.slane %v2182, 2
    %v2184 = vadd.f32 %v2182, %v2183
    %v2185 = vrot.slane %v2184, 1
    %v2186 = vadd.f32 %v2184, %v2185
    %v2187 = vsel %vm299, %v2176, 0.0
    %v2188 = vsel %vm299, %v2177, 0.0
    %v2189 = vadd.f32 %v2187, %v2188
    %v2190 = vrot.slane %v2189, 4
    %v2191 = vadd.f32 %v2189, %v2190
    %v2192 = vrot.slane %v2191, 2
    %v2193 = vadd.f32 %v2191, %v2192
    %v2194 = vrot.slane %v2193, 1
    %v2195 = vadd.f32 %v2193, %v2194
    %v2196 = vlaneseq
    %v2197 = vshrl.u32 %v2196, 7
    %v2198 = vsub.s32 3, %v2197
    %v2199 = vrot.slane %v1883, %v2198
    %v2200 = vlaneseq
    %v2201 = vshrl.u32 %v2200, 7
    %v2202 = vsub.s32 3, %v2201
    %v2203 = vrot.slane %v1884, %v2202
    %v2204 = vmul.f32 %v2199, %v1886
    %v2205 = vmul.f32 %v2199, %v1887
    %v2206 = vmul.f32 %v2203, %v1886
    %v2207 = vmul.f32 %v2203, %v1887
    %v2208 = vmul.f32 %v2204, 1.442695
    %v2209 = vpow.pop %v2208
    %v2210 = vmul.f32 %v2205, 1.442695
    %v2211 = vpow.pop %v2210
    %v2212 = vmul.f32 %v2206, 1.442695
    %v2213 = vpow.pop %v2212
    %v2214 = vmul.f32 %v2207, 1.442695
    %v2215 = vpow.pop %v2214
    %v2216 = vlaneseq
    %v2217 = vshrl.u32 %v2216, 7
    %v2218 = vsub.s32 3, %v2217
    %v2219 = vrot.slane %v1769, %v2218
    %s2221 = sor.u32 256, 2
    %2222 = vbcast.lane.b32.xlu0 %v2219, %s2221
    %v2223 = vpop.permute.xlu0 %2222
    %s2225 = sor.u32 256, 10
    %2226 = vbcast.lane.b32.xlu0 %v2219, %s2225
    %v2227 = vpop.permute.xlu0 %2226
    %v2228 = vlaneseq
    %v2229 = vshrl.u32 %v2228, 7
    %v2230 = vsub.s32 3, %v2229
    %v2231 = vrot.slane %v1774, %v2230
    %s2233 = sor.u32 256, 2
    %2234 = vbcast.lane.b32.xlu0 %v2231, %s2233
    %v2235 = vpop.permute.xlu0 %2234
    %s2237 = sor.u32 256, 10
    %2238 = vbcast.lane.b32.xlu0 %v2231, %s2237
    %v2239 = vpop.permute.xlu0 %2238
    %v2240 = vlaneseq
    %v2241 = vshrl.u32 %v2240, 7
    %v2242 = vsub.s32 3, %v2241
    %v2243 = vrot.slane %v1908, %v2242
    %v2244 = vlaneseq
    %v2245 = vshrl.u32 %v2244, 7
    %v2246 = vsub.s32 3, %v2245
    %v2247 = vrot.slane %v1909, %v2246
    %v2248 = vmul.f32 %v2243, %v2223
    %v2249 = vmul.f32 %v2243, %v2227
    %v2250 = vmul.f32 %v2247, %v2235
    %v2251 = vmul.f32 %v2247, %v2239
    %v2252 = vmul.f32 %v2209, %v2154
    %v2253 = vmul.f32 %v2211, %v2155
    %v2254 = vmul.f32 %v2213, %v2156
    %v2255 = vmul.f32 %v2215, %v2157
    %v2256 = vadd.f32 %v2252, %v2248
    %v2257 = vadd.f32 %v2253, %v2249
    %v2258 = vadd.f32 %v2254, %v2250
    %v2259 = vadd.f32 %v2255, %v2251
    %s2261 = sor.u32 256, 18
    %2262 = vbcast.lane.b32.xlu0 %v2219, %s2261
    %v2263 = vpop.permute.xlu0 %2262
    %s2265 = sor.u32 256, 26
    %2266 = vbcast.lane.b32.xlu0 %v2219, %s2265
    %v2267 = vpop.permute.xlu0 %2266
    %s2269 = sor.u32 256, 18
    %2270 = vbcast.lane.b32.xlu0 %v2231, %s2269
    %v2271 = vpop.permute.xlu0 %2270
    %s2273 = sor.u32 256, 26
    %2274 = vbcast.lane.b32.xlu0 %v2231, %s2273
    %v2275 = vpop.permute.xlu0 %2274
    %v2276 = vmul.f32 %v2256, %v2263
    %v2277 = vmul.f32 %v2257, %v2267
    %v2278 = vmul.f32 %v2258, %v2271
    %v2279 = vmul.f32 %v2259, %v2275
    %v2280 = vsel %vm299, %v2276, 0.0
    %v2281 = vsel %vm299, %v2277, 0.0
    %v2282 = vadd.f32 %v2280, %v2281
    %v2283 = vrot.slane %v2282, 4
    %v2284 = vadd.f32 %v2282, %v2283
    %v2285 = vrot.slane %v2284, 2
    %v2286 = vadd.f32 %v2284, %v2285
    %v2287 = vrot.slane %v2286, 1
    %v2288 = vadd.f32 %v2286, %v2287
    %v2289 = vsel %vm299, %v2278, 0.0
    %v2290 = vsel %vm299, %v2279, 0.0
    %v2291 = vadd.f32 %v2289, %v2290
    %v2292 = vrot.slane %v2291, 4
    %v2293 = vadd.f32 %v2291, %v2292
    %v2294 = vrot.slane %v2293, 2
    %v2295 = vadd.f32 %v2293, %v2294
    %v2296 = vrot.slane %v2295, 1
    %v2297 = vadd.f32 %v2295, %v2296
    %v2298 = vlaneseq
    %v2299 = vshrl.u32 %v2298, 7
    %v2300 = vsub.s32 4, %v2299
    %v2301 = vrot.slane %v1883, %v2300
    %v2302 = vlaneseq
    %v2303 = vshrl.u32 %v2302, 7
    %v2304 = vsub.s32 4, %v2303
    %v2305 = vrot.slane %v1884, %v2304
    %v2306 = vmul.f32 %v2301, %v1886
    %v2307 = vmul.f32 %v2301, %v1887
    %v2308 = vmul.f32 %v2305, %v1886
    %v2309 = vmul.f32 %v2305, %v1887
    %v2310 = vmul.f32 %v2306, 1.442695
    %v2311 = vpow.pop %v2310
    %v2312 = vmul.f32 %v2307, 1.442695
    %v2313 = vpow.pop %v2312
    %v2314 = vmul.f32 %v2308, 1.442695
    %v2315 = vpow.pop %v2314
    %v2316 = vmul.f32 %v2309, 1.442695
    %v2317 = vpow.pop %v2316
    %v2318 = vlaneseq
    %v2319 = vshrl.u32 %v2318, 7
    %v2320 = vsub.s32 4, %v2319
    %v2321 = vrot.slane %v1769, %v2320
    %s2323 = sor.u32 256, 2
    %2324 = vbcast.lane.b32.xlu0 %v2321, %s2323
    %v2325 = vpop.permute.xlu0 %2324
    %s2327 = sor.u32 256, 10
    %2328 = vbcast.lane.b32.xlu0 %v2321, %s2327
    %v2329 = vpop.permute.xlu0 %2328
    %v2330 = vlaneseq
    %v2331 = vshrl.u32 %v2330, 7
    %v2332 = vsub.s32 4, %v2331
    %v2333 = vrot.slane %v1774, %v2332
    %s2335 = sor.u32 256, 2
    %2336 = vbcast.lane.b32.xlu0 %v2333, %s2335
    %v2337 = vpop.permute.xlu0 %2336
    %s2339 = sor.u32 256, 10
    %2340 = vbcast.lane.b32.xlu0 %v2333, %s2339
    %v2341 = vpop.permute.xlu0 %2340
    %v2342 = vlaneseq
    %v2343 = vshrl.u32 %v2342, 7
    %v2344 = vsub.s32 4, %v2343
    %v2345 = vrot.slane %v1908, %v2344
    %v2346 = vlaneseq
    %v2347 = vshrl.u32 %v2346, 7
    %v2348 = vsub.s32 4, %v2347
    %v2349 = vrot.slane %v1909, %v2348
    %v2350 = vmul.f32 %v2345, %v2325
    %v2351 = vmul.f32 %v2345, %v2329
    %v2352 = vmul.f32 %v2349, %v2337
    %v2353 = vmul.f32 %v2349, %v2341
    %v2354 = vmul.f32 %v2311, %v2256
    %v2355 = vmul.f32 %v2313, %v2257
    %v2356 = vmul.f32 %v2315, %v2258
    %v2357 = vmul.f32 %v2317, %v2259
    %v2358 = vadd.f32 %v2354, %v2350
    %v2359 = vadd.f32 %v2355, %v2351
    %v2360 = vadd.f32 %v2356, %v2352
    %v2361 = vadd.f32 %v2357, %v2353
    %s2363 = sor.u32 256, 18
    %2364 = vbcast.lane.b32.xlu0 %v2321, %s2363
    %v2365 = vpop.permute.xlu0 %2364
    %s2367 = sor.u32 256, 26
    %2368 = vbcast.lane.b32.xlu0 %v2321, %s2367
    %v2369 = vpop.permute.xlu0 %2368
    %s2371 = sor.u32 256, 18
    %2372 = vbcast.lane.b32.xlu0 %v2333, %s2371
    %v2373 = vpop.permute.xlu0 %2372
    %s2375 = sor.u32 256, 26
    %2376 = vbcast.lane.b32.xlu0 %v2333, %s2375
    %v2377 = vpop.permute.xlu0 %2376
    %v2378 = vmul.f32 %v2358, %v2365
    %v2379 = vmul.f32 %v2359, %v2369
    %v2380 = vmul.f32 %v2360, %v2373
    %v2381 = vmul.f32 %v2361, %v2377
    %v2382 = vsel %vm299, %v2378, 0.0
    %v2383 = vsel %vm299, %v2379, 0.0
    %v2384 = vadd.f32 %v2382, %v2383
    %v2385 = vrot.slane %v2384, 4
    %v2386 = vadd.f32 %v2384, %v2385
    %v2387 = vrot.slane %v2386, 2
    %v2388 = vadd.f32 %v2386, %v2387
    %v2389 = vrot.slane %v2388, 1
    %v2390 = vadd.f32 %v2388, %v2389
    %v2391 = vsel %vm299, %v2380, 0.0
    %v2392 = vsel %vm299, %v2381, 0.0
    %v2393 = vadd.f32 %v2391, %v2392
    %v2394 = vrot.slane %v2393, 4
    %v2395 = vadd.f32 %v2393, %v2394
    %v2396 = vrot.slane %v2395, 2
    %v2397 = vadd.f32 %v2395, %v2396
    %v2398 = vrot.slane %v2397, 1
    %v2399 = vadd.f32 %v2397, %v2398
    %v2400 = vlaneseq
    %v2401 = vshrl.u32 %v2400, 7
    %v2402 = vsub.s32 5, %v2401
    %v2403 = vrot.slane %v1883, %v2402
    %v2404 = vlaneseq
    %v2405 = vshrl.u32 %v2404, 7
    %v2406 = vsub.s32 5, %v2405
    %v2407 = vrot.slane %v1884, %v2406
    %v2408 = vmul.f32 %v2403, %v1886
    %v2409 = vmul.f32 %v2403, %v1887
    %v2410 = vmul.f32 %v2407, %v1886
    %v2411 = vmul.f32 %v2407, %v1887
    %v2412 = vmul.f32 %v2408, 1.442695
    %v2413 = vpow.pop %v2412
    %v2414 = vmul.f32 %v2409, 1.442695
    %v2415 = vpow.pop %v2414
    %v2416 = vmul.f32 %v2410, 1.442695
    %v2417 = vpow.pop %v2416
    %v2418 = vmul.f32 %v2411, 1.442695
    %v2419 = vpow.pop %v2418
    %v2420 = vlaneseq
    %v2421 = vshrl.u32 %v2420, 7
    %v2422 = vsub.s32 5, %v2421
    %v2423 = vrot.slane %v1769, %v2422
    %s2425 = sor.u32 256, 2
    %2426 = vbcast.lane.b32.xlu0 %v2423, %s2425
    %v2427 = vpop.permute.xlu0 %2426
    %s2429 = sor.u32 256, 10
    %2430 = vbcast.lane.b32.xlu0 %v2423, %s2429
    %v2431 = vpop.permute.xlu0 %2430
    %v2432 = vlaneseq
    %v2433 = vshrl.u32 %v2432, 7
    %v2434 = vsub.s32 5, %v2433
    %v2435 = vrot.slane %v1774, %v2434
    %s2437 = sor.u32 256, 2
    %2438 = vbcast.lane.b32.xlu0 %v2435, %s2437
    %v2439 = vpop.permute.xlu0 %2438
    %s2441 = sor.u32 256, 10
    %2442 = vbcast.lane.b32.xlu0 %v2435, %s2441
    %v2443 = vpop.permute.xlu0 %2442
    %v2444 = vlaneseq
    %v2445 = vshrl.u32 %v2444, 7
    %v2446 = vsub.s32 5, %v2445
    %v2447 = vrot.slane %v1908, %v2446
    %v2448 = vlaneseq
    %v2449 = vshrl.u32 %v2448, 7
    %v2450 = vsub.s32 5, %v2449
    %v2451 = vrot.slane %v1909, %v2450
    %v2452 = vmul.f32 %v2447, %v2427
    %v2453 = vmul.f32 %v2447, %v2431
    %v2454 = vmul.f32 %v2451, %v2439
    %v2455 = vmul.f32 %v2451, %v2443
    %v2456 = vmul.f32 %v2413, %v2358
    %v2457 = vmul.f32 %v2415, %v2359
    %v2458 = vmul.f32 %v2417, %v2360
    %v2459 = vmul.f32 %v2419, %v2361
    %v2460 = vadd.f32 %v2456, %v2452
    %v2461 = vadd.f32 %v2457, %v2453
    %v2462 = vadd.f32 %v2458, %v2454
    %v2463 = vadd.f32 %v2459, %v2455
    %s2465 = sor.u32 256, 18
    %2466 = vbcast.lane.b32.xlu0 %v2423, %s2465
    %v2467 = vpop.permute.xlu0 %2466
    %s2469 = sor.u32 256, 26
    %2470 = vbcast.lane.b32.xlu0 %v2423, %s2469
    %v2471 = vpop.permute.xlu0 %2470
    %s2473 = sor.u32 256, 18
    %2474 = vbcast.lane.b32.xlu0 %v2435, %s2473
    %v2475 = vpop.permute.xlu0 %2474
    %s2477 = sor.u32 256, 26
    %2478 = vbcast.lane.b32.xlu0 %v2435, %s2477
    %v2479 = vpop.permute.xlu0 %2478
    %v2480 = vmul.f32 %v2460, %v2467
    %v2481 = vmul.f32 %v2461, %v2471
    %v2482 = vmul.f32 %v2462, %v2475
    %v2483 = vmul.f32 %v2463, %v2479
    %v2484 = vsel %vm299, %v2480, 0.0
    %v2485 = vsel %vm299, %v2481, 0.0
    %v2486 = vadd.f32 %v2484, %v2485
    %v2487 = vrot.slane %v2486, 4
    %v2488 = vadd.f32 %v2486, %v2487
    %v2489 = vrot.slane %v2488, 2
    %v2490 = vadd.f32 %v2488, %v2489
    %v2491 = vrot.slane %v2490, 1
    %v2492 = vadd.f32 %v2490, %v2491
    %v2493 = vsel %vm299, %v2482, 0.0
    %v2494 = vsel %vm299, %v2483, 0.0
    %v2495 = vadd.f32 %v2493, %v2494
    %v2496 = vrot.slane %v2495, 4
    %v2497 = vadd.f32 %v2495, %v2496
    %v2498 = vrot.slane %v2497, 2
    %v2499 = vadd.f32 %v2497, %v2498
    %v2500 = vrot.slane %v2499, 1
    %v2501 = vadd.f32 %v2499, %v2500
    %v2502 = vlaneseq
    %v2503 = vshrl.u32 %v2502, 7
    %v2504 = vsub.s32 6, %v2503
    %v2505 = vrot.slane %v1883, %v2504
    %v2506 = vlaneseq
    %v2507 = vshrl.u32 %v2506, 7
    %v2508 = vsub.s32 6, %v2507
    %v2509 = vrot.slane %v1884, %v2508
    %v2510 = vmul.f32 %v2505, %v1886
    %v2511 = vmul.f32 %v2505, %v1887
    %v2512 = vmul.f32 %v2509, %v1886
    %v2513 = vmul.f32 %v2509, %v1887
    %v2514 = vmul.f32 %v2510, 1.442695
    %v2515 = vpow.pop %v2514
    %v2516 = vmul.f32 %v2511, 1.442695
    %v2517 = vpow.pop %v2516
    %v2518 = vmul.f32 %v2512, 1.442695
    %v2519 = vpow.pop %v2518
    %v2520 = vmul.f32 %v2513, 1.442695
    %v2521 = vpow.pop %v2520
    %v2522 = vlaneseq
    %v2523 = vshrl.u32 %v2522, 7
    %v2524 = vsub.s32 6, %v2523
    %v2525 = vrot.slane %v1769, %v2524
    %s2527 = sor.u32 256, 2
    %2528 = vbcast.lane.b32.xlu0 %v2525, %s2527
    %v2529 = vpop.permute.xlu0 %2528
    %s2531 = sor.u32 256, 10
    %2532 = vbcast.lane.b32.xlu0 %v2525, %s2531
    %v2533 = vpop.permute.xlu0 %2532
    %v2534 = vlaneseq
    %v2535 = vshrl.u32 %v2534, 7
    %v2536 = vsub.s32 6, %v2535
    %v2537 = vrot.slane %v1774, %v2536
    %s2539 = sor.u32 256, 2
    %2540 = vbcast.lane.b32.xlu0 %v2537, %s2539
    %v2541 = vpop.permute.xlu0 %2540
    %s2543 = sor.u32 256, 10
    %2544 = vbcast.lane.b32.xlu0 %v2537, %s2543
    %v2545 = vpop.permute.xlu0 %2544
    %v2546 = vlaneseq
    %v2547 = vshrl.u32 %v2546, 7
    %v2548 = vsub.s32 6, %v2547
    %v2549 = vrot.slane %v1908, %v2548
    %v2550 = vlaneseq
    %v2551 = vshrl.u32 %v2550, 7
    %v2552 = vsub.s32 6, %v2551
    %v2553 = vrot.slane %v1909, %v2552
    %v2554 = vmul.f32 %v2549, %v2529
    %v2555 = vmul.f32 %v2549, %v2533
    %v2556 = vmul.f32 %v2553, %v2541
    %v2557 = vmul.f32 %v2553, %v2545
    %v2558 = vmul.f32 %v2515, %v2460
    %v2559 = vmul.f32 %v2517, %v2461
    %v2560 = vmul.f32 %v2519, %v2462
    %v2561 = vmul.f32 %v2521, %v2463
    %v2562 = vadd.f32 %v2558, %v2554
    %v2563 = vadd.f32 %v2559, %v2555
    %v2564 = vadd.f32 %v2560, %v2556
    %v2565 = vadd.f32 %v2561, %v2557
    %s2567 = sor.u32 256, 18
    %2568 = vbcast.lane.b32.xlu0 %v2525, %s2567
    %v2569 = vpop.permute.xlu0 %2568
    %s2571 = sor.u32 256, 26
    %2572 = vbcast.lane.b32.xlu0 %v2525, %s2571
    %v2573 = vpop.permute.xlu0 %2572
    %s2575 = sor.u32 256, 18
    %2576 = vbcast.lane.b32.xlu0 %v2537, %s2575
    %v2577 = vpop.permute.xlu0 %2576
    %s2579 = sor.u32 256, 26
    %2580 = vbcast.lane.b32.xlu0 %v2537, %s2579
    %v2581 = vpop.permute.xlu0 %2580
    %v2582 = vmul.f32 %v2562, %v2569
    %v2583 = vmul.f32 %v2563, %v2573
    %v2584 = vmul.f32 %v2564, %v2577
    %v2585 = vmul.f32 %v2565, %v2581
    %v2586 = vsel %vm299, %v2582, 0.0
    %v2587 = vsel %vm299, %v2583, 0.0
    %v2588 = vadd.f32 %v2586, %v2587
    %v2589 = vrot.slane %v2588, 4
    %v2590 = vadd.f32 %v2588, %v2589
    %v2591 = vrot.slane %v2590, 2
    %v2592 = vadd.f32 %v2590, %v2591
    %v2593 = vrot.slane %v2592, 1
    %v2594 = vadd.f32 %v2592, %v2593
    %v2595 = vsel %vm299, %v2584, 0.0
    %v2596 = vsel %vm299, %v2585, 0.0
    %v2597 = vadd.f32 %v2595, %v2596
    %v2598 = vrot.slane %v2597, 4
    %v2599 = vadd.f32 %v2597, %v2598
    %v2600 = vrot.slane %v2599, 2
    %v2601 = vadd.f32 %v2599, %v2600
    %v2602 = vrot.slane %v2601, 1
    %v2603 = vadd.f32 %v2601, %v2602
    %v2604 = vlaneseq
    %v2605 = vshrl.u32 %v2604, 7
    %v2606 = vsub.s32 7, %v2605
    %v2607 = vrot.slane %v1883, %v2606
    %v2608 = vlaneseq
    %v2609 = vshrl.u32 %v2608, 7
    %v2610 = vsub.s32 7, %v2609
    %v2611 = vrot.slane %v1884, %v2610
    %v2612 = vmul.f32 %v2607, %v1886
    %v2613 = vmul.f32 %v2607, %v1887
    %v2614 = vmul.f32 %v2611, %v1886
    %v2615 = vmul.f32 %v2611, %v1887
    %v2616 = vmul.f32 %v2612, 1.442695
    %v2617 = vpow.pop %v2616
    %v2618 = vmul.f32 %v2613, 1.442695
    %v2619 = vpow.pop %v2618
    %v2620 = vmul.f32 %v2614, 1.442695
    %v2621 = vpow.pop %v2620
    %v2622 = vmul.f32 %v2615, 1.442695
    %v2623 = vpow.pop %v2622
    %v2624 = vlaneseq
    %v2625 = vshrl.u32 %v2624, 7
    %v2626 = vsub.s32 7, %v2625
    %v2627 = vrot.slane %v1769, %v2626
    %s2629 = sor.u32 256, 2
    %2630 = vbcast.lane.b32.xlu0 %v2627, %s2629
    %v2631 = vpop.permute.xlu0 %2630
    %s2633 = sor.u32 256, 10
    %2634 = vbcast.lane.b32.xlu0 %v2627, %s2633
    %v2635 = vpop.permute.xlu0 %2634
    %v2636 = vlaneseq
    %v2637 = vshrl.u32 %v2636, 7
    %v2638 = vsub.s32 7, %v2637
    %v2639 = vrot.slane %v1774, %v2638
    %s2641 = sor.u32 256, 2
    %2642 = vbcast.lane.b32.xlu0 %v2639, %s2641
    %v2643 = vpop.permute.xlu0 %2642
    %s2645 = sor.u32 256, 10
    %2646 = vbcast.lane.b32.xlu0 %v2639, %s2645
    %v2647 = vpop.permute.xlu0 %2646
    %v2648 = vlaneseq
    %v2649 = vshrl.u32 %v2648, 7
    %v2650 = vsub.s32 7, %v2649
    %v2651 = vrot.slane %v1908, %v2650
    %v2652 = vlaneseq
    %v2653 = vshrl.u32 %v2652, 7
    %v2654 = vsub.s32 7, %v2653
    %v2655 = vrot.slane %v1909, %v2654
    %v2656 = vmul.f32 %v2651, %v2631
    %v2657 = vmul.f32 %v2651, %v2635
    %v2658 = vmul.f32 %v2655, %v2643
    %v2659 = vmul.f32 %v2655, %v2647
    %v2660 = vmul.f32 %v2617, %v2562
    %v2661 = vmul.f32 %v2619, %v2563
    %v2662 = vmul.f32 %v2621, %v2564
    %v2663 = vmul.f32 %v2623, %v2565
    %v2664 = vadd.f32 %v2660, %v2656
    %v2665 = vadd.f32 %v2661, %v2657
    %v2666 = vadd.f32 %v2662, %v2658
    %v2667 = vadd.f32 %v2663, %v2659
    %s2669 = sor.u32 256, 18
    %2670 = vbcast.lane.b32.xlu0 %v2627, %s2669
    %v2671 = vpop.permute.xlu0 %2670
    %s2673 = sor.u32 256, 26
    %2674 = vbcast.lane.b32.xlu0 %v2627, %s2673
    %v2675 = vpop.permute.xlu0 %2674
    %s2677 = sor.u32 256, 18
    %2678 = vbcast.lane.b32.xlu0 %v2639, %s2677
    %v2679 = vpop.permute.xlu0 %2678
    %s2681 = sor.u32 256, 26
    %2682 = vbcast.lane.b32.xlu0 %v2639, %s2681
    %v2683 = vpop.permute.xlu0 %2682
    %v2684 = vmul.f32 %v2664, %v2671
    %v2685 = vmul.f32 %v2665, %v2675
    %v2686 = vmul.f32 %v2666, %v2679
    %v2687 = vmul.f32 %v2667, %v2683
    %v2688 = vsel %vm299, %v2684, 0.0
    %v2689 = vsel %vm299, %v2685, 0.0
    %v2690 = vadd.f32 %v2688, %v2689
    %v2691 = vrot.slane %v2690, 4
    %v2692 = vadd.f32 %v2690, %v2691
    %v2693 = vrot.slane %v2692, 2
    %v2694 = vadd.f32 %v2692, %v2693
    %v2695 = vrot.slane %v2694, 1
    %v2696 = vadd.f32 %v2694, %v2695
    %v2697 = vsel %vm299, %v2686, 0.0
    %v2698 = vsel %vm299, %v2687, 0.0
    %v2699 = vadd.f32 %v2697, %v2698
    %v2700 = vrot.slane %v2699, 4
    %v2701 = vadd.f32 %v2699, %v2700
    %v2702 = vrot.slane %v2701, 2
    %v2703 = vadd.f32 %v2701, %v2702
    %v2704 = vrot.slane %v2703, 1
    %v2705 = vadd.f32 %v2703, %v2704
    %v2706 = vsel %vm1309, %v1982, %v2084
    %v2707 = vsel %vm1309, %v1991, %v2093
    %v2708 = vsel %vm396, %v2706, %v2186
    %v2709 = vsel %vm396, %v2707, %v2195
    %v2710 = vsel %vm191, %v2708, %v2288
    %v2711 = vsel %vm191, %v2709, %v2297
    %v2712 = vsel %vm1316, %v2710, %v2390
    %v2713 = vsel %vm1316, %v2711, %v2399
    %v2714 = vsel %vm260, %v2712, %v2492
    %v2715 = vsel %vm260, %v2713, %v2501
    %v2716 = vsel %vm237, %v2714, %v2594
    %v2717 = vsel %vm237, %v2715, %v2603
    %v2718 = vsel %vm214, %v2716, %v2696
    %v2719 = vsel %vm214, %v2717, %v2705
    %s2720 = scalar_lea.vmem %s10, 1
    %v2721 = vld [vmem:[%s2720] sm:$0x1]
    %v2723 = vlaneseq
    %v2724 = vshrl.u32 %v2723, 7
    %v2725 = vsub.s32 0, %v2724
    %v2726 = vrot.slane %v2721, %v2725
    %v2728 = vmul.f32 %v1685, %v2726
    %v2729 = vmul.f32 %v1686, %v2726
    %v2730 = vadd.f32 %v2718, %v2728
    %v2731 = vadd.f32 %v2719, %v2729
    %v2732 = vsub.f32 0.0, %v1573
    %v2733 = vsub.f32 0.0, %v1578
    %v2734 = vmul.f32 %v2732, 1.442695
    %v2735 = vpow.pop %v2734
    %v2736 = vmul.f32 %v2733, 1.442695
    %v2737 = vpow.pop %v2736
    %v2738 = vadd.f32 %v2735, 1.0
    %v2739 = vadd.f32 %v2737, 1.0
    %v2740 = vrcp.pop %v2738
    %v2741 = vrcp.pop %v2739
    %v2742 = vmul.f32 %v1573, %v2740
    %v2743 = vmul.f32 %v1578, %v2741
    %2746 = vrot.lane.b32.xlu0 %v2742, 64
    %v2747 = vpop.permute.xlu0 %2746
    %2748 = vrot.lane.b32.xlu0 %v2743, 64
    %v2749 = vpop.permute.xlu0 %2748
    %v2752 = vmul.f32 %v2730, %v2747
    %v2753 = vmul.f32 %v2731, %v2749
    %s2754 = scalar_lea.vmem %s11, 64
    %v2755 = vld [vmem:[%s2754] sm:$0xff]
    %v2756 = vld [vmem:[%s2754 + $0x8] sm:$0xff]
    %v2757 = vld [vmem:[%s2754 + $0x10] sm:$0xff]
    %v2758 = vld [vmem:[%s2754 + $0x18] sm:$0xff]
    %v2759 = vld [vmem:[%s2754 + $0x20] sm:$0xff]
    %v2760 = vld [vmem:[%s2754 + $0x28] sm:$0xff]
    %v2761 = vld [vmem:[%s2754 + $0x30] sm:$0xff]
    %v2762 = vld [vmem:[%s2754 + $0x38] sm:$0xff]
    %v2764 = vsel %vm299, %v2752, 0
    %v2767 = vsel %vm299, %v2753, 0
    %2769 = vmatprep.subr.mxu0 0.0
    %2770 = vmatpush1.msra.mxu0 %v2755
    %2771 = vmatprep.subr.mxu0 0.0
    %2772 = vmatpush1.msra.mxu0 %v2756
    %2773 = vmatprep.subr.mxu0 0.0
    %2774 = vmatpush1.msra.mxu0 %v2757
    %2775 = vmatprep.subr.mxu0 0.0
    %2776 = vmatpush1.msra.mxu0 %v2758
    %2777 = vmatprep.subr.mxu0 0.0
    %2778 = vmatpush1.msra.mxu0 %v2759
    %2779 = vmatprep.subr.mxu0 0.0
    %2780 = vmatpush1.msra.mxu0 %v2760
    %2781 = vmatprep.subr.mxu0 0.0
    %2782 = vmatpush1.msra.mxu0 %v2761
    %2783 = vmatprep.subr.mxu0 0.0
    %2784 = vmatpush1.msra.mxu0 %v2762
    %2785 = vmatprep.subr.mxu0 0.0
    %2786 = vmatpush1.msra.mxu0 0.0
    %2787 = vmatprep.subr.mxu0 0.0
    %2788 = vmatpush1.msra.mxu0 0.0
    %2789 = vmatprep.subr.mxu0 0.0
    %2790 = vmatpush1.msra.mxu0 0.0
    %2791 = vmatprep.subr.mxu0 0.0
    %2792 = vmatpush1.msra.mxu0 0.0
    %2793 = vmatprep.subr.mxu0 0.0
    %2794 = vmatpush1.msra.mxu0 0.0
    %2795 = vmatprep.subr.mxu0 0.0
    %2796 = vmatpush1.msra.mxu0 0.0
    %2797 = vmatprep.subr.mxu0 0.0
    %2798 = vmatpush1.msra.mxu0 0.0
    %2799 = vmatprep.subr.mxu0 0.0
    %2800 = vmatpush1.msra.mxu0 0.0
    %2801 = vmatprep.subr.mxu0 0.0
    %2802 = vmatpush1.msra.mxu0 0.0
    %2803 = vmatprep.subr.mxu0 0.0
    %2804 = vmatpush1.msra.mxu0 0.0
    %2805 = vmatprep.subr.mxu0 0.0
    %2806 = vmatpush1.msra.mxu0 0.0
    %2807 = vmatprep.subr.mxu0 0.0
    %2808 = vmatpush1.msra.mxu0 0.0
    %2809 = vmatprep.subr.mxu0 0.0
    %2810 = vmatpush1.msra.mxu0 0.0
    %2811 = vmatprep.subr.mxu0 0.0
    %2812 = vmatpush1.msra.mxu0 0.0
    %2813 = vmatprep.subr.mxu0 0.0
    %2814 = vmatpush1.msra.mxu0 0.0
    %2815 = vmatprep.subr.mxu0 0.0
    %2816 = vmatpush1.msra.mxu0 0.0
    %2817 = vmatprep.subr.mxu0 0.0
    %2818 = vmatpush1.msra.mxu0 0.0
    %2819 = vmatprep.subr.mxu0 0.0
    %2820 = vmatpush1.msra.mxu0 0.0
    %2821 = vmatprep.subr.mxu0 0.0
    %2822 = vmatpush1.msra.mxu0 0.0
    %2823 = vmatprep.subr.mxu0 0.0
    %2824 = vmatpush1.msra.mxu0 0.0
    %2825 = vmatprep.subr.mxu0 0.0
    %2826 = vmatpush1.msra.mxu0 0.0
    %2827 = vmatprep.subr.mxu0 0.0
    %2828 = vmatpush1.msra.mxu0 0.0
    %2829 = vmatprep.subr.mxu0 0.0
    %2830 = vmatpush1.msra.mxu0 0.0
    %2831 = vmatprep.subr.mxu0 0.0
    %2832 = vmatpush1.msra.mxu0 0.0
    %2833 = vmatprep.mubr.f32.mxu0 0.0
    %2834 = vmatmul.mubr.f32.gmra.mrb[0].mxu0 %v2764
    %v2835 = vpop.f32.mrb[0].mxu0
    %v2836 = vadd.f32 0.0, %v2835
    %v2837 = vpop.f32.mrb[0].mxu0
    %2838 = vmatprep.mubr.f32.mxu0 0.0
    %2839 = vmatmul.mubr.f32.gmra.mrb[0].mxu0 %v2767
    %v2840 = vpop.f32.mrb[0].mxu0
    %v2841 = vadd.f32 0.0, %v2840
    %v2842 = vpop.f32.mrb[0].mxu0
    %2843 = vdwg.mxu0
    %v2844 = vadd.f32 %v2836, %v1447
    %v2845 = vadd.f32 %v2841, %v1448
    %v2846 = vld [vmem:[%s12] sm:$0x1]
    %v2847 = vld [vmem:[%s13] sm:$0x1]
    %v2848 = vsel %vm54, %v2844, 0.0
    %2849 = vadd.xlane.f32.xlu0 %v2848
    %v2850 = vpop.xlane.xlu0 %2849
    %v2851 = vsel %vm54, %v2845, 0.0
    %2852 = vadd.xlane.f32.xlu0 %v2851
    %v2853 = vpop.xlane.xlu0 %2852
    %v2854 = vmul.f32 %v2850, %v61
    %v2855 = vmul.f32 %v2853, %v61
    %v2856 = vsub.f32 %v2844, %v2854
    %v2857 = vsub.f32 %v2845, %v2855
    %v2858 = vmul.f32 %v2856, %v2856
    %v2859 = vmul.f32 %v2857, %v2857
    %v2860 = vsel %vm54, %v2858, 0.0
    %2861 = vadd.xlane.f32.xlu0 %v2860
    %v2862 = vpop.xlane.xlu0 %2861
    %v2863 = vsel %vm54, %v2859, 0.0
    %2864 = vadd.xlane.f32.xlu0 %v2863
    %v2865 = vpop.xlane.xlu0 %2864
    %v2866 = vmul.f32 %v2862, %v61
    %v2867 = vmul.f32 %v2865, %v61
    %v2868 = vadd.f32 %v2866, 1e-05
    %v2869 = vadd.f32 %v2867, 1e-05
    %v2870 = vrsqrt.pop %v2868
    %v2871 = vrsqrt.pop %v2869
    %v2872 = vmul.f32 %v2856, %v2870
    %v2873 = vmul.f32 %v2857, %v2871
    %v2875 = vlaneseq
    %v2876 = vshrl.u32 %v2875, 7
    %v2877 = vsub.s32 0, %v2876
    %v2878 = vrot.slane %v2846, %v2877
    %v2880 = vmul.f32 %v2872, %v2878
    %v2881 = vmul.f32 %v2873, %v2878
    %v2883 = vlaneseq
    %v2884 = vshrl.u32 %v2883, 7
    %v2885 = vsub.s32 0, %v2884
    %v2886 = vrot.slane %v2847, %v2885
    %v2888 = vadd.f32 %v2880, %v2886
    %v2889 = vadd.f32 %v2881, %v2886
    %2890 = vst.msk [vmem:[#allocation2] sm:$0xff] %vm54, %v2888
    %2891 = vst.msk [vmem:[#allocation2 + $0x8] sm:$0xff] %vm54, %v2889
    // Predicated region
    $region58: #{tpu_custom_call.1} parent=1 // pred_check
      _
    $region59: #{tpu_custom_call.1} parent=1 // pred_check_branch
      %2893 = sbr.rel (0) target = $region61
    $region60: #{tpu_custom_call.1} parent=1 // pred_region
      %s2895 = ssub.s32 256, 256
      %2896 = vsyncadd [#allocation3], %s2895
      %s2897 = sshll.u32 [#allocation2], 4
      %s2898 = int_to_ptr.vmem [resolvable:$true] %s2897
      %2903 = dma.vmem_to_hbm [thread:$0]  %s2898, 256, %s14, [#allocation3], 128, 128, 8
    $region61: #{tpu_custom_call.1} parent=1 // pred_fallthru
      _
    // Predicated region
    $region62: #{tpu_custom_call.1} parent=1 // pred_check
      _
    $region63: #{tpu_custom_call.1} parent=1 // pred_check_branch
      %2905 = sbr.rel (0) target = $region65
    $region64: #{tpu_custom_call.1} parent=1 // pred_region
      %2906 = dma.done [#allocation3], 256
    $region65: #{tpu_custom_call.1} parent=1 // pred_fallthru
      _
    %2907 = vsyncpa [#allocation3], 1

</llo_original>
